<compile_context>
chip_gen: v6e
topology: v6e:2x2x1
jax: 0.10.0
libtpu: 0.0.40
codegen_flags: <defaults>
</compile_context>

<pallas_src>
import jax
import jax.numpy as jnp
from jax import lax
from jax.experimental import pallas as pl
from jax.experimental.pallas import tpu as pltpu


# ----------------------------- model config ---------------------------------
class ModelConfig:
    leaky_relu_slope = 0.1
    upsample_initial_channel = 32
    upsample_rates = (2, 2)
    upsample_kernel_sizes = (4, 4)
    resblock_kernel_sizes = (3, 5)
    resblock_dilation_sizes = ((1, 3), (1, 3))


model_config = ModelConfig()


# ----------------------------- parameters ------------------------------------
def init_conv(key, c_out, c_in, k):
    kw, kb = jax.random.split(key)
    w = jax.random.normal(kw, (c_out, c_in, k), jnp.float32) * 0.01  # init_weights: N(0, 0.01)
    b = jax.random.normal(kb, (c_out,), jnp.float32) * 0.01
    return w, b


def conv_w_flat(w):
    # PyTorch Conv1d weight (C_out, C_in, K) -> (C_out, K*C_in), columns ordered
    # (k major, ci minor) to match the in-kernel tap-major im2col stack.
    c_out, c_in, k = w.shape
    return jnp.transpose(w, (0, 2, 1)).reshape(c_out, k * c_in)


def convT_w_taps(w):
    # PyTorch ConvTranspose1d weight (C_in, C_out, K) -> (K, C_out, C_in)
    return jnp.transpose(w, (2, 1, 0))


def build_params(key):
    cfg = model_config
    params = {}

    key, k = jax.random.split(key)
    w, b = init_conv(k, cfg.upsample_initial_channel, 80, 7)
    params["pre"] = dict(w=conv_w_flat(w), b=b.reshape(-1, 1), K=7, d=1)

    params["up"] = []
    params["res"] = []
    c_out = cfg.upsample_initial_channel
    for i, (u, ks) in enumerate(zip(cfg.upsample_rates, cfg.upsample_kernel_sizes)):
        c_in = cfg.upsample_initial_channel // 2 ** i
        c_out = cfg.upsample_initial_channel // 2 ** (i + 1)
        key, k1, k2 = jax.random.split(key, 3)
        wt = jax.random.normal(k1, (c_in, c_out, ks), jnp.float32) * 0.01  # ConvT (C_in,C_out,K)
        bt = jax.random.normal(k2, (c_out,), jnp.float32) * 0.01
        params["up"].append(dict(w=convT_w_taps(wt), b=bt.reshape(-1, 1),
                                 u=u, ks=ks, p=(ks - u) // 2))

        stage = []
        for rk, dils in zip(cfg.resblock_kernel_sizes, cfg.resblock_dilation_sizes):
            block = []
            for d in dils:
                key, k3 = jax.random.split(key)
                wr, br = init_conv(k3, c_out, c_out, rk)
                block.append(dict(w=conv_w_flat(wr), b=br.reshape(-1, 1), K=rk, d=d))
            stage.append(block)
        params["res"].append(stage)

    key, k = jax.random.split(key)
    w, b = init_conv(k, 1, c_out, 7)
    # post conv (C_out=1): stored as a (K*C_in, 1) column -> in-kernel VPU/XLU
    # reduction instead of a 1-row MXU matmul / maximally-masked store.
    params["post"] = dict(w=conv_w_flat(w).T, b=b.reshape(1, 1), K=7, d=1)
    return params


# ----------------------------- fused forward ---------------------------------
def generator_forward(x, params):
    cfg = model_config
    slope = cfg.leaky_relu_slope
    B, n_mels, T = x.shape
    n_stages = len(cfg.upsample_rates)
    T_final = T
    for u in cfg.upsample_rates:
        T_final *= u

    # Flatten arrays in a fixed order; the kernel consumes refs in the same
    # order and closes over the static layer metadata.
    flat = [params["pre"]["w"], params["pre"]["b"]]
    for i in range(n_stages):
        flat += [params["up"][i]["w"], params["up"][i]["b"]]
        for block in params["res"][i]:
            for conv in block:
                flat += [conv["w"], conv["b"]]
    flat += [params["post"]["w"], params["post"]["b"]]

    # ---------------- in-kernel helpers (traced jnp on VMEM-resident values) --
    def leaky(v, s):
        return jnp.where(v >= 0, v, s * v)

    def pad_lanes(h, pad_l, pad_r):
        c = h.shape[0]
        pieces = []
        if pad_l:
            pieces.append(jnp.zeros((c, pad_l), jnp.float32))
        pieces.append(h)
        if pad_r:
            pieces.append(jnp.zeros((c, pad_r), jnp.float32))
        return pieces[0] if len(pieces) == 1 else jnp.concatenate(pieces, axis=1)

    def conv_same(h, w_flat, b, K, d, pre_slope=None):
        # "same"-padded dilated Conv1d as ONE tap-stacked (im2col) MXU matmul.
        c_in, t = h.shape
        if pre_slope is not None:
            h = leaky(h, pre_slope)
        pad = (K - 1) * d // 2
        hp = pad_lanes(h, pad, pad)
        stacked = jnp.concatenate([hp[:, k * d:k * d + t] for k in range(K)], axis=0)
        return jnp.dot(w_flat, stacked, preferred_element_type=jnp.float32) + b

    def upsample_convT(h, w_taps, b, u, ks, p, pre_slope):
        # Polyphase ConvTranspose1d (stride u, padding p, output_padding 0):
        # out[u*q + r] = sum_{k: k = u*j + r + p} W_k @ x[q - j]; phases are
        # interleaved with a constant 0/1 scatter matmul.  leaky(0)=0 makes the
        # zero boundary padding exact.
        c_in, t = h.shape
        c_out = w_taps.shape[1]
        h = leaky(h, pre_slope)

        phase_taps, all_j = [], [0]
        for r in range(u):
            taps = []
            for k in range(ks):
                if (k - r - p) % u == 0:
                    j = (k - r - p) // u
                    taps.append((k, j))
                    all_j.append(j)
            phase_taps.append(taps)
        pad_l = max(0, max(all_j))
        pad_r = max(0, -min(all_j))
        hp = pad_lanes(h, pad_l, pad_r)

        t_out = u * t
        row_i = lax.broadcasted_iota(jnp.int32, (t, t_out), 0)
        col_i = lax.broadcasted_iota(jnp.int32, (t, t_out), 1)
        acc = jnp.zeros((c_out, t_out), jnp.float32)
        for r in range(u):
            taps = phase_taps[r]
            stacked = jnp.concatenate(
                [hp[:, pad_l - j:pad_l - j + t] for (_, j) in taps], axis=0)
            w_phase = jnp.concatenate([w_taps[k] for (k, _) in taps], axis=1)
            phase = jnp.dot(w_phase, stacked, preferred_element_type=jnp.float32)
            scatter = (col_i == u * row_i + r).astype(jnp.float32)  # (q, u*q+r) = 1
            acc = acc + jnp.dot(phase, scatter, preferred_element_type=jnp.float32)
        return acc + b

    # ---------------- the single fused kernel --------------------------------
    def kernel(*refs):
        x_ref = refs[0]
        o_ref = refs[-1]
        w_refs = iter(refs[1:-1])

        h = x_ref[0]                                            # (80, T)

        # pre_conv: Conv1d(80 -> C0, k=7, pad=3), no pre-activation
        w = next(w_refs)[...]; b = next(w_refs)[...]
        h = conv_same(h, w, b, K=params["pre"]["K"], d=1)

        for i in range(n_stages):
            up = params["up"][i]
            w = next(w_refs)[...]; b = next(w_refs)[...]
            h = upsample_convT(h, w, b, up["u"], up["ks"], up["p"], slope)

            xs = None
            for block in params["res"][i]:
                y = h
                for conv in block:                              # y = y + conv(leaky(y))
                    w = next(w_refs)[...]; b = next(w_refs)[...]
                    y = y + conv_same(y, w, b, conv["K"], conv["d"], pre_slope=slope)
                xs = y if xs is None else xs + y                # fused branch add
            h = xs * (1.0 / len(cfg.resblock_kernel_sizes))     # fused /2

        # post: F.leaky_relu (default slope 0.01) + Conv1d(C -> 1, k=7) + tanh,
        # done as a VPU/XLU weighted-sum reduction (C_out = 1).
        wp = next(w_refs)[...]                                  # (K*C, 1)
        bp = next(w_refs)[...]                                  # (1, 1)
        h = leaky(h, 0.01)
        K = params["post"]["K"]
        pad = (K - 1) // 2
        c_in, t = h.shape
        hp = pad_lanes(h, pad, pad)
        stacked = jnp.concatenate([hp[:, k:k + t] for k in range(K)], axis=0)
        y = jnp.sum(wp * stacked, axis=0, keepdims=True) + bp
        o_ref[0] = jnp.tanh(y).astype(o_ref.dtype)

    # ---------------- specs / launch ------------------------------------------
    def const_spec(arr):
        nd = arr.ndim
        # Constant index_map -> Pallas keeps the block resident (no re-DMA of
        # weights between consecutive grid steps).
        return pl.BlockSpec(arr.shape, lambda bidx, _nd=nd: (0,) * _nd)

    in_specs = [pl.BlockSpec((1, n_mels, T), lambda bidx: (bidx, 0, 0))]
    in_specs += [const_spec(a) for a in flat]

    out = pl.pallas_call(
        kernel,
        out_shape=jax.ShapeDtypeStruct((B, 1, T_final), jnp.float32),
        grid=(B,),
        in_specs=in_specs,
        out_specs=pl.BlockSpec((1, 1, T_final), lambda bidx: (bidx, 0, 0)),
        compiler_params=pltpu.CompilerParams(
            dimension_semantics=("parallel",),   # v7x: 2 TensorCores split the batch
        ),
    )(x, *flat)
    return out[:, 0, :]                          # squeeze(dim=1)


# ----------------------------- main ------------------------------------------
if __name__ == "__main__":
    key = jax.random.PRNGKey(0)
    kp, kx = jax.random.split(key)
    params = build_params(kp)

    B, n_mels, T = 2, 80, 16
    x = jax.random.normal(kx, (B, n_mels, T), jnp.float32)

    out = generator_forward(x, params)
    jax.block_until_ready(out)

    expected_T = T
    for u in model_config.upsample_rates:
        expected_T *= u
    assert out.shape == (B, expected_T), out.shape
    assert out.dtype == jnp.float32
    print("KERNEL_OK")
</pallas_src>

<mosaic_0001>
module attributes {stable_mosaic.version = 11 : i64} {
  func.func @kernel(%arg0: i32, %arg1: memref<1x80x16xf32, #tpu.memory_space<vmem>>, %arg2: memref<32x560xf32, #tpu.memory_space<vmem>>, %arg3: memref<32x1xf32, #tpu.memory_space<vmem>>, %arg4: memref<4x16x32xf32, #tpu.memory_space<vmem>>, %arg5: memref<16x1xf32, #tpu.memory_space<vmem>>, %arg6: memref<16x48xf32, #tpu.memory_space<vmem>>, %arg7: memref<16x1xf32, #tpu.memory_space<vmem>>, %arg8: memref<16x48xf32, #tpu.memory_space<vmem>>, %arg9: memref<16x1xf32, #tpu.memory_space<vmem>>, %arg10: memref<16x80xf32, #tpu.memory_space<vmem>>, %arg11: memref<16x1xf32, #tpu.memory_space<vmem>>, %arg12: memref<16x80xf32, #tpu.memory_space<vmem>>, %arg13: memref<16x1xf32, #tpu.memory_space<vmem>>, %arg14: memref<4x8x16xf32, #tpu.memory_space<vmem>>, %arg15: memref<8x1xf32, #tpu.memory_space<vmem>>, %arg16: memref<8x24xf32, #tpu.memory_space<vmem>>, %arg17: memref<8x1xf32, #tpu.memory_space<vmem>>, %arg18: memref<8x24xf32, #tpu.memory_space<vmem>>, %arg19: memref<8x1xf32, #tpu.memory_space<vmem>>, %arg20: memref<8x40xf32, #tpu.memory_space<vmem>>, %arg21: memref<8x1xf32, #tpu.memory_space<vmem>>, %arg22: memref<8x40xf32, #tpu.memory_space<vmem>>, %arg23: memref<8x1xf32, #tpu.memory_space<vmem>>, %arg24: memref<56x1xf32, #tpu.memory_space<vmem>>, %arg25: memref<1x1xf32, #tpu.memory_space<vmem>>, %arg26: memref<1x1x64xf32, #tpu.memory_space<vmem>>) attributes {dimension_semantics = [#tpu.dimension_semantics<parallel>], iteration_bounds = array<i64: 2>, scalar_prefetch = 0 : i64, scratch_operands = 0 : i64, tpu.core_type = #tpu.core_type<tc>, window_params = [{transform_indices = @transform_0, window_bounds = array<i64: 1, 80, 16>}, {pipeline_mode = #tpu.pipeline_mode<synchronous>, transform_indices = @transform_1, window_bounds = array<i64: 32, 560>}, {pipeline_mode = #tpu.pipeline_mode<synchronous>, transform_indices = @transform_2, window_bounds = array<i64: 32, 1>}, {pipeline_mode = #tpu.pipeline_mode<synchronous>, transform_indices = @transform_3, window_bounds = array<i64: 4, 16, 32>}, {pipeline_mode = #tpu.pipeline_mode<synchronous>, transform_indices = @transform_4, window_bounds = array<i64: 16, 1>}, {pipeline_mode = #tpu.pipeline_mode<synchronous>, transform_indices = @transform_5, window_bounds = array<i64: 16, 48>}, {pipeline_mode = #tpu.pipeline_mode<synchronous>, transform_indices = @transform_6, window_bounds = array<i64: 16, 1>}, {pipeline_mode = #tpu.pipeline_mode<synchronous>, transform_indices = @transform_7, window_bounds = array<i64: 16, 48>}, {pipeline_mode = #tpu.pipeline_mode<synchronous>, transform_indices = @transform_8, window_bounds = array<i64: 16, 1>}, {pipeline_mode = #tpu.pipeline_mode<synchronous>, transform_indices = @transform_9, window_bounds = array<i64: 16, 80>}, {pipeline_mode = #tpu.pipeline_mode<synchronous>, transform_indices = @transform_10, window_bounds = array<i64: 16, 1>}, {pipeline_mode = #tpu.pipeline_mode<synchronous>, transform_indices = @transform_11, window_bounds = array<i64: 16, 80>}, {pipeline_mode = #tpu.pipeline_mode<synchronous>, transform_indices = @transform_12, window_bounds = array<i64: 16, 1>}, {pipeline_mode = #tpu.pipeline_mode<synchronous>, transform_indices = @transform_13, window_bounds = array<i64: 4, 8, 16>}, {pipeline_mode = #tpu.pipeline_mode<synchronous>, transform_indices = @transform_14, window_bounds = array<i64: 8, 1>}, {pipeline_mode = #tpu.pipeline_mode<synchronous>, transform_indices = @transform_15, window_bounds = array<i64: 8, 24>}, {pipeline_mode = #tpu.pipeline_mode<synchronous>, transform_indices = @transform_16, window_bounds = array<i64: 8, 1>}, {pipeline_mode = #tpu.pipeline_mode<synchronous>, transform_indices = @transform_17, window_bounds = array<i64: 8, 24>}, {pipeline_mode = #tpu.pipeline_mode<synchronous>, transform_indices = @transform_18, window_bounds = array<i64: 8, 1>}, {pipeline_mode = #tpu.pipeline_mode<synchronous>, transform_indices = @transform_19, window_bounds = array<i64: 8, 40>}, {pipeline_mode = #tpu.pipeline_mode<synchronous>, transform_indices = @transform_20, window_bounds = array<i64: 8, 1>}, {pipeline_mode = #tpu.pipeline_mode<synchronous>, transform_indices = @transform_21, window_bounds = array<i64: 8, 40>}, {pipeline_mode = #tpu.pipeline_mode<synchronous>, transform_indices = @transform_22, window_bounds = array<i64: 8, 1>}, {pipeline_mode = #tpu.pipeline_mode<synchronous>, transform_indices = @transform_23, window_bounds = array<i64: 56, 1>}, {pipeline_mode = #tpu.pipeline_mode<synchronous>, transform_indices = @transform_24, window_bounds = array<i64: 1, 1>}, {transform_indices = @transform_25, window_bounds = array<i64: 1, 1, 64>}]} {
    %c0 = arith.constant 0 : index
    %c0_0 = arith.constant 0 : index
    %c0_1 = arith.constant 0 : index
    %0 = vector.load %arg1[%c0, %c0_0, %c0_1] : memref<1x80x16xf32, #tpu.memory_space<vmem>>, vector<1x80x16xf32>
    %1 = vector.shape_cast %0 : vector<1x80x16xf32> to vector<80x16xf32>
    %c0_2 = arith.constant 0 : index
    %c0_3 = arith.constant 0 : index
    %2 = vector.load %arg2[%c0_2, %c0_3] : memref<32x560xf32, #tpu.memory_space<vmem>>, vector<32x560xf32>
    %c0_4 = arith.constant 0 : index
    %c0_5 = arith.constant 0 : index
    %3 = vector.load %arg3[%c0_4, %c0_5] : memref<32x1xf32, #tpu.memory_space<vmem>>, vector<32x1xf32>
    %cst = arith.constant 0.000000e+00 : f32
    %4 = vector.broadcast %cst : f32 to vector<80x3xf32>
    %cst_6 = arith.constant 0.000000e+00 : f32
    %5 = vector.broadcast %cst_6 : f32 to vector<80x3xf32>
    %6 = tpu.concatenate %4, %1, %5 in 1 : vector<80x3xf32>, vector<80x16xf32>, vector<80x3xf32> -> vector<80x22xf32>
    %7 = vector.extract_strided_slice %6 {offsets = [0, 0], sizes = [80, 16], strides = [1, 1]} : vector<80x22xf32> to vector<80x16xf32>
    %8 = vector.extract_strided_slice %6 {offsets = [0, 1], sizes = [80, 16], strides = [1, 1]} : vector<80x22xf32> to vector<80x16xf32>
    %9 = vector.extract_strided_slice %6 {offsets = [0, 2], sizes = [80, 16], strides = [1, 1]} : vector<80x22xf32> to vector<80x16xf32>
    %10 = vector.extract_strided_slice %6 {offsets = [0, 3], sizes = [80, 16], strides = [1, 1]} : vector<80x22xf32> to vector<80x16xf32>
    %11 = vector.extract_strided_slice %6 {offsets = [0, 4], sizes = [80, 16], strides = [1, 1]} : vector<80x22xf32> to vector<80x16xf32>
    %12 = vector.extract_strided_slice %6 {offsets = [0, 5], sizes = [80, 16], strides = [1, 1]} : vector<80x22xf32> to vector<80x16xf32>
    %13 = vector.extract_strided_slice %6 {offsets = [0, 6], sizes = [80, 16], strides = [1, 1]} : vector<80x22xf32> to vector<80x16xf32>
    %14 = tpu.concatenate %7, %8, %9, %10, %11, %12, %13 in 0 : vector<80x16xf32>, vector<80x16xf32>, vector<80x16xf32>, vector<80x16xf32>, vector<80x16xf32>, vector<80x16xf32>, vector<80x16xf32> -> vector<560x16xf32>
    %cst_7 = arith.constant dense<0.000000e+00> : vector<32x16xf32>
    %15 = tpu.matmul %2, %14, %cst_7 {dimension_numbers = #tpu.dot_dimension_numbers<[1], [0], [0], [1], [0, 0, 1, 1], [], []>} : vector<32x560xf32>, vector<560x16xf32>, vector<32x16xf32> -> vector<32x16xf32>
    %16 = vector.broadcast %3 : vector<32x1xf32> to vector<32x16xf32>
    %17 = arith.addf %15, %16 : vector<32x16xf32>
    %c0_8 = arith.constant 0 : index
    %c0_9 = arith.constant 0 : index
    %c0_10 = arith.constant 0 : index
    %18 = vector.load %arg4[%c0_8, %c0_9, %c0_10] : memref<4x16x32xf32, #tpu.memory_space<vmem>>, vector<4x16x32xf32>
    %c0_11 = arith.constant 0 : index
    %c0_12 = arith.constant 0 : index
    %19 = vector.load %arg5[%c0_11, %c0_12] : memref<16x1xf32, #tpu.memory_space<vmem>>, vector<16x1xf32>
    %cst_13 = arith.constant 0.000000e+00 : f32
    %20 = vector.broadcast %cst_13 : f32 to vector<32x16xf32>
    %21 = arith.cmpf oge, %17, %20 : vector<32x16xf32>
    %cst_14 = arith.constant 1.000000e-01 : f32
    %22 = vector.broadcast %cst_14 : f32 to vector<32x16xf32>
    %23 = arith.mulf %22, %17 : vector<32x16xf32>
    %24 = arith.select %21, %17, %23 : vector<32x16xi1>, vector<32x16xf32>
    %cst_15 = arith.constant 0.000000e+00 : f32
    %25 = vector.broadcast %cst_15 : f32 to vector<32x1xf32>
    %cst_16 = arith.constant 0.000000e+00 : f32
    %26 = vector.broadcast %cst_16 : f32 to vector<32x1xf32>
    %27 = tpu.concatenate %25, %24, %26 in 1 : vector<32x1xf32>, vector<32x16xf32>, vector<32x1xf32> -> vector<32x18xf32>
    %28 = tpu.iota {dimensions = array<i32: 0>} : vector<16x32xi32>
    %29 = tpu.iota {dimensions = array<i32: 1>} : vector<16x32xi32>
    %cst_17 = arith.constant 0.000000e+00 : f32
    %30 = vector.broadcast %cst_17 : f32 to vector<16x32xf32>
    %31 = vector.extract_strided_slice %27 {offsets = [0, 1], sizes = [32, 16], strides = [1, 1]} : vector<32x18xf32> to vector<32x16xf32>
    %32 = vector.extract_strided_slice %27 {offsets = [0, 0], sizes = [32, 16], strides = [1, 1]} : vector<32x18xf32> to vector<32x16xf32>
    %33 = tpu.concatenate %31, %32 in 0 : vector<32x16xf32>, vector<32x16xf32> -> vector<64x16xf32>
    %34 = vector.extract_strided_slice %18 {offsets = [1, 0, 0], sizes = [1, 16, 32], strides = [1, 1, 1]} : vector<4x16x32xf32> to vector<1x16x32xf32>
    %35 = vector.shape_cast %34 : vector<1x16x32xf32> to vector<16x32xf32>
    %36 = vector.extract_strided_slice %18 {offsets = [3, 0, 0], sizes = [1, 16, 32], strides = [1, 1, 1]} : vector<4x16x32xf32> to vector<1x16x32xf32>
    %37 = vector.shape_cast %36 : vector<1x16x32xf32> to vector<16x32xf32>
    %38 = tpu.concatenate %35, %37 in 1 : vector<16x32xf32>, vector<16x32xf32> -> vector<16x64xf32>
    %cst_18 = arith.constant dense<0.000000e+00> : vector<16x16xf32>
    %39 = tpu.matmul %38, %33, %cst_18 {dimension_numbers = #tpu.dot_dimension_numbers<[1], [0], [0], [1], [0, 0, 1, 1], [], []>} : vector<16x64xf32>, vector<64x16xf32>, vector<16x16xf32> -> vector<16x16xf32>
    %c2_i32 = arith.constant 2 : i32
    %40 = vector.broadcast %c2_i32 : i32 to vector<16x32xi32>
    %41 = arith.muli %40, %28 : vector<16x32xi32>
    %c0_i32 = arith.constant 0 : i32
    %42 = vector.broadcast %c0_i32 : i32 to vector<16x32xi32>
    %43 = arith.addi %41, %42 : vector<16x32xi32>
    %44 = arith.cmpi eq, %29, %43 : vector<16x32xi32>
    %45 = arith.extui %44 : vector<16x32xi1> to vector<16x32xi32>
    %46 = arith.sitofp %45 : vector<16x32xi32> to vector<16x32xf32>
    %cst_19 = arith.constant dense<0.000000e+00> : vector<16x32xf32>
    %47 = tpu.matmul %39, %46, %cst_19 {dimension_numbers = #tpu.dot_dimension_numbers<[1], [0], [0], [1], [0, 0, 1, 1], [], []>} : vector<16x16xf32>, vector<16x32xf32>, vector<16x32xf32> -> vector<16x32xf32>
    %48 = arith.addf %30, %47 : vector<16x32xf32>
    %49 = vector.extract_strided_slice %27 {offsets = [0, 2], sizes = [32, 16], strides = [1, 1]} : vector<32x18xf32> to vector<32x16xf32>
    %50 = vector.extract_strided_slice %27 {offsets = [0, 1], sizes = [32, 16], strides = [1, 1]} : vector<32x18xf32> to vector<32x16xf32>
    %51 = tpu.concatenate %49, %50 in 0 : vector<32x16xf32>, vector<32x16xf32> -> vector<64x16xf32>
    %52 = vector.extract_strided_slice %18 {offsets = [0, 0, 0], sizes = [1, 16, 32], strides = [1, 1, 1]} : vector<4x16x32xf32> to vector<1x16x32xf32>
    %53 = vector.shape_cast %52 : vector<1x16x32xf32> to vector<16x32xf32>
    %54 = vector.extract_strided_slice %18 {offsets = [2, 0, 0], sizes = [1, 16, 32], strides = [1, 1, 1]} : vector<4x16x32xf32> to vector<1x16x32xf32>
    %55 = vector.shape_cast %54 : vector<1x16x32xf32> to vector<16x32xf32>
    %56 = tpu.concatenate %53, %55 in 1 : vector<16x32xf32>, vector<16x32xf32> -> vector<16x64xf32>
    %cst_20 = arith.constant dense<0.000000e+00> : vector<16x16xf32>
    %57 = tpu.matmul %56, %51, %cst_20 {dimension_numbers = #tpu.dot_dimension_numbers<[1], [0], [0], [1], [0, 0, 1, 1], [], []>} : vector<16x64xf32>, vector<64x16xf32>, vector<16x16xf32> -> vector<16x16xf32>
    %c2_i32_21 = arith.constant 2 : i32
    %58 = vector.broadcast %c2_i32_21 : i32 to vector<16x32xi32>
    %59 = arith.muli %58, %28 : vector<16x32xi32>
    %c1_i32 = arith.constant 1 : i32
    %60 = vector.broadcast %c1_i32 : i32 to vector<16x32xi32>
    %61 = arith.addi %59, %60 : vector<16x32xi32>
    %62 = arith.cmpi eq, %29, %61 : vector<16x32xi32>
    %63 = arith.extui %62 : vector<16x32xi1> to vector<16x32xi32>
    %64 = arith.sitofp %63 : vector<16x32xi32> to vector<16x32xf32>
    %cst_22 = arith.constant dense<0.000000e+00> : vector<16x32xf32>
    %65 = tpu.matmul %57, %64, %cst_22 {dimension_numbers = #tpu.dot_dimension_numbers<[1], [0], [0], [1], [0, 0, 1, 1], [], []>} : vector<16x16xf32>, vector<16x32xf32>, vector<16x32xf32> -> vector<16x32xf32>
    %66 = arith.addf %48, %65 : vector<16x32xf32>
    %67 = vector.broadcast %19 : vector<16x1xf32> to vector<16x32xf32>
    %68 = arith.addf %66, %67 : vector<16x32xf32>
    %c0_23 = arith.constant 0 : index
    %c0_24 = arith.constant 0 : index
    %69 = vector.load %arg6[%c0_23, %c0_24] : memref<16x48xf32, #tpu.memory_space<vmem>>, vector<16x48xf32>
    %c0_25 = arith.constant 0 : index
    %c0_26 = arith.constant 0 : index
    %70 = vector.load %arg7[%c0_25, %c0_26] : memref<16x1xf32, #tpu.memory_space<vmem>>, vector<16x1xf32>
    %cst_27 = arith.constant 0.000000e+00 : f32
    %71 = vector.broadcast %cst_27 : f32 to vector<16x32xf32>
    %72 = arith.cmpf oge, %68, %71 : vector<16x32xf32>
    %cst_28 = arith.constant 1.000000e-01 : f32
    %73 = vector.broadcast %cst_28 : f32 to vector<16x32xf32>
    %74 = arith.mulf %73, %68 : vector<16x32xf32>
    %75 = arith.select %72, %68, %74 : vector<16x32xi1>, vector<16x32xf32>
    %cst_29 = arith.constant 0.000000e+00 : f32
    %76 = vector.broadcast %cst_29 : f32 to vector<16x1xf32>
    %cst_30 = arith.constant 0.000000e+00 : f32
    %77 = vector.broadcast %cst_30 : f32 to vector<16x1xf32>
    %78 = tpu.concatenate %76, %75, %77 in 1 : vector<16x1xf32>, vector<16x32xf32>, vector<16x1xf32> -> vector<16x34xf32>
    %79 = vector.extract_strided_slice %78 {offsets = [0, 0], sizes = [16, 32], strides = [1, 1]} : vector<16x34xf32> to vector<16x32xf32>
    %80 = vector.extract_strided_slice %78 {offsets = [0, 1], sizes = [16, 32], strides = [1, 1]} : vector<16x34xf32> to vector<16x32xf32>
    %81 = vector.extract_strided_slice %78 {offsets = [0, 2], sizes = [16, 32], strides = [1, 1]} : vector<16x34xf32> to vector<16x32xf32>
    %82 = tpu.concatenate %79, %80, %81 in 0 : vector<16x32xf32>, vector<16x32xf32>, vector<16x32xf32> -> vector<48x32xf32>
    %cst_31 = arith.constant dense<0.000000e+00> : vector<16x32xf32>
    %83 = tpu.matmul %69, %82, %cst_31 {dimension_numbers = #tpu.dot_dimension_numbers<[1], [0], [0], [1], [0, 0, 1, 1], [], []>} : vector<16x48xf32>, vector<48x32xf32>, vector<16x32xf32> -> vector<16x32xf32>
    %84 = vector.broadcast %70 : vector<16x1xf32> to vector<16x32xf32>
    %85 = arith.addf %83, %84 : vector<16x32xf32>
    %86 = arith.addf %68, %85 : vector<16x32xf32>
    %c0_32 = arith.constant 0 : index
    %c0_33 = arith.constant 0 : index
    %87 = vector.load %arg8[%c0_32, %c0_33] : memref<16x48xf32, #tpu.memory_space<vmem>>, vector<16x48xf32>
    %c0_34 = arith.constant 0 : index
    %c0_35 = arith.constant 0 : index
    %88 = vector.load %arg9[%c0_34, %c0_35] : memref<16x1xf32, #tpu.memory_space<vmem>>, vector<16x1xf32>
    %cst_36 = arith.constant 0.000000e+00 : f32
    %89 = vector.broadcast %cst_36 : f32 to vector<16x32xf32>
    %90 = arith.cmpf oge, %86, %89 : vector<16x32xf32>
    %cst_37 = arith.constant 1.000000e-01 : f32
    %91 = vector.broadcast %cst_37 : f32 to vector<16x32xf32>
    %92 = arith.mulf %91, %86 : vector<16x32xf32>
    %93 = arith.select %90, %86, %92 : vector<16x32xi1>, vector<16x32xf32>
    %cst_38 = arith.constant 0.000000e+00 : f32
    %94 = vector.broadcast %cst_38 : f32 to vector<16x3xf32>
    %cst_39 = arith.constant 0.000000e+00 : f32
    %95 = vector.broadcast %cst_39 : f32 to vector<16x3xf32>
    %96 = tpu.concatenate %94, %93, %95 in 1 : vector<16x3xf32>, vector<16x32xf32>, vector<16x3xf32> -> vector<16x38xf32>
    %97 = vector.extract_strided_slice %96 {offsets = [0, 0], sizes = [16, 32], strides = [1, 1]} : vector<16x38xf32> to vector<16x32xf32>
    %98 = vector.extract_strided_slice %96 {offsets = [0, 3], sizes = [16, 32], strides = [1, 1]} : vector<16x38xf32> to vector<16x32xf32>
    %99 = vector.extract_strided_slice %96 {offsets = [0, 6], sizes = [16, 32], strides = [1, 1]} : vector<16x38xf32> to vector<16x32xf32>
    %100 = tpu.concatenate %97, %98, %99 in 0 : vector<16x32xf32>, vector<16x32xf32>, vector<16x32xf32> -> vector<48x32xf32>
    %cst_40 = arith.constant dense<0.000000e+00> : vector<16x32xf32>
    %101 = tpu.matmul %87, %100, %cst_40 {dimension_numbers = #tpu.dot_dimension_numbers<[1], [0], [0], [1], [0, 0, 1, 1], [], []>} : vector<16x48xf32>, vector<48x32xf32>, vector<16x32xf32> -> vector<16x32xf32>
    %102 = vector.broadcast %88 : vector<16x1xf32> to vector<16x32xf32>
    %103 = arith.addf %101, %102 : vector<16x32xf32>
    %104 = arith.addf %86, %103 : vector<16x32xf32>
    %c0_41 = arith.constant 0 : index
    %c0_42 = arith.constant 0 : index
    %105 = vector.load %arg10[%c0_41, %c0_42] : memref<16x80xf32, #tpu.memory_space<vmem>>, vector<16x80xf32>
    %c0_43 = arith.constant 0 : index
    %c0_44 = arith.constant 0 : index
    %106 = vector.load %arg11[%c0_43, %c0_44] : memref<16x1xf32, #tpu.memory_space<vmem>>, vector<16x1xf32>
    %cst_45 = arith.constant 0.000000e+00 : f32
    %107 = vector.broadcast %cst_45 : f32 to vector<16x32xf32>
    %108 = arith.cmpf oge, %68, %107 : vector<16x32xf32>
    %cst_46 = arith.constant 1.000000e-01 : f32
    %109 = vector.broadcast %cst_46 : f32 to vector<16x32xf32>
    %110 = arith.mulf %109, %68 : vector<16x32xf32>
    %111 = arith.select %108, %68, %110 : vector<16x32xi1>, vector<16x32xf32>
    %cst_47 = arith.constant 0.000000e+00 : f32
    %112 = vector.broadcast %cst_47 : f32 to vector<16x2xf32>
    %cst_48 = arith.constant 0.000000e+00 : f32
    %113 = vector.broadcast %cst_48 : f32 to vector<16x2xf32>
    %114 = tpu.concatenate %112, %111, %113 in 1 : vector<16x2xf32>, vector<16x32xf32>, vector<16x2xf32> -> vector<16x36xf32>
    %115 = vector.extract_strided_slice %114 {offsets = [0, 0], sizes = [16, 32], strides = [1, 1]} : vector<16x36xf32> to vector<16x32xf32>
    %116 = vector.extract_strided_slice %114 {offsets = [0, 1], sizes = [16, 32], strides = [1, 1]} : vector<16x36xf32> to vector<16x32xf32>
    %117 = vector.extract_strided_slice %114 {offsets = [0, 2], sizes = [16, 32], strides = [1, 1]} : vector<16x36xf32> to vector<16x32xf32>
    %118 = vector.extract_strided_slice %114 {offsets = [0, 3], sizes = [16, 32], strides = [1, 1]} : vector<16x36xf32> to vector<16x32xf32>
    %119 = vector.extract_strided_slice %114 {offsets = [0, 4], sizes = [16, 32], strides = [1, 1]} : vector<16x36xf32> to vector<16x32xf32>
    %120 = tpu.concatenate %115, %116, %117, %118, %119 in 0 : vector<16x32xf32>, vector<16x32xf32>, vector<16x32xf32>, vector<16x32xf32>, vector<16x32xf32> -> vector<80x32xf32>
    %cst_49 = arith.constant dense<0.000000e+00> : vector<16x32xf32>
    %121 = tpu.matmul %105, %120, %cst_49 {dimension_numbers = #tpu.dot_dimension_numbers<[1], [0], [0], [1], [0, 0, 1, 1], [], []>} : vector<16x80xf32>, vector<80x32xf32>, vector<16x32xf32> -> vector<16x32xf32>
    %122 = vector.broadcast %106 : vector<16x1xf32> to vector<16x32xf32>
    %123 = arith.addf %121, %122 : vector<16x32xf32>
    %124 = arith.addf %68, %123 : vector<16x32xf32>
    %c0_50 = arith.constant 0 : index
    %c0_51 = arith.constant 0 : index
    %125 = vector.load %arg12[%c0_50, %c0_51] : memref<16x80xf32, #tpu.memory_space<vmem>>, vector<16x80xf32>
    %c0_52 = arith.constant 0 : index
    %c0_53 = arith.constant 0 : index
    %126 = vector.load %arg13[%c0_52, %c0_53] : memref<16x1xf32, #tpu.memory_space<vmem>>, vector<16x1xf32>
    %cst_54 = arith.constant 0.000000e+00 : f32
    %127 = vector.broadcast %cst_54 : f32 to vector<16x32xf32>
    %128 = arith.cmpf oge, %124, %127 : vector<16x32xf32>
    %cst_55 = arith.constant 1.000000e-01 : f32
    %129 = vector.broadcast %cst_55 : f32 to vector<16x32xf32>
    %130 = arith.mulf %129, %124 : vector<16x32xf32>
    %131 = arith.select %128, %124, %130 : vector<16x32xi1>, vector<16x32xf32>
    %cst_56 = arith.constant 0.000000e+00 : f32
    %132 = vector.broadcast %cst_56 : f32 to vector<16x6xf32>
    %cst_57 = arith.constant 0.000000e+00 : f32
    %133 = vector.broadcast %cst_57 : f32 to vector<16x6xf32>
    %134 = tpu.concatenate %132, %131, %133 in 1 : vector<16x6xf32>, vector<16x32xf32>, vector<16x6xf32> -> vector<16x44xf32>
    %135 = vector.extract_strided_slice %134 {offsets = [0, 0], sizes = [16, 32], strides = [1, 1]} : vector<16x44xf32> to vector<16x32xf32>
    %136 = vector.extract_strided_slice %134 {offsets = [0, 3], sizes = [16, 32], strides = [1, 1]} : vector<16x44xf32> to vector<16x32xf32>
    %137 = vector.extract_strided_slice %134 {offsets = [0, 6], sizes = [16, 32], strides = [1, 1]} : vector<16x44xf32> to vector<16x32xf32>
    %138 = vector.extract_strided_slice %134 {offsets = [0, 9], sizes = [16, 32], strides = [1, 1]} : vector<16x44xf32> to vector<16x32xf32>
    %139 = vector.extract_strided_slice %134 {offsets = [0, 12], sizes = [16, 32], strides = [1, 1]} : vector<16x44xf32> to vector<16x32xf32>
    %140 = tpu.concatenate %135, %136, %137, %138, %139 in 0 : vector<16x32xf32>, vector<16x32xf32>, vector<16x32xf32>, vector<16x32xf32>, vector<16x32xf32> -> vector<80x32xf32>
    %cst_58 = arith.constant dense<0.000000e+00> : vector<16x32xf32>
    %141 = tpu.matmul %125, %140, %cst_58 {dimension_numbers = #tpu.dot_dimension_numbers<[1], [0], [0], [1], [0, 0, 1, 1], [], []>} : vector<16x80xf32>, vector<80x32xf32>, vector<16x32xf32> -> vector<16x32xf32>
    %142 = vector.broadcast %126 : vector<16x1xf32> to vector<16x32xf32>
    %143 = arith.addf %141, %142 : vector<16x32xf32>
    %144 = arith.addf %124, %143 : vector<16x32xf32>
    %145 = arith.addf %104, %144 : vector<16x32xf32>
    %cst_59 = arith.constant 5.000000e-01 : f32
    %146 = vector.broadcast %cst_59 : f32 to vector<16x32xf32>
    %147 = arith.mulf %145, %146 : vector<16x32xf32>
    %c0_60 = arith.constant 0 : index
    %c0_61 = arith.constant 0 : index
    %c0_62 = arith.constant 0 : index
    %148 = vector.load %arg14[%c0_60, %c0_61, %c0_62] : memref<4x8x16xf32, #tpu.memory_space<vmem>>, vector<4x8x16xf32>
    %c0_63 = arith.constant 0 : index
    %c0_64 = arith.constant 0 : index
    %149 = vector.load %arg15[%c0_63, %c0_64] : memref<8x1xf32, #tpu.memory_space<vmem>>, vector<8x1xf32>
    %cst_65 = arith.constant 0.000000e+00 : f32
    %150 = vector.broadcast %cst_65 : f32 to vector<16x32xf32>
    %151 = arith.cmpf oge, %147, %150 : vector<16x32xf32>
    %cst_66 = arith.constant 1.000000e-01 : f32
    %152 = vector.broadcast %cst_66 : f32 to vector<16x32xf32>
    %153 = arith.mulf %152, %147 : vector<16x32xf32>
    %154 = arith.select %151, %147, %153 : vector<16x32xi1>, vector<16x32xf32>
    %cst_67 = arith.constant 0.000000e+00 : f32
    %155 = vector.broadcast %cst_67 : f32 to vector<16x1xf32>
    %cst_68 = arith.constant 0.000000e+00 : f32
    %156 = vector.broadcast %cst_68 : f32 to vector<16x1xf32>
    %157 = tpu.concatenate %155, %154, %156 in 1 : vector<16x1xf32>, vector<16x32xf32>, vector<16x1xf32> -> vector<16x34xf32>
    %158 = tpu.iota {dimensions = array<i32: 0>} : vector<32x64xi32>
    %159 = tpu.iota {dimensions = array<i32: 1>} : vector<32x64xi32>
    %cst_69 = arith.constant 0.000000e+00 : f32
    %160 = vector.broadcast %cst_69 : f32 to vector<8x64xf32>
    %161 = vector.extract_strided_slice %157 {offsets = [0, 1], sizes = [16, 32], strides = [1, 1]} : vector<16x34xf32> to vector<16x32xf32>
    %162 = vector.extract_strided_slice %157 {offsets = [0, 0], sizes = [16, 32], strides = [1, 1]} : vector<16x34xf32> to vector<16x32xf32>
    %163 = tpu.concatenate %161, %162 in 0 : vector<16x32xf32>, vector<16x32xf32> -> vector<32x32xf32>
    %164 = vector.extract_strided_slice %148 {offsets = [1, 0, 0], sizes = [1, 8, 16], strides = [1, 1, 1]} : vector<4x8x16xf32> to vector<1x8x16xf32>
    %165 = vector.shape_cast %164 : vector<1x8x16xf32> to vector<8x16xf32>
    %166 = vector.extract_strided_slice %148 {offsets = [3, 0, 0], sizes = [1, 8, 16], strides = [1, 1, 1]} : vector<4x8x16xf32> to vector<1x8x16xf32>
    %167 = vector.shape_cast %166 : vector<1x8x16xf32> to vector<8x16xf32>
    %168 = tpu.concatenate %165, %167 in 1 : vector<8x16xf32>, vector<8x16xf32> -> vector<8x32xf32>
    %cst_70 = arith.constant dense<0.000000e+00> : vector<8x32xf32>
    %169 = tpu.matmul %168, %163, %cst_70 {dimension_numbers = #tpu.dot_dimension_numbers<[1], [0], [0], [1], [0, 0, 1, 1], [], []>} : vector<8x32xf32>, vector<32x32xf32>, vector<8x32xf32> -> vector<8x32xf32>
    %c2_i32_71 = arith.constant 2 : i32
    %170 = vector.broadcast %c2_i32_71 : i32 to vector<32x64xi32>
    %171 = arith.muli %170, %158 : vector<32x64xi32>
    %c0_i32_72 = arith.constant 0 : i32
    %172 = vector.broadcast %c0_i32_72 : i32 to vector<32x64xi32>
    %173 = arith.addi %171, %172 : vector<32x64xi32>
    %174 = arith.cmpi eq, %159, %173 : vector<32x64xi32>
    %175 = arith.extui %174 : vector<32x64xi1> to vector<32x64xi32>
    %176 = arith.sitofp %175 : vector<32x64xi32> to vector<32x64xf32>
    %cst_73 = arith.constant dense<0.000000e+00> : vector<8x64xf32>
    %177 = tpu.matmul %169, %176, %cst_73 {dimension_numbers = #tpu.dot_dimension_numbers<[1], [0], [0], [1], [0, 0, 1, 1], [], []>} : vector<8x32xf32>, vector<32x64xf32>, vector<8x64xf32> -> vector<8x64xf32>
    %178 = arith.addf %160, %177 : vector<8x64xf32>
    %179 = vector.extract_strided_slice %157 {offsets = [0, 2], sizes = [16, 32], strides = [1, 1]} : vector<16x34xf32> to vector<16x32xf32>
    %180 = vector.extract_strided_slice %157 {offsets = [0, 1], sizes = [16, 32], strides = [1, 1]} : vector<16x34xf32> to vector<16x32xf32>
    %181 = tpu.concatenate %179, %180 in 0 : vector<16x32xf32>, vector<16x32xf32> -> vector<32x32xf32>
    %182 = vector.extract_strided_slice %148 {offsets = [0, 0, 0], sizes = [1, 8, 16], strides = [1, 1, 1]} : vector<4x8x16xf32> to vector<1x8x16xf32>
    %183 = vector.shape_cast %182 : vector<1x8x16xf32> to vector<8x16xf32>
    %184 = vector.extract_strided_slice %148 {offsets = [2, 0, 0], sizes = [1, 8, 16], strides = [1, 1, 1]} : vector<4x8x16xf32> to vector<1x8x16xf32>
    %185 = vector.shape_cast %184 : vector<1x8x16xf32> to vector<8x16xf32>
    %186 = tpu.concatenate %183, %185 in 1 : vector<8x16xf32>, vector<8x16xf32> -> vector<8x32xf32>
    %cst_74 = arith.constant dense<0.000000e+00> : vector<8x32xf32>
    %187 = tpu.matmul %186, %181, %cst_74 {dimension_numbers = #tpu.dot_dimension_numbers<[1], [0], [0], [1], [0, 0, 1, 1], [], []>} : vector<8x32xf32>, vector<32x32xf32>, vector<8x32xf32> -> vector<8x32xf32>
    %c2_i32_75 = arith.constant 2 : i32
    %188 = vector.broadcast %c2_i32_75 : i32 to vector<32x64xi32>
    %189 = arith.muli %188, %158 : vector<32x64xi32>
    %c1_i32_76 = arith.constant 1 : i32
    %190 = vector.broadcast %c1_i32_76 : i32 to vector<32x64xi32>
    %191 = arith.addi %189, %190 : vector<32x64xi32>
    %192 = arith.cmpi eq, %159, %191 : vector<32x64xi32>
    %193 = arith.extui %192 : vector<32x64xi1> to vector<32x64xi32>
    %194 = arith.sitofp %193 : vector<32x64xi32> to vector<32x64xf32>
    %cst_77 = arith.constant dense<0.000000e+00> : vector<8x64xf32>
    %195 = tpu.matmul %187, %194, %cst_77 {dimension_numbers = #tpu.dot_dimension_numbers<[1], [0], [0], [1], [0, 0, 1, 1], [], []>} : vector<8x32xf32>, vector<32x64xf32>, vector<8x64xf32> -> vector<8x64xf32>
    %196 = arith.addf %178, %195 : vector<8x64xf32>
    %197 = vector.broadcast %149 : vector<8x1xf32> to vector<8x64xf32>
    %198 = arith.addf %196, %197 : vector<8x64xf32>
    %c0_78 = arith.constant 0 : index
    %c0_79 = arith.constant 0 : index
    %199 = vector.load %arg16[%c0_78, %c0_79] : memref<8x24xf32, #tpu.memory_space<vmem>>, vector<8x24xf32>
    %c0_80 = arith.constant 0 : index
    %c0_81 = arith.constant 0 : index
    %200 = vector.load %arg17[%c0_80, %c0_81] : memref<8x1xf32, #tpu.memory_space<vmem>>, vector<8x1xf32>
    %cst_82 = arith.constant 0.000000e+00 : f32
    %201 = vector.broadcast %cst_82 : f32 to vector<8x64xf32>
    %202 = arith.cmpf oge, %198, %201 : vector<8x64xf32>
    %cst_83 = arith.constant 1.000000e-01 : f32
    %203 = vector.broadcast %cst_83 : f32 to vector<8x64xf32>
    %204 = arith.mulf %203, %198 : vector<8x64xf32>
    %205 = arith.select %202, %198, %204 : vector<8x64xi1>, vector<8x64xf32>
    %cst_84 = arith.constant 0.000000e+00 : f32
    %206 = vector.broadcast %cst_84 : f32 to vector<8x1xf32>
    %cst_85 = arith.constant 0.000000e+00 : f32
    %207 = vector.broadcast %cst_85 : f32 to vector<8x1xf32>
    %208 = tpu.concatenate %206, %205, %207 in 1 : vector<8x1xf32>, vector<8x64xf32>, vector<8x1xf32> -> vector<8x66xf32>
    %209 = vector.extract_strided_slice %208 {offsets = [0, 0], sizes = [8, 64], strides = [1, 1]} : vector<8x66xf32> to vector<8x64xf32>
    %210 = vector.extract_strided_slice %208 {offsets = [0, 1], sizes = [8, 64], strides = [1, 1]} : vector<8x66xf32> to vector<8x64xf32>
    %211 = vector.extract_strided_slice %208 {offsets = [0, 2], sizes = [8, 64], strides = [1, 1]} : vector<8x66xf32> to vector<8x64xf32>
    %212 = tpu.concatenate %209, %210, %211 in 0 : vector<8x64xf32>, vector<8x64xf32>, vector<8x64xf32> -> vector<24x64xf32>
    %cst_86 = arith.constant dense<0.000000e+00> : vector<8x64xf32>
    %213 = tpu.matmul %199, %212, %cst_86 {dimension_numbers = #tpu.dot_dimension_numbers<[1], [0], [0], [1], [0, 0, 1, 1], [], []>} : vector<8x24xf32>, vector<24x64xf32>, vector<8x64xf32> -> vector<8x64xf32>
    %214 = vector.broadcast %200 : vector<8x1xf32> to vector<8x64xf32>
    %215 = arith.addf %213, %214 : vector<8x64xf32>
    %216 = arith.addf %198, %215 : vector<8x64xf32>
    %c0_87 = arith.constant 0 : index
    %c0_88 = arith.constant 0 : index
    %217 = vector.load %arg18[%c0_87, %c0_88] : memref<8x24xf32, #tpu.memory_space<vmem>>, vector<8x24xf32>
    %c0_89 = arith.constant 0 : index
    %c0_90 = arith.constant 0 : index
    %218 = vector.load %arg19[%c0_89, %c0_90] : memref<8x1xf32, #tpu.memory_space<vmem>>, vector<8x1xf32>
    %cst_91 = arith.constant 0.000000e+00 : f32
    %219 = vector.broadcast %cst_91 : f32 to vector<8x64xf32>
    %220 = arith.cmpf oge, %216, %219 : vector<8x64xf32>
    %cst_92 = arith.constant 1.000000e-01 : f32
    %221 = vector.broadcast %cst_92 : f32 to vector<8x64xf32>
    %222 = arith.mulf %221, %216 : vector<8x64xf32>
    %223 = arith.select %220, %216, %222 : vector<8x64xi1>, vector<8x64xf32>
    %cst_93 = arith.constant 0.000000e+00 : f32
    %224 = vector.broadcast %cst_93 : f32 to vector<8x3xf32>
    %cst_94 = arith.constant 0.000000e+00 : f32
    %225 = vector.broadcast %cst_94 : f32 to vector<8x3xf32>
    %226 = tpu.concatenate %224, %223, %225 in 1 : vector<8x3xf32>, vector<8x64xf32>, vector<8x3xf32> -> vector<8x70xf32>
    %227 = vector.extract_strided_slice %226 {offsets = [0, 0], sizes = [8, 64], strides = [1, 1]} : vector<8x70xf32> to vector<8x64xf32>
    %228 = vector.extract_strided_slice %226 {offsets = [0, 3], sizes = [8, 64], strides = [1, 1]} : vector<8x70xf32> to vector<8x64xf32>
    %229 = vector.extract_strided_slice %226 {offsets = [0, 6], sizes = [8, 64], strides = [1, 1]} : vector<8x70xf32> to vector<8x64xf32>
    %230 = tpu.concatenate %227, %228, %229 in 0 : vector<8x64xf32>, vector<8x64xf32>, vector<8x64xf32> -> vector<24x64xf32>
    %cst_95 = arith.constant dense<0.000000e+00> : vector<8x64xf32>
    %231 = tpu.matmul %217, %230, %cst_95 {dimension_numbers = #tpu.dot_dimension_numbers<[1], [0], [0], [1], [0, 0, 1, 1], [], []>} : vector<8x24xf32>, vector<24x64xf32>, vector<8x64xf32> -> vector<8x64xf32>
    %232 = vector.broadcast %218 : vector<8x1xf32> to vector<8x64xf32>
    %233 = arith.addf %231, %232 : vector<8x64xf32>
    %234 = arith.addf %216, %233 : vector<8x64xf32>
    %c0_96 = arith.constant 0 : index
    %c0_97 = arith.constant 0 : index
    %235 = vector.load %arg20[%c0_96, %c0_97] : memref<8x40xf32, #tpu.memory_space<vmem>>, vector<8x40xf32>
    %c0_98 = arith.constant 0 : index
    %c0_99 = arith.constant 0 : index
    %236 = vector.load %arg21[%c0_98, %c0_99] : memref<8x1xf32, #tpu.memory_space<vmem>>, vector<8x1xf32>
    %cst_100 = arith.constant 0.000000e+00 : f32
    %237 = vector.broadcast %cst_100 : f32 to vector<8x64xf32>
    %238 = arith.cmpf oge, %198, %237 : vector<8x64xf32>
    %cst_101 = arith.constant 1.000000e-01 : f32
    %239 = vector.broadcast %cst_101 : f32 to vector<8x64xf32>
    %240 = arith.mulf %239, %198 : vector<8x64xf32>
    %241 = arith.select %238, %198, %240 : vector<8x64xi1>, vector<8x64xf32>
    %cst_102 = arith.constant 0.000000e+00 : f32
    %242 = vector.broadcast %cst_102 : f32 to vector<8x2xf32>
    %cst_103 = arith.constant 0.000000e+00 : f32
    %243 = vector.broadcast %cst_103 : f32 to vector<8x2xf32>
    %244 = tpu.concatenate %242, %241, %243 in 1 : vector<8x2xf32>, vector<8x64xf32>, vector<8x2xf32> -> vector<8x68xf32>
    %245 = vector.extract_strided_slice %244 {offsets = [0, 0], sizes = [8, 64], strides = [1, 1]} : vector<8x68xf32> to vector<8x64xf32>
    %246 = vector.extract_strided_slice %244 {offsets = [0, 1], sizes = [8, 64], strides = [1, 1]} : vector<8x68xf32> to vector<8x64xf32>
    %247 = vector.extract_strided_slice %244 {offsets = [0, 2], sizes = [8, 64], strides = [1, 1]} : vector<8x68xf32> to vector<8x64xf32>
    %248 = vector.extract_strided_slice %244 {offsets = [0, 3], sizes = [8, 64], strides = [1, 1]} : vector<8x68xf32> to vector<8x64xf32>
    %249 = vector.extract_strided_slice %244 {offsets = [0, 4], sizes = [8, 64], strides = [1, 1]} : vector<8x68xf32> to vector<8x64xf32>
    %250 = tpu.concatenate %245, %246, %247, %248, %249 in 0 : vector<8x64xf32>, vector<8x64xf32>, vector<8x64xf32>, vector<8x64xf32>, vector<8x64xf32> -> vector<40x64xf32>
    %cst_104 = arith.constant dense<0.000000e+00> : vector<8x64xf32>
    %251 = tpu.matmul %235, %250, %cst_104 {dimension_numbers = #tpu.dot_dimension_numbers<[1], [0], [0], [1], [0, 0, 1, 1], [], []>} : vector<8x40xf32>, vector<40x64xf32>, vector<8x64xf32> -> vector<8x64xf32>
    %252 = vector.broadcast %236 : vector<8x1xf32> to vector<8x64xf32>
    %253 = arith.addf %251, %252 : vector<8x64xf32>
    %254 = arith.addf %198, %253 : vector<8x64xf32>
    %c0_105 = arith.constant 0 : index
    %c0_106 = arith.constant 0 : index
    %255 = vector.load %arg22[%c0_105, %c0_106] : memref<8x40xf32, #tpu.memory_space<vmem>>, vector<8x40xf32>
    %c0_107 = arith.constant 0 : index
    %c0_108 = arith.constant 0 : index
    %256 = vector.load %arg23[%c0_107, %c0_108] : memref<8x1xf32, #tpu.memory_space<vmem>>, vector<8x1xf32>
    %cst_109 = arith.constant 0.000000e+00 : f32
    %257 = vector.broadcast %cst_109 : f32 to vector<8x64xf32>
    %258 = arith.cmpf oge, %254, %257 : vector<8x64xf32>
    %cst_110 = arith.constant 1.000000e-01 : f32
    %259 = vector.broadcast %cst_110 : f32 to vector<8x64xf32>
    %260 = arith.mulf %259, %254 : vector<8x64xf32>
    %261 = arith.select %258, %254, %260 : vector<8x64xi1>, vector<8x64xf32>
    %cst_111 = arith.constant 0.000000e+00 : f32
    %262 = vector.broadcast %cst_111 : f32 to vector<8x6xf32>
    %cst_112 = arith.constant 0.000000e+00 : f32
    %263 = vector.broadcast %cst_112 : f32 to vector<8x6xf32>
    %264 = tpu.concatenate %262, %261, %263 in 1 : vector<8x6xf32>, vector<8x64xf32>, vector<8x6xf32> -> vector<8x76xf32>
    %265 = vector.extract_strided_slice %264 {offsets = [0, 0], sizes = [8, 64], strides = [1, 1]} : vector<8x76xf32> to vector<8x64xf32>
    %266 = vector.extract_strided_slice %264 {offsets = [0, 3], sizes = [8, 64], strides = [1, 1]} : vector<8x76xf32> to vector<8x64xf32>
    %267 = vector.extract_strided_slice %264 {offsets = [0, 6], sizes = [8, 64], strides = [1, 1]} : vector<8x76xf32> to vector<8x64xf32>
    %268 = vector.extract_strided_slice %264 {offsets = [0, 9], sizes = [8, 64], strides = [1, 1]} : vector<8x76xf32> to vector<8x64xf32>
    %269 = vector.extract_strided_slice %264 {offsets = [0, 12], sizes = [8, 64], strides = [1, 1]} : vector<8x76xf32> to vector<8x64xf32>
    %270 = tpu.concatenate %265, %266, %267, %268, %269 in 0 : vector<8x64xf32>, vector<8x64xf32>, vector<8x64xf32>, vector<8x64xf32>, vector<8x64xf32> -> vector<40x64xf32>
    %cst_113 = arith.constant dense<0.000000e+00> : vector<8x64xf32>
    %271 = tpu.matmul %255, %270, %cst_113 {dimension_numbers = #tpu.dot_dimension_numbers<[1], [0], [0], [1], [0, 0, 1, 1], [], []>} : vector<8x40xf32>, vector<40x64xf32>, vector<8x64xf32> -> vector<8x64xf32>
    %272 = vector.broadcast %256 : vector<8x1xf32> to vector<8x64xf32>
    %273 = arith.addf %271, %272 : vector<8x64xf32>
    %274 = arith.addf %254, %273 : vector<8x64xf32>
    %275 = arith.addf %234, %274 : vector<8x64xf32>
    %cst_114 = arith.constant 5.000000e-01 : f32
    %276 = vector.broadcast %cst_114 : f32 to vector<8x64xf32>
    %277 = arith.mulf %275, %276 : vector<8x64xf32>
    %c0_115 = arith.constant 0 : index
    %c0_116 = arith.constant 0 : index
    %278 = vector.load %arg24[%c0_115, %c0_116] : memref<56x1xf32, #tpu.memory_space<vmem>>, vector<56x1xf32>
    %c0_117 = arith.constant 0 : index
    %c0_118 = arith.constant 0 : index
    %279 = vector.load %arg25[%c0_117, %c0_118] : memref<1x1xf32, #tpu.memory_space<vmem>>, vector<1x1xf32>
    %cst_119 = arith.constant 0.000000e+00 : f32
    %280 = vector.broadcast %cst_119 : f32 to vector<8x64xf32>
    %281 = arith.cmpf oge, %277, %280 : vector<8x64xf32>
    %cst_120 = arith.constant 0.00999999977 : f32
    %282 = vector.broadcast %cst_120 : f32 to vector<8x64xf32>
    %283 = arith.mulf %282, %277 : vector<8x64xf32>
    %284 = arith.select %281, %277, %283 : vector<8x64xi1>, vector<8x64xf32>
    %cst_121 = arith.constant 0.000000e+00 : f32
    %285 = vector.broadcast %cst_121 : f32 to vector<8x3xf32>
    %cst_122 = arith.constant 0.000000e+00 : f32
    %286 = vector.broadcast %cst_122 : f32 to vector<8x3xf32>
    %287 = tpu.concatenate %285, %284, %286 in 1 : vector<8x3xf32>, vector<8x64xf32>, vector<8x3xf32> -> vector<8x70xf32>
    %288 = vector.extract_strided_slice %287 {offsets = [0, 0], sizes = [8, 64], strides = [1, 1]} : vector<8x70xf32> to vector<8x64xf32>
    %289 = vector.extract_strided_slice %287 {offsets = [0, 1], sizes = [8, 64], strides = [1, 1]} : vector<8x70xf32> to vector<8x64xf32>
    %290 = vector.extract_strided_slice %287 {offsets = [0, 2], sizes = [8, 64], strides = [1, 1]} : vector<8x70xf32> to vector<8x64xf32>
    %291 = vector.extract_strided_slice %287 {offsets = [0, 3], sizes = [8, 64], strides = [1, 1]} : vector<8x70xf32> to vector<8x64xf32>
    %292 = vector.extract_strided_slice %287 {offsets = [0, 4], sizes = [8, 64], strides = [1, 1]} : vector<8x70xf32> to vector<8x64xf32>
    %293 = vector.extract_strided_slice %287 {offsets = [0, 5], sizes = [8, 64], strides = [1, 1]} : vector<8x70xf32> to vector<8x64xf32>
    %294 = vector.extract_strided_slice %287 {offsets = [0, 6], sizes = [8, 64], strides = [1, 1]} : vector<8x70xf32> to vector<8x64xf32>
    %295 = tpu.concatenate %288, %289, %290, %291, %292, %293, %294 in 0 : vector<8x64xf32>, vector<8x64xf32>, vector<8x64xf32>, vector<8x64xf32>, vector<8x64xf32>, vector<8x64xf32>, vector<8x64xf32> -> vector<56x64xf32>
    %296 = vector.broadcast %278 : vector<56x1xf32> to vector<56x64xf32>
    %297 = arith.mulf %296, %295 : vector<56x64xf32>
    %cst_123 = arith.constant dense<0.000000e+00> : vector<64xf32>
    %298 = vector.multi_reduction <add>, %297, %cst_123 [0] : vector<56x64xf32> to vector<64xf32>
    %299 = vector.shape_cast %298 : vector<64xf32> to vector<1x64xf32>
    %300 = vector.broadcast %279 : vector<1x1xf32> to vector<1x64xf32>
    %301 = arith.addf %299, %300 : vector<1x64xf32>
    %302 = math.tanh %301 : vector<1x64xf32>
    %c0_124 = arith.constant 0 : index
    %c0_125 = arith.constant 0 : index
    %c0_126 = arith.constant 0 : index
    %303 = vector.load %arg26[%c0_124, %c0_125, %c0_126] : memref<1x1x64xf32, #tpu.memory_space<vmem>>, vector<1x1x64xf32>
    %304 = vector.shape_cast %303 : vector<1x1x64xf32> to vector<1x64xf32>
    %305 = vector.shape_cast %302 : vector<1x64xf32> to vector<1x1x64xf32>
    tpu.vector_store %arg26[%c0_124, %c0_125, %c0_126], %305 {strides = array<i32>} : memref<1x1x64xf32, #tpu.memory_space<vmem>>, vector<1x1x64xf32>,
    return
  }
  func.func @transform_0(%arg0: i32) -> (i32, i32, i32) {
    %c0_i32 = arith.constant 0 : i32
    %c0_i32_0 = arith.constant 0 : i32
    %c0_i32_1 = arith.constant 0 : i32
    return %arg0, %c0_i32, %c0_i32_0 : i32, i32, i32
  }
  func.func @transform_1(%arg0: i32) -> (i32, i32) {
    %c0_i32 = arith.constant 0 : i32
    %c0_i32_0 = arith.constant 0 : i32
    %c0_i32_1 = arith.constant 0 : i32
    return %c0_i32, %c0_i32_0 : i32, i32
  }
  func.func @transform_2(%arg0: i32) -> (i32, i32) {
    %c0_i32 = arith.constant 0 : i32
    %c0_i32_0 = arith.constant 0 : i32
    %c0_i32_1 = arith.constant 0 : i32
    return %c0_i32, %c0_i32_0 : i32, i32
  }
  func.func @transform_3(%arg0: i32) -> (i32, i32, i32) {
    %c0_i32 = arith.constant 0 : i32
    %c0_i32_0 = arith.constant 0 : i32
    %c0_i32_1 = arith.constant 0 : i32
    %c0_i32_2 = arith.constant 0 : i32
    return %c0_i32, %c0_i32_0, %c0_i32_1 : i32, i32, i32
  }
  func.func @transform_4(%arg0: i32) -> (i32, i32) {
    %c0_i32 = arith.constant 0 : i32
    %c0_i32_0 = arith.constant 0 : i32
    %c0_i32_1 = arith.constant 0 : i32
    return %c0_i32, %c0_i32_0 : i32, i32
  }
  func.func @transform_5(%arg0: i32) -> (i32, i32) {
    %c0_i32 = arith.constant 0 : i32
    %c0_i32_0 = arith.constant 0 : i32
    %c0_i32_1 = arith.constant 0 : i32
    return %c0_i32, %c0_i32_0 : i32, i32
  }
  func.func @transform_6(%arg0: i32) -> (i32, i32) {
    %c0_i32 = arith.constant 0 : i32
    %c0_i32_0 = arith.constant 0 : i32
    %c0_i32_1 = arith.constant 0 : i32
    return %c0_i32, %c0_i32_0 : i32, i32
  }
  func.func @transform_7(%arg0: i32) -> (i32, i32) {
    %c0_i32 = arith.constant 0 : i32
    %c0_i32_0 = arith.constant 0 : i32
    %c0_i32_1 = arith.constant 0 : i32
    return %c0_i32, %c0_i32_0 : i32, i32
  }
  func.func @transform_8(%arg0: i32) -> (i32, i32) {
    %c0_i32 = arith.constant 0 : i32
    %c0_i32_0 = arith.constant 0 : i32
    %c0_i32_1 = arith.constant 0 : i32
    return %c0_i32, %c0_i32_0 : i32, i32
  }
  func.func @transform_9(%arg0: i32) -> (i32, i32) {
    %c0_i32 = arith.constant 0 : i32
    %c0_i32_0 = arith.constant 0 : i32
    %c0_i32_1 = arith.constant 0 : i32
    return %c0_i32, %c0_i32_0 : i32, i32
  }
  func.func @transform_10(%arg0: i32) -> (i32, i32) {
    %c0_i32 = arith.constant 0 : i32
    %c0_i32_0 = arith.constant 0 : i32
    %c0_i32_1 = arith.constant 0 : i32
    return %c0_i32, %c0_i32_0 : i32, i32
  }
  func.func @transform_11(%arg0: i32) -> (i32, i32) {
    %c0_i32 = arith.constant 0 : i32
    %c0_i32_0 = arith.constant 0 : i32
    %c0_i32_1 = arith.constant 0 : i32
    return %c0_i32, %c0_i32_0 : i32, i32
  }
  func.func @transform_12(%arg0: i32) -> (i32, i32) {
    %c0_i32 = arith.constant 0 : i32
    %c0_i32_0 = arith.constant 0 : i32
    %c0_i32_1 = arith.constant 0 : i32
    return %c0_i32, %c0_i32_0 : i32, i32
  }
  func.func @transform_13(%arg0: i32) -> (i32, i32, i32) {
    %c0_i32 = arith.constant 0 : i32
    %c0_i32_0 = arith.constant 0 : i32
    %c0_i32_1 = arith.constant 0 : i32
    %c0_i32_2 = arith.constant 0 : i32
    return %c0_i32, %c0_i32_0, %c0_i32_1 : i32, i32, i32
  }
  func.func @transform_14(%arg0: i32) -> (i32, i32) {
    %c0_i32 = arith.constant 0 : i32
    %c0_i32_0 = arith.constant 0 : i32
    %c0_i32_1 = arith.constant 0 : i32
    return %c0_i32, %c0_i32_0 : i32, i32
  }
  func.func @transform_15(%arg0: i32) -> (i32, i32) {
    %c0_i32 = arith.constant 0 : i32
    %c0_i32_0 = arith.constant 0 : i32
    %c0_i32_1 = arith.constant 0 : i32
    return %c0_i32, %c0_i32_0 : i32, i32
  }
  func.func @transform_16(%arg0: i32) -> (i32, i32) {
    %c0_i32 = arith.constant 0 : i32
    %c0_i32_0 = arith.constant 0 : i32
    %c0_i32_1 = arith.constant 0 : i32
    return %c0_i32, %c0_i32_0 : i32, i32
  }
  func.func @transform_17(%arg0: i32) -> (i32, i32) {
    %c0_i32 = arith.constant 0 : i32
    %c0_i32_0 = arith.constant 0 : i32
    %c0_i32_1 = arith.constant 0 : i32
    return %c0_i32, %c0_i32_0 : i32, i32
  }
  func.func @transform_18(%arg0: i32) -> (i32, i32) {
    %c0_i32 = arith.constant 0 : i32
    %c0_i32_0 = arith.constant 0 : i32
    %c0_i32_1 = arith.constant 0 : i32
    return %c0_i32, %c0_i32_0 : i32, i32
  }
  func.func @transform_19(%arg0: i32) -> (i32, i32) {
    %c0_i32 = arith.constant 0 : i32
    %c0_i32_0 = arith.constant 0 : i32
    %c0_i32_1 = arith.constant 0 : i32
    return %c0_i32, %c0_i32_0 : i32, i32
  }
  func.func @transform_20(%arg0: i32) -> (i32, i32) {
    %c0_i32 = arith.constant 0 : i32
    %c0_i32_0 = arith.constant 0 : i32
    %c0_i32_1 = arith.constant 0 : i32
    return %c0_i32, %c0_i32_0 : i32, i32
  }
  func.func @transform_21(%arg0: i32) -> (i32, i32) {
    %c0_i32 = arith.constant 0 : i32
    %c0_i32_0 = arith.constant 0 : i32
    %c0_i32_1 = arith.constant 0 : i32
    return %c0_i32, %c0_i32_0 : i32, i32
  }
  func.func @transform_22(%arg0: i32) -> (i32, i32) {
    %c0_i32 = arith.constant 0 : i32
    %c0_i32_0 = arith.constant 0 : i32
    %c0_i32_1 = arith.constant 0 : i32
    return %c0_i32, %c0_i32_0 : i32, i32
  }
  func.func @transform_23(%arg0: i32) -> (i32, i32) {
    %c0_i32 = arith.constant 0 : i32
    %c0_i32_0 = arith.constant 0 : i32
    %c0_i32_1 = arith.constant 0 : i32
    return %c0_i32, %c0_i32_0 : i32, i32
  }
  func.func @transform_24(%arg0: i32) -> (i32, i32) {
    %c0_i32 = arith.constant 0 : i32
    %c0_i32_0 = arith.constant 0 : i32
    %c0_i32_1 = arith.constant 0 : i32
    return %c0_i32, %c0_i32_0 : i32, i32
  }
  func.func @transform_25(%arg0: i32) -> (i32, i32, i32) {
    %c0_i32 = arith.constant 0 : i32
    %c0_i32_0 = arith.constant 0 : i32
    %c0_i32_1 = arith.constant 0 : i32
    return %arg0, %c0_i32, %c0_i32_0 : i32, i32, i32
  }
}

</mosaic_0001>

<llo_original>
// kernel: tpu_custom_call.1
$region0: #{tpu_custom_call.1}
  #allocation0 [shape = 'u32[]', space=smem, size = 0x4, offset = 0x4, fixed_abs, tag = 'smem constant byte address 0x4 - core index']
  #allocation1 [shape = 'u32[144,128]{1,0:T(1,128)}', space=vmem, size = 0x12000, scoped, tag = 'internal scratch']
  #allocation2 [shape = 'f32[1,1]{1,0:T(1,128)S(1)}', space=vmem, size = 0x200, scoped, tag = 'scoped memory for tpu_custom_call.1']
  %s0 = inlined_call_operand.vmem [shape: f32[2,80,16], index: 0, kind: input, shape index: {}]
  %s1 = inlined_call_operand.vmem [shape: f32[32,560], index: 1, kind: input, shape index: {}]
  %s2 = inlined_call_operand.vmem [shape: f32[32,1], index: 2, kind: input, shape index: {}]
  %s3 = inlined_call_operand.vmem [shape: f32[4,16,32], index: 3, kind: input, shape index: {}]
  %s4 = inlined_call_operand.vmem [shape: f32[16,1], index: 4, kind: input, shape index: {}]
  %s5 = inlined_call_operand.vmem [shape: f32[16,48], index: 5, kind: input, shape index: {}]
  %s6 = inlined_call_operand.vmem [shape: f32[16,1], index: 6, kind: input, shape index: {}]
  %s7 = inlined_call_operand.vmem [shape: f32[16,48], index: 7, kind: input, shape index: {}]
  %s8 = inlined_call_operand.vmem [shape: f32[16,1], index: 8, kind: input, shape index: {}]
  %s9 = inlined_call_operand.vmem [shape: f32[16,80], index: 9, kind: input, shape index: {}]
  %s10 = inlined_call_operand.vmem [shape: f32[16,1], index: 10, kind: input, shape index: {}]
  %s11 = inlined_call_operand.vmem [shape: f32[16,80], index: 11, kind: input, shape index: {}]
  %s12 = inlined_call_operand.vmem [shape: f32[16,1], index: 12, kind: input, shape index: {}]
  %s13 = inlined_call_operand.vmem [shape: f32[4,8,16], index: 13, kind: input, shape index: {}]
  %s14 = inlined_call_operand.vmem [shape: f32[8,1], index: 14, kind: input, shape index: {}]
  %s15 = inlined_call_operand.vmem [shape: f32[8,24], index: 15, kind: input, shape index: {}]
  %s16 = inlined_call_operand.vmem [shape: f32[8,1], index: 16, kind: input, shape index: {}]
  %s17 = inlined_call_operand.vmem [shape: f32[8,24], index: 17, kind: input, shape index: {}]
  %s18 = inlined_call_operand.vmem [shape: f32[8,1], index: 18, kind: input, shape index: {}]
  %s19 = inlined_call_operand.vmem [shape: f32[8,40], index: 19, kind: input, shape index: {}]
  %s20 = inlined_call_operand.vmem [shape: f32[8,1], index: 20, kind: input, shape index: {}]
  %s21 = inlined_call_operand.vmem [shape: f32[8,40], index: 21, kind: input, shape index: {}]
  %s22 = inlined_call_operand.vmem [shape: f32[8,1], index: 22, kind: input, shape index: {}]
  %s23 = inlined_call_operand.vmem [shape: f32[56,1], index: 23, kind: input, shape index: {}]
  %s24 = inlined_call_operand.<no memory space> [shape: f32[1,1], index: 24, kind: input, shape index: {}]
  %s25 = inlined_call_operand.hbm [shape: f32[2,1,64], index: 25, kind: output, shape index: {}]
  %s26 = sld [smem:[#allocation0]]
  $region133: #{tpu_custom_call.1} parent=0
    _
  %s28 = ssub.s32 1, %s26
  %s29 = scalar_select 0, %s28, %s26
  %v30 = vstv %s24
  %31 = vst [vmem:[#allocation2] sm:$0x1] %v30
  $region1: #{tpu_custom_call.1} parent=0
    #allocation3 [shape = 'u8[1024]{0}', space=vmem, size = 0x400, scoped, tag = 'output window, operand 0']
    #allocation4 [shape = 's32[2]{0}', space=sflag, size = 0x8, scoped, tag = 'scoped memory for tpu_custom_call.1']
    %32 = vsyncpa [#allocation4], 0
    %s33 = scalar_lea.sflag [#allocation4], 1
    %34 = vsyncpa %s33, 0
    loop: start=0, step=1, limit=4
    $region2: #{tpu_custom_call.1} parent=1 // loop_pre_header
      _
    $region3: #{tpu_custom_call.1} parent=1 // loop_header
      %s36 = sphi 0, %s40
      %p37 = scmp.ge.s32.totalorder %s36, 4
      %s46 = sphi 0, %s48
      %s49 = sphi 0, %s46
      %s50 = sphi 0, %s49
      %s66 = sphi 0, %s50
      %s70 = sphi 0, %s70
      %s72 = sphi 0, %s70
      %s73 = sphi 0, %s72
      %s87 = sphi 0, %s73
      %s91 = sphi 0, %s91
      %s93 = sphi 0, %s91
      %s94 = sphi 0, %s93
      %s108 = sphi 0, %s94
      %s112 = sphi 0, %s112
      %s114 = sphi 0, %s112
      %s115 = sphi 0, %s114
      %s129 = sphi 0, %s115
      %s133 = sphi 0, %s133
      %s135 = sphi 0, %s133
      %s136 = sphi 0, %s135
      %s150 = sphi 0, %s136
      %s154 = sphi 0, %s154
      %s156 = sphi 0, %s154
      %s157 = sphi 0, %s156
      %s171 = sphi 0, %s157
      %s175 = sphi 0, %s175
      %s177 = sphi 0, %s175
      %s178 = sphi 0, %s177
      %s192 = sphi 0, %s178
      %s196 = sphi 0, %s196
      %s198 = sphi 0, %s196
      %s199 = sphi 0, %s198
      %s213 = sphi 0, %s199
      %s217 = sphi 0, %s217
      %s219 = sphi 0, %s217
      %s220 = sphi 0, %s219
      %s234 = sphi 0, %s220
      %s238 = sphi 0, %s238
      %s240 = sphi 0, %s238
      %s241 = sphi 0, %s240
      %s255 = sphi 0, %s241
      %s259 = sphi 0, %s259
      %s261 = sphi 0, %s259
      %s262 = sphi 0, %s261
      %s276 = sphi 0, %s262
      %s280 = sphi 0, %s280
      %s282 = sphi 0, %s280
      %s283 = sphi 0, %s282
      %s297 = sphi 0, %s283
      %s301 = sphi 0, %s301
      %s303 = sphi 0, %s301
      %s304 = sphi 0, %s303
      %s318 = sphi 0, %s304
      %s322 = sphi 0, %s322
      %s324 = sphi 0, %s322
      %s325 = sphi 0, %s324
      %s339 = sphi 0, %s325
      %s343 = sphi 0, %s343
      %s345 = sphi 0, %s343
      %s346 = sphi 0, %s345
      %s360 = sphi 0, %s346
      %s364 = sphi 0, %s364
      %s366 = sphi 0, %s364
      %s367 = sphi 0, %s366
      %s381 = sphi 0, %s367
      %s385 = sphi 0, %s385
      %s387 = sphi 0, %s385
      %s388 = sphi 0, %s387
      %s402 = sphi 0, %s388
      %s406 = sphi 0, %s406
      %s408 = sphi 0, %s406
      %s409 = sphi 0, %s408
      %s423 = sphi 0, %s409
      %s427 = sphi 0, %s427
      %s429 = sphi 0, %s427
      %s430 = sphi 0, %s429
      %s444 = sphi 0, %s430
      %s448 = sphi 0, %s448
      %s450 = sphi 0, %s448
      %s451 = sphi 0, %s450
      %s465 = sphi 0, %s451
      %s469 = sphi 0, %s469
      %s471 = sphi 0, %s469
      %s472 = sphi 0, %s471
      %s486 = sphi 0, %s472
      %s490 = sphi 0, %s490
      %s492 = sphi 0, %s490
      %s493 = sphi 0, %s492
      %s507 = sphi 0, %s493
      %s511 = sphi 0, %s511
      %s513 = sphi 0, %s511
      %s514 = sphi 0, %s513
      %s528 = sphi 0, %s514
      %s532 = sphi 0, %s532
      %s534 = sphi 0, %s532
      %s535 = sphi 0, %s534
      %s549 = sphi 0, %s535
      %s553 = sphi 0, %s553
      %s555 = sphi 0, %s553
      %s556 = sphi 0, %s555
      %s570 = sphi 0, %s556
      %s576 = sphi 0, %s578
      %s579 = sphi 0, %s576
      %s580 = sphi 0, %s579
      %s596 = sphi 0, %s580
    $region4: #{tpu_custom_call.1} parent=1 // loop_header_branch
      %39 = sbr.rel (%p37) target = $region8
    $region5: #{tpu_custom_call.1} parent=1 // loop_body
      %s41 = ssub.s32 %s36, 1
      %s42 = ssub.s32 %s36, 2
      %s43 = sadd.s32 %s36, 1
      %s44 = ssub.s32 %s36, %s43
      %p45 = scmp.eq.s32.totalorder %s44, 0
      %s47 = sadd.s32 %s46, 1
      %s48 = scalar_select %p45, %s46, %s47
      %p51 = pneg %p45
      %p52 = scmp.eq.s32.totalorder %s36, 1
      %p53 = por %p51, %p52
      %p54 = scmp.ne.s32.totalorder %s46, %s49
      %p55 = scmp.eq.s32.totalorder %s36, 0
      %p56 = por %p54, %p55
      %p57 = scmp.ne.s32.totalorder %s46, %s49
      %p58 = scmp.eq.s32.totalorder %s41, 1
      %p59 = por %p57, %p58
      %p60 = scmp.ne.s32.totalorder %s49, %s50
      %p61 = scmp.eq.s32.totalorder %s41, 0
      %p62 = por %p60, %p61
      %p63 = scmp.ne.s32.totalorder %s49, %s50
      %p64 = scmp.eq.s32.totalorder %s42, 1
      %p65 = por %p63, %p64
      %p67 = scmp.ne.s32.totalorder %s50, %s66
      %p68 = scmp.eq.s32.totalorder %s42, 0
      %p69 = por %p67, %p68
      %s71 = sadd.s32 %s70, 1
      %p74 = scmp.eq.s32.totalorder %s36, 1
      %p75 = scmp.ne.s32.totalorder %s70, %s72
      %p76 = scmp.eq.s32.totalorder %s36, 0
      %p77 = por %p75, %p76
      %p78 = scmp.ne.s32.totalorder %s70, %s72
      %p79 = scmp.eq.s32.totalorder %s41, 1
      %p80 = por %p78, %p79
      %p81 = scmp.ne.s32.totalorder %s72, %s73
      %p82 = scmp.eq.s32.totalorder %s41, 0
      %p83 = por %p81, %p82
      %p84 = scmp.ne.s32.totalorder %s72, %s73
      %p85 = scmp.eq.s32.totalorder %s42, 1
      %p86 = por %p84, %p85
      %p88 = scmp.ne.s32.totalorder %s73, %s87
      %p89 = scmp.eq.s32.totalorder %s42, 0
      %p90 = por %p88, %p89
      %s92 = sadd.s32 %s91, 1
      %p95 = scmp.eq.s32.totalorder %s36, 1
      %p96 = scmp.ne.s32.totalorder %s91, %s93
      %p97 = scmp.eq.s32.totalorder %s36, 0
      %p98 = por %p96, %p97
      %p99 = scmp.ne.s32.totalorder %s91, %s93
      %p100 = scmp.eq.s32.totalorder %s41, 1
      %p101 = por %p99, %p100
      %p102 = scmp.ne.s32.totalorder %s93, %s94
      %p103 = scmp.eq.s32.totalorder %s41, 0
      %p104 = por %p102, %p103
      %p105 = scmp.ne.s32.totalorder %s93, %s94
      %p106 = scmp.eq.s32.totalorder %s42, 1
      %p107 = por %p105, %p106
      %p109 = scmp.ne.s32.totalorder %s94, %s108
      %p110 = scmp.eq.s32.totalorder %s42, 0
      %p111 = por %p109, %p110
      %s113 = sadd.s32 %s112, 1
      %p116 = scmp.eq.s32.totalorder %s36, 1
      %p117 = scmp.ne.s32.totalorder %s112, %s114
      %p118 = scmp.eq.s32.totalorder %s36, 0
      %p119 = por %p117, %p118
      %p120 = scmp.ne.s32.totalorder %s112, %s114
      %p121 = scmp.eq.s32.totalorder %s41, 1
      %p122 = por %p120, %p121
      %p123 = scmp.ne.s32.totalorder %s114, %s115
      %p124 = scmp.eq.s32.totalorder %s41, 0
      %p125 = por %p123, %p124
      %p126 = scmp.ne.s32.totalorder %s114, %s115
      %p127 = scmp.eq.s32.totalorder %s42, 1
      %p128 = por %p126, %p127
      %p130 = scmp.ne.s32.totalorder %s115, %s129
      %p131 = scmp.eq.s32.totalorder %s42, 0
      %p132 = por %p130, %p131
      %s134 = sadd.s32 %s133, 1
      %p137 = scmp.eq.s32.totalorder %s36, 1
      %p138 = scmp.ne.s32.totalorder %s133, %s135
      %p139 = scmp.eq.s32.totalorder %s36, 0
      %p140 = por %p138, %p139
      %p141 = scmp.ne.s32.totalorder %s133, %s135
      %p142 = scmp.eq.s32.totalorder %s41, 1
      %p143 = por %p141, %p142
      %p144 = scmp.ne.s32.totalorder %s135, %s136
      %p145 = scmp.eq.s32.totalorder %s41, 0
      %p146 = por %p144, %p145
      %p147 = scmp.ne.s32.totalorder %s135, %s136
      %p148 = scmp.eq.s32.totalorder %s42, 1
      %p149 = por %p147, %p148
      %p151 = scmp.ne.s32.totalorder %s136, %s150
      %p152 = scmp.eq.s32.totalorder %s42, 0
      %p153 = por %p151, %p152
      %s155 = sadd.s32 %s154, 1
      %p158 = scmp.eq.s32.totalorder %s36, 1
      %p159 = scmp.ne.s32.totalorder %s154, %s156
      %p160 = scmp.eq.s32.totalorder %s36, 0
      %p161 = por %p159, %p160
      %p162 = scmp.ne.s32.totalorder %s154, %s156
      %p163 = scmp.eq.s32.totalorder %s41, 1
      %p164 = por %p162, %p163
      %p165 = scmp.ne.s32.totalorder %s156, %s157
      %p166 = scmp.eq.s32.totalorder %s41, 0
      %p167 = por %p165, %p166
      %p168 = scmp.ne.s32.totalorder %s156, %s157
      %p169 = scmp.eq.s32.totalorder %s42, 1
      %p170 = por %p168, %p169
      %p172 = scmp.ne.s32.totalorder %s157, %s171
      %p173 = scmp.eq.s32.totalorder %s42, 0
      %p174 = por %p172, %p173
      %s176 = sadd.s32 %s175, 1
      %p179 = scmp.eq.s32.totalorder %s36, 1
      %p180 = scmp.ne.s32.totalorder %s175, %s177
      %p181 = scmp.eq.s32.totalorder %s36, 0
      %p182 = por %p180, %p181
      %p183 = scmp.ne.s32.totalorder %s175, %s177
      %p184 = scmp.eq.s32.totalorder %s41, 1
      %p185 = por %p183, %p184
      %p186 = scmp.ne.s32.totalorder %s177, %s178
      %p187 = scmp.eq.s32.totalorder %s41, 0
      %p188 = por %p186, %p187
      %p189 = scmp.ne.s32.totalorder %s177, %s178
      %p190 = scmp.eq.s32.totalorder %s42, 1
      %p191 = por %p189, %p190
      %p193 = scmp.ne.s32.totalorder %s178, %s192
      %p194 = scmp.eq.s32.totalorder %s42, 0
      %p195 = por %p193, %p194
      %s197 = sadd.s32 %s196, 1
      %p200 = scmp.eq.s32.totalorder %s36, 1
      %p201 = scmp.ne.s32.totalorder %s196, %s198
      %p202 = scmp.eq.s32.totalorder %s36, 0
      %p203 = por %p201, %p202
      %p204 = scmp.ne.s32.totalorder %s196, %s198
      %p205 = scmp.eq.s32.totalorder %s41, 1
      %p206 = por %p204, %p205
      %p207 = scmp.ne.s32.totalorder %s198, %s199
      %p208 = scmp.eq.s32.totalorder %s41, 0
      %p209 = por %p207, %p208
      %p210 = scmp.ne.s32.totalorder %s198, %s199
      %p211 = scmp.eq.s32.totalorder %s42, 1
      %p212 = por %p210, %p211
      %p214 = scmp.ne.s32.totalorder %s199, %s213
      %p215 = scmp.eq.s32.totalorder %s42, 0
      %p216 = por %p214, %p215
      %s218 = sadd.s32 %s217, 1
      %p221 = scmp.eq.s32.totalorder %s36, 1
      %p222 = scmp.ne.s32.totalorder %s217, %s219
      %p223 = scmp.eq.s32.totalorder %s36, 0
      %p224 = por %p222, %p223
      %p225 = scmp.ne.s32.totalorder %s217, %s219
      %p226 = scmp.eq.s32.totalorder %s41, 1
      %p227 = por %p225, %p226
      %p228 = scmp.ne.s32.totalorder %s219, %s220
      %p229 = scmp.eq.s32.totalorder %s41, 0
      %p230 = por %p228, %p229
      %p231 = scmp.ne.s32.totalorder %s219, %s220
      %p232 = scmp.eq.s32.totalorder %s42, 1
      %p233 = por %p231, %p232
      %p235 = scmp.ne.s32.totalorder %s220, %s234
      %p236 = scmp.eq.s32.totalorder %s42, 0
      %p237 = por %p235, %p236
      %s239 = sadd.s32 %s238, 1
      %p242 = scmp.eq.s32.totalorder %s36, 1
      %p243 = scmp.ne.s32.totalorder %s238, %s240
      %p244 = scmp.eq.s32.totalorder %s36, 0
      %p245 = por %p243, %p244
      %p246 = scmp.ne.s32.totalorder %s238, %s240
      %p247 = scmp.eq.s32.totalorder %s41, 1
      %p248 = por %p246, %p247
      %p249 = scmp.ne.s32.totalorder %s240, %s241
      %p250 = scmp.eq.s32.totalorder %s41, 0
      %p251 = por %p249, %p250
      %p252 = scmp.ne.s32.totalorder %s240, %s241
      %p253 = scmp.eq.s32.totalorder %s42, 1
      %p254 = por %p252, %p253
      %p256 = scmp.ne.s32.totalorder %s241, %s255
      %p257 = scmp.eq.s32.totalorder %s42, 0
      %p258 = por %p256, %p257
      %s260 = sadd.s32 %s259, 1
      %p263 = scmp.eq.s32.totalorder %s36, 1
      %p264 = scmp.ne.s32.totalorder %s259, %s261
      %p265 = scmp.eq.s32.totalorder %s36, 0
      %p266 = por %p264, %p265
      %p267 = scmp.ne.s32.totalorder %s259, %s261
      %p268 = scmp.eq.s32.totalorder %s41, 1
      %p269 = por %p267, %p268
      %p270 = scmp.ne.s32.totalorder %s261, %s262
      %p271 = scmp.eq.s32.totalorder %s41, 0
      %p272 = por %p270, %p271
      %p273 = scmp.ne.s32.totalorder %s261, %s262
      %p274 = scmp.eq.s32.totalorder %s42, 1
      %p275 = por %p273, %p274
      %p277 = scmp.ne.s32.totalorder %s262, %s276
      %p278 = scmp.eq.s32.totalorder %s42, 0
      %p279 = por %p277, %p278
      %s281 = sadd.s32 %s280, 1
      %p284 = scmp.eq.s32.totalorder %s36, 1
      %p285 = scmp.ne.s32.totalorder %s280, %s282
      %p286 = scmp.eq.s32.totalorder %s36, 0
      %p287 = por %p285, %p286
      %p288 = scmp.ne.s32.totalorder %s280, %s282
      %p289 = scmp.eq.s32.totalorder %s41, 1
      %p290 = por %p288, %p289
      %p291 = scmp.ne.s32.totalorder %s282, %s283
      %p292 = scmp.eq.s32.totalorder %s41, 0
      %p293 = por %p291, %p292
      %p294 = scmp.ne.s32.totalorder %s282, %s283
      %p295 = scmp.eq.s32.totalorder %s42, 1
      %p296 = por %p294, %p295
      %p298 = scmp.ne.s32.totalorder %s283, %s297
      %p299 = scmp.eq.s32.totalorder %s42, 0
      %p300 = por %p298, %p299
      %s302 = sadd.s32 %s301, 1
      %p305 = scmp.eq.s32.totalorder %s36, 1
      %p306 = scmp.ne.s32.totalorder %s301, %s303
      %p307 = scmp.eq.s32.totalorder %s36, 0
      %p308 = por %p306, %p307
      %p309 = scmp.ne.s32.totalorder %s301, %s303
      %p310 = scmp.eq.s32.totalorder %s41, 1
      %p311 = por %p309, %p310
      %p312 = scmp.ne.s32.totalorder %s303, %s304
      %p313 = scmp.eq.s32.totalorder %s41, 0
      %p314 = por %p312, %p313
      %p315 = scmp.ne.s32.totalorder %s303, %s304
      %p316 = scmp.eq.s32.totalorder %s42, 1
      %p317 = por %p315, %p316
      %p319 = scmp.ne.s32.totalorder %s304, %s318
      %p320 = scmp.eq.s32.totalorder %s42, 0
      %p321 = por %p319, %p320
      %s323 = sadd.s32 %s322, 1
      %p326 = scmp.eq.s32.totalorder %s36, 1
      %p327 = scmp.ne.s32.totalorder %s322, %s324
      %p328 = scmp.eq.s32.totalorder %s36, 0
      %p329 = por %p327, %p328
      %p330 = scmp.ne.s32.totalorder %s322, %s324
      %p331 = scmp.eq.s32.totalorder %s41, 1
      %p332 = por %p330, %p331
      %p333 = scmp.ne.s32.totalorder %s324, %s325
      %p334 = scmp.eq.s32.totalorder %s41, 0
      %p335 = por %p333, %p334
      %p336 = scmp.ne.s32.totalorder %s324, %s325
      %p337 = scmp.eq.s32.totalorder %s42, 1
      %p338 = por %p336, %p337
      %p340 = scmp.ne.s32.totalorder %s325, %s339
      %p341 = scmp.eq.s32.totalorder %s42, 0
      %p342 = por %p340, %p341
      %s344 = sadd.s32 %s343, 1
      %p347 = scmp.eq.s32.totalorder %s36, 1
      %p348 = scmp.ne.s32.totalorder %s343, %s345
      %p349 = scmp.eq.s32.totalorder %s36, 0
      %p350 = por %p348, %p349
      %p351 = scmp.ne.s32.totalorder %s343, %s345
      %p352 = scmp.eq.s32.totalorder %s41, 1
      %p353 = por %p351, %p352
      %p354 = scmp.ne.s32.totalorder %s345, %s346
      %p355 = scmp.eq.s32.totalorder %s41, 0
      %p356 = por %p354, %p355
      %p357 = scmp.ne.s32.totalorder %s345, %s346
      %p358 = scmp.eq.s32.totalorder %s42, 1
      %p359 = por %p357, %p358
      %p361 = scmp.ne.s32.totalorder %s346, %s360
      %p362 = scmp.eq.s32.totalorder %s42, 0
      %p363 = por %p361, %p362
      %s365 = sadd.s32 %s364, 1
      %p368 = scmp.eq.s32.totalorder %s36, 1
      %p369 = scmp.ne.s32.totalorder %s364, %s366
      %p370 = scmp.eq.s32.totalorder %s36, 0
      %p371 = por %p369, %p370
      %p372 = scmp.ne.s32.totalorder %s364, %s366
      %p373 = scmp.eq.s32.totalorder %s41, 1
      %p374 = por %p372, %p373
      %p375 = scmp.ne.s32.totalorder %s366, %s367
      %p376 = scmp.eq.s32.totalorder %s41, 0
      %p377 = por %p375, %p376
      %p378 = scmp.ne.s32.totalorder %s366, %s367
      %p379 = scmp.eq.s32.totalorder %s42, 1
      %p380 = por %p378, %p379
      %p382 = scmp.ne.s32.totalorder %s367, %s381
      %p383 = scmp.eq.s32.totalorder %s42, 0
      %p384 = por %p382, %p383
      %s386 = sadd.s32 %s385, 1
      %p389 = scmp.eq.s32.totalorder %s36, 1
      %p390 = scmp.ne.s32.totalorder %s385, %s387
      %p391 = scmp.eq.s32.totalorder %s36, 0
      %p392 = por %p390, %p391
      %p393 = scmp.ne.s32.totalorder %s385, %s387
      %p394 = scmp.eq.s32.totalorder %s41, 1
      %p395 = por %p393, %p394
      %p396 = scmp.ne.s32.totalorder %s387, %s388
      %p397 = scmp.eq.s32.totalorder %s41, 0
      %p398 = por %p396, %p397
      %p399 = scmp.ne.s32.totalorder %s387, %s388
      %p400 = scmp.eq.s32.totalorder %s42, 1
      %p401 = por %p399, %p400
      %p403 = scmp.ne.s32.totalorder %s388, %s402
      %p404 = scmp.eq.s32.totalorder %s42, 0
      %p405 = por %p403, %p404
      %s407 = sadd.s32 %s406, 1
      %p410 = scmp.eq.s32.totalorder %s36, 1
      %p411 = scmp.ne.s32.totalorder %s406, %s408
      %p412 = scmp.eq.s32.totalorder %s36, 0
      %p413 = por %p411, %p412
      %p414 = scmp.ne.s32.totalorder %s406, %s408
      %p415 = scmp.eq.s32.totalorder %s41, 1
      %p416 = por %p414, %p415
      %p417 = scmp.ne.s32.totalorder %s408, %s409
      %p418 = scmp.eq.s32.totalorder %s41, 0
      %p419 = por %p417, %p418
      %p420 = scmp.ne.s32.totalorder %s408, %s409
      %p421 = scmp.eq.s32.totalorder %s42, 1
      %p422 = por %p420, %p421
      %p424 = scmp.ne.s32.totalorder %s409, %s423
      %p425 = scmp.eq.s32.totalorder %s42, 0
      %p426 = por %p424, %p425
      %s428 = sadd.s32 %s427, 1
      %p431 = scmp.eq.s32.totalorder %s36, 1
      %p432 = scmp.ne.s32.totalorder %s427, %s429
      %p433 = scmp.eq.s32.totalorder %s36, 0
      %p434 = por %p432, %p433
      %p435 = scmp.ne.s32.totalorder %s427, %s429
      %p436 = scmp.eq.s32.totalorder %s41, 1
      %p437 = por %p435, %p436
      %p438 = scmp.ne.s32.totalorder %s429, %s430
      %p439 = scmp.eq.s32.totalorder %s41, 0
      %p440 = por %p438, %p439
      %p441 = scmp.ne.s32.totalorder %s429, %s430
      %p442 = scmp.eq.s32.totalorder %s42, 1
      %p443 = por %p441, %p442
      %p445 = scmp.ne.s32.totalorder %s430, %s444
      %p446 = scmp.eq.s32.totalorder %s42, 0
      %p447 = por %p445, %p446
      %s449 = sadd.s32 %s448, 1
      %p452 = scmp.eq.s32.totalorder %s36, 1
      %p453 = scmp.ne.s32.totalorder %s448, %s450
      %p454 = scmp.eq.s32.totalorder %s36, 0
      %p455 = por %p453, %p454
      %p456 = scmp.ne.s32.totalorder %s448, %s450
      %p457 = scmp.eq.s32.totalorder %s41, 1
      %p458 = por %p456, %p457
      %p459 = scmp.ne.s32.totalorder %s450, %s451
      %p460 = scmp.eq.s32.totalorder %s41, 0
      %p461 = por %p459, %p460
      %p462 = scmp.ne.s32.totalorder %s450, %s451
      %p463 = scmp.eq.s32.totalorder %s42, 1
      %p464 = por %p462, %p463
      %p466 = scmp.ne.s32.totalorder %s451, %s465
      %p467 = scmp.eq.s32.totalorder %s42, 0
      %p468 = por %p466, %p467
      %s470 = sadd.s32 %s469, 1
      %p473 = scmp.eq.s32.totalorder %s36, 1
      %p474 = scmp.ne.s32.totalorder %s469, %s471
      %p475 = scmp.eq.s32.totalorder %s36, 0
      %p476 = por %p474, %p475
      %p477 = scmp.ne.s32.totalorder %s469, %s471
      %p478 = scmp.eq.s32.totalorder %s41, 1
      %p479 = por %p477, %p478
      %p480 = scmp.ne.s32.totalorder %s471, %s472
      %p481 = scmp.eq.s32.totalorder %s41, 0
      %p482 = por %p480, %p481
      %p483 = scmp.ne.s32.totalorder %s471, %s472
      %p484 = scmp.eq.s32.totalorder %s42, 1
      %p485 = por %p483, %p484
      %p487 = scmp.ne.s32.totalorder %s472, %s486
      %p488 = scmp.eq.s32.totalorder %s42, 0
      %p489 = por %p487, %p488
      %s491 = sadd.s32 %s490, 1
      %p494 = scmp.eq.s32.totalorder %s36, 1
      %p495 = scmp.ne.s32.totalorder %s490, %s492
      %p496 = scmp.eq.s32.totalorder %s36, 0
      %p497 = por %p495, %p496
      %p498 = scmp.ne.s32.totalorder %s490, %s492
      %p499 = scmp.eq.s32.totalorder %s41, 1
      %p500 = por %p498, %p499
      %p501 = scmp.ne.s32.totalorder %s492, %s493
      %p502 = scmp.eq.s32.totalorder %s41, 0
      %p503 = por %p501, %p502
      %p504 = scmp.ne.s32.totalorder %s492, %s493
      %p505 = scmp.eq.s32.totalorder %s42, 1
      %p506 = por %p504, %p505
      %p508 = scmp.ne.s32.totalorder %s493, %s507
      %p509 = scmp.eq.s32.totalorder %s42, 0
      %p510 = por %p508, %p509
      %s512 = sadd.s32 %s511, 1
      %p515 = scmp.eq.s32.totalorder %s36, 1
      %p516 = scmp.ne.s32.totalorder %s511, %s513
      %p517 = scmp.eq.s32.totalorder %s36, 0
      %p518 = por %p516, %p517
      %p519 = scmp.ne.s32.totalorder %s511, %s513
      %p520 = scmp.eq.s32.totalorder %s41, 1
      %p521 = por %p519, %p520
      %p522 = scmp.ne.s32.totalorder %s513, %s514
      %p523 = scmp.eq.s32.totalorder %s41, 0
      %p524 = por %p522, %p523
      %p525 = scmp.ne.s32.totalorder %s513, %s514
      %p526 = scmp.eq.s32.totalorder %s42, 1
      %p527 = por %p525, %p526
      %p529 = scmp.ne.s32.totalorder %s514, %s528
      %p530 = scmp.eq.s32.totalorder %s42, 0
      %p531 = por %p529, %p530
      %s533 = sadd.s32 %s532, 1
      %p536 = scmp.eq.s32.totalorder %s36, 1
      %p537 = scmp.ne.s32.totalorder %s532, %s534
      %p538 = scmp.eq.s32.totalorder %s36, 0
      %p539 = por %p537, %p538
      %p540 = scmp.ne.s32.totalorder %s532, %s534
      %p541 = scmp.eq.s32.totalorder %s41, 1
      %p542 = por %p540, %p541
      %p543 = scmp.ne.s32.totalorder %s534, %s535
      %p544 = scmp.eq.s32.totalorder %s41, 0
      %p545 = por %p543, %p544
      %p546 = scmp.ne.s32.totalorder %s534, %s535
      %p547 = scmp.eq.s32.totalorder %s42, 1
      %p548 = por %p546, %p547
      %p550 = scmp.ne.s32.totalorder %s535, %s549
      %p551 = scmp.eq.s32.totalorder %s42, 0
      %p552 = por %p550, %p551
      %s554 = sadd.s32 %s553, 1
      %p557 = scmp.eq.s32.totalorder %s36, 1
      %p558 = scmp.ne.s32.totalorder %s553, %s555
      %p559 = scmp.eq.s32.totalorder %s36, 0
      %p560 = por %p558, %p559
      %p561 = scmp.ne.s32.totalorder %s553, %s555
      %p562 = scmp.eq.s32.totalorder %s41, 1
      %p563 = por %p561, %p562
      %p564 = scmp.ne.s32.totalorder %s555, %s556
      %p565 = scmp.eq.s32.totalorder %s41, 0
      %p566 = por %p564, %p565
      %p567 = scmp.ne.s32.totalorder %s555, %s556
      %p568 = scmp.eq.s32.totalorder %s42, 1
      %p569 = por %p567, %p568
      %p571 = scmp.ne.s32.totalorder %s556, %s570
      %p572 = scmp.eq.s32.totalorder %s42, 0
      %p573 = por %p571, %p572
      %s574 = ssub.s32 %s36, %s43
      %p575 = scmp.eq.s32.totalorder %s574, 0
      %s577 = sadd.s32 %s576, 1
      %s578 = scalar_select %p575, %s576, %s577
      %p581 = pneg %p575
      %p582 = scmp.eq.s32.totalorder %s36, 1
      %p583 = por %p581, %p582
      %p584 = scmp.ne.s32.totalorder %s576, %s579
      %p585 = scmp.eq.s32.totalorder %s36, 0
      %p586 = por %p584, %p585
      %p587 = scmp.ne.s32.totalorder %s576, %s579
      %p588 = scmp.eq.s32.totalorder %s41, 1
      %p589 = por %p587, %p588
      %p590 = scmp.ne.s32.totalorder %s579, %s580
      %p591 = scmp.eq.s32.totalorder %s41, 0
      %p592 = por %p590, %p591
      %p593 = scmp.ne.s32.totalorder %s579, %s580
      %p594 = scmp.eq.s32.totalorder %s42, 1
      %p595 = por %p593, %p594
      %p597 = scmp.ne.s32.totalorder %s580, %s596
      %p598 = scmp.eq.s32.totalorder %s42, 0
      %p599 = por %p597, %p598
      %p600 = scmp.le.s32.totalorder 1, %s36
      %p601 = scmp.lt.s32.totalorder %s36, 3
      %p602 = pnand %p600, %p601
      %p603 = pneg %p602
      // Predicated region
      $region9: #{tpu_custom_call.1} parent=5 // pred_check
        _
      $region10: #{tpu_custom_call.1} parent=5 // pred_check_branch
        %605 = sbr.rel (%p602) target = $region12
      $region11: #{tpu_custom_call.1} parent=5 // pred_region
        %s606 = ssub.s32 %s36, 1
        // Predicated region
        $region13: #{tpu_custom_call.1} parent=11 // pred_check
          %p607 = pneg %p83
        $region14: #{tpu_custom_call.1} parent=11 // pred_check_branch
          %609 = sbr.rel (%p607) target = $region16
        $region15: #{tpu_custom_call.1} parent=11 // pred_region
          _
        $region16: #{tpu_custom_call.1} parent=11 // pred_fallthru
          _
        // Predicated region
        $region17: #{tpu_custom_call.1} parent=11 // pred_check
          %p610 = pneg %p104
        $region18: #{tpu_custom_call.1} parent=11 // pred_check_branch
          %612 = sbr.rel (%p610) target = $region20
        $region19: #{tpu_custom_call.1} parent=11 // pred_region
          _
        $region20: #{tpu_custom_call.1} parent=11 // pred_fallthru
          _
        // Predicated region
        $region21: #{tpu_custom_call.1} parent=11 // pred_check
          %p613 = pneg %p125
        $region22: #{tpu_custom_call.1} parent=11 // pred_check_branch
          %615 = sbr.rel (%p613) target = $region24
        $region23: #{tpu_custom_call.1} parent=11 // pred_region
          _
        $region24: #{tpu_custom_call.1} parent=11 // pred_fallthru
          _
        // Predicated region
        $region25: #{tpu_custom_call.1} parent=11 // pred_check
          %p616 = pneg %p146
        $region26: #{tpu_custom_call.1} parent=11 // pred_check_branch
          %618 = sbr.rel (%p616) target = $region28
        $region27: #{tpu_custom_call.1} parent=11 // pred_region
          _
        $region28: #{tpu_custom_call.1} parent=11 // pred_fallthru
          _
        // Predicated region
        $region29: #{tpu_custom_call.1} parent=11 // pred_check
          %p619 = pneg %p167
        $region30: #{tpu_custom_call.1} parent=11 // pred_check_branch
          %621 = sbr.rel (%p619) target = $region32
        $region31: #{tpu_custom_call.1} parent=11 // pred_region
          _
        $region32: #{tpu_custom_call.1} parent=11 // pred_fallthru
          _
        // Predicated region
        $region33: #{tpu_custom_call.1} parent=11 // pred_check
          %p622 = pneg %p188
        $region34: #{tpu_custom_call.1} parent=11 // pred_check_branch
          %624 = sbr.rel (%p622) target = $region36
        $region35: #{tpu_custom_call.1} parent=11 // pred_region
          _
        $region36: #{tpu_custom_call.1} parent=11 // pred_fallthru
          _
        // Predicated region
        $region37: #{tpu_custom_call.1} parent=11 // pred_check
          %p625 = pneg %p209
        $region38: #{tpu_custom_call.1} parent=11 // pred_check_branch
          %627 = sbr.rel (%p625) target = $region40
        $region39: #{tpu_custom_call.1} parent=11 // pred_region
          _
        $region40: #{tpu_custom_call.1} parent=11 // pred_fallthru
          _
        // Predicated region
        $region41: #{tpu_custom_call.1} parent=11 // pred_check
          %p628 = pneg %p230
        $region42: #{tpu_custom_call.1} parent=11 // pred_check_branch
          %630 = sbr.rel (%p628) target = $region44
        $region43: #{tpu_custom_call.1} parent=11 // pred_region
          _
        $region44: #{tpu_custom_call.1} parent=11 // pred_fallthru
          _
        // Predicated region
        $region45: #{tpu_custom_call.1} parent=11 // pred_check
          %p631 = pneg %p251
        $region46: #{tpu_custom_call.1} parent=11 // pred_check_branch
          %633 = sbr.rel (%p631) target = $region48
        $region47: #{tpu_custom_call.1} parent=11 // pred_region
          _
        $region48: #{tpu_custom_call.1} parent=11 // pred_fallthru
          _
        // Predicated region
        $region49: #{tpu_custom_call.1} parent=11 // pred_check
          %p634 = pneg %p272
        $region50: #{tpu_custom_call.1} parent=11 // pred_check_branch
          %636 = sbr.rel (%p634) target = $region52
        $region51: #{tpu_custom_call.1} parent=11 // pred_region
          _
        $region52: #{tpu_custom_call.1} parent=11 // pred_fallthru
          _
        // Predicated region
        $region53: #{tpu_custom_call.1} parent=11 // pred_check
          %p637 = pneg %p293
        $region54: #{tpu_custom_call.1} parent=11 // pred_check_branch
          %639 = sbr.rel (%p637) target = $region56
        $region55: #{tpu_custom_call.1} parent=11 // pred_region
          _
        $region56: #{tpu_custom_call.1} parent=11 // pred_fallthru
          _
        // Predicated region
        $region57: #{tpu_custom_call.1} parent=11 // pred_check
          %p640 = pneg %p314
        $region58: #{tpu_custom_call.1} parent=11 // pred_check_branch
          %642 = sbr.rel (%p640) target = $region60
        $region59: #{tpu_custom_call.1} parent=11 // pred_region
          _
        $region60: #{tpu_custom_call.1} parent=11 // pred_fallthru
          _
        // Predicated region
        $region61: #{tpu_custom_call.1} parent=11 // pred_check
          %p643 = pneg %p335
        $region62: #{tpu_custom_call.1} parent=11 // pred_check_branch
          %645 = sbr.rel (%p643) target = $region64
        $region63: #{tpu_custom_call.1} parent=11 // pred_region
          _
        $region64: #{tpu_custom_call.1} parent=11 // pred_fallthru
          _
        // Predicated region
        $region65: #{tpu_custom_call.1} parent=11 // pred_check
          %p646 = pneg %p356
        $region66: #{tpu_custom_call.1} parent=11 // pred_check_branch
          %648 = sbr.rel (%p646) target = $region68
        $region67: #{tpu_custom_call.1} parent=11 // pred_region
          _
        $region68: #{tpu_custom_call.1} parent=11 // pred_fallthru
          _
        // Predicated region
        $region69: #{tpu_custom_call.1} parent=11 // pred_check
          %p649 = pneg %p377
        $region70: #{tpu_custom_call.1} parent=11 // pred_check_branch
          %651 = sbr.rel (%p649) target = $region72
        $region71: #{tpu_custom_call.1} parent=11 // pred_region
          _
        $region72: #{tpu_custom_call.1} parent=11 // pred_fallthru
          _
        // Predicated region
        $region73: #{tpu_custom_call.1} parent=11 // pred_check
          %p652 = pneg %p398
        $region74: #{tpu_custom_call.1} parent=11 // pred_check_branch
          %654 = sbr.rel (%p652) target = $region76
        $region75: #{tpu_custom_call.1} parent=11 // pred_region
          _
        $region76: #{tpu_custom_call.1} parent=11 // pred_fallthru
          _
        // Predicated region
        $region77: #{tpu_custom_call.1} parent=11 // pred_check
          %p655 = pneg %p419
        $region78: #{tpu_custom_call.1} parent=11 // pred_check_branch
          %657 = sbr.rel (%p655) target = $region80
        $region79: #{tpu_custom_call.1} parent=11 // pred_region
          _
        $region80: #{tpu_custom_call.1} parent=11 // pred_fallthru
          _
        // Predicated region
        $region81: #{tpu_custom_call.1} parent=11 // pred_check
          %p658 = pneg %p440
        $region82: #{tpu_custom_call.1} parent=11 // pred_check_branch
          %660 = sbr.rel (%p658) target = $region84
        $region83: #{tpu_custom_call.1} parent=11 // pred_region
          _
        $region84: #{tpu_custom_call.1} parent=11 // pred_fallthru
          _
        // Predicated region
        $region85: #{tpu_custom_call.1} parent=11 // pred_check
          %p661 = pneg %p461
        $region86: #{tpu_custom_call.1} parent=11 // pred_check_branch
          %663 = sbr.rel (%p661) target = $region88
        $region87: #{tpu_custom_call.1} parent=11 // pred_region
          _
        $region88: #{tpu_custom_call.1} parent=11 // pred_fallthru
          _
        // Predicated region
        $region89: #{tpu_custom_call.1} parent=11 // pred_check
          %p664 = pneg %p482
        $region90: #{tpu_custom_call.1} parent=11 // pred_check_branch
          %666 = sbr.rel (%p664) target = $region92
        $region91: #{tpu_custom_call.1} parent=11 // pred_region
          _
        $region92: #{tpu_custom_call.1} parent=11 // pred_fallthru
          _
        // Predicated region
        $region93: #{tpu_custom_call.1} parent=11 // pred_check
          %p667 = pneg %p503
        $region94: #{tpu_custom_call.1} parent=11 // pred_check_branch
          %669 = sbr.rel (%p667) target = $region96
        $region95: #{tpu_custom_call.1} parent=11 // pred_region
          _
        $region96: #{tpu_custom_call.1} parent=11 // pred_fallthru
          _
        // Predicated region
        $region97: #{tpu_custom_call.1} parent=11 // pred_check
          %p670 = pneg %p524
        $region98: #{tpu_custom_call.1} parent=11 // pred_check_branch
          %672 = sbr.rel (%p670) target = $region100
        $region99: #{tpu_custom_call.1} parent=11 // pred_region
          _
        $region100: #{tpu_custom_call.1} parent=11 // pred_fallthru
          _
        // Predicated region
        $region101: #{tpu_custom_call.1} parent=11 // pred_check
          %p673 = pneg %p545
        $region102: #{tpu_custom_call.1} parent=11 // pred_check_branch
          %675 = sbr.rel (%p673) target = $region104
        $region103: #{tpu_custom_call.1} parent=11 // pred_region
          _
        $region104: #{tpu_custom_call.1} parent=11 // pred_fallthru
          _
        // Predicated region
        $region105: #{tpu_custom_call.1} parent=11 // pred_check
          %p676 = pneg %p566
        $region106: #{tpu_custom_call.1} parent=11 // pred_check_branch
          %678 = sbr.rel (%p676) target = $region108
        $region107: #{tpu_custom_call.1} parent=11 // pred_region
          _
        $region108: #{tpu_custom_call.1} parent=11 // pred_fallthru
          _
      $region12: #{tpu_custom_call.1} parent=5 // pred_fallthru
        _
      %p679 = scmp.lt.s32.totalorder %s36, 2
      // Predicated region
      $region109: #{tpu_custom_call.1} parent=5 // pred_check
        %p680 = pneg %p679
      $region110: #{tpu_custom_call.1} parent=5 // pred_check_branch
        %682 = sbr.rel (%p680) target = $region112
      $region111: #{tpu_custom_call.1} parent=5 // pred_region
        // Predicated region
        $region113: #{tpu_custom_call.1} parent=111 // pred_check
          %p683 = pneg %p56
        $region114: #{tpu_custom_call.1} parent=111 // pred_check_branch
          %685 = sbr.rel (%p683) target = $region116
        $region115: #{tpu_custom_call.1} parent=111 // pred_region
          %p686 = scmp.lt.s32.totalorder %s36, 1
          %s687 = scalar_select %p686, %s36, 1
          %s688 = smul.addr %s687, 10
          %s689 = smul.addr %s688, 8
          %s690 = scalar_lea.vmem %s0, %s689
        $region116: #{tpu_custom_call.1} parent=111 // pred_fallthru
          _
      $region112: #{tpu_custom_call.1} parent=5 // pred_fallthru
        _
      %p691 = scmp.le.s32.totalorder 1, %s36
      %p692 = scmp.lt.s32.totalorder %s36, 3
      %p693 = pnand %p691, %p692
      %p694 = pneg %p693
      // Predicated region
      $region117: #{tpu_custom_call.1} parent=5 // pred_check
        _
      $region118: #{tpu_custom_call.1} parent=5 // pred_check_branch
        %696 = sbr.rel (%p693) target = $region120
      $region119: #{tpu_custom_call.1} parent=5 // pred_region
        %s697 = ssub.s32 %s36, 1
        %p698 = scmp.lt.s32.totalorder %s41, 1
        %s699 = scalar_select %p698, %s41, 1
        %s700 = smul.addr %s699, 10
        %s701 = smul.addr %s700, 8
        %s702 = scalar_lea.vmem %s0, %s701
        %p703 = pneg %p62
        %p704 = pneg %p59
        %p705 = pneg %p83
        %p706 = pneg %p80
        %p707 = pneg %p104
        %p708 = pneg %p101
        %p709 = pneg %p125
        %p710 = pneg %p122
        %p711 = pneg %p146
        %p712 = pneg %p143
        %p713 = pneg %p167
        %p714 = pneg %p164
        %p715 = pneg %p188
        %p716 = pneg %p185
        %p717 = pneg %p209
        %p718 = pneg %p206
        %p719 = pneg %p230
        %p720 = pneg %p227
        %p721 = pneg %p251
        %p722 = pneg %p248
        %p723 = pneg %p272
        %p724 = pneg %p269
        %p725 = pneg %p293
        %p726 = pneg %p290
        %p727 = pneg %p314
        %p728 = pneg %p311
        %p729 = pneg %p335
        %p730 = pneg %p332
        %p731 = pneg %p356
        %p732 = pneg %p353
        %p733 = pneg %p377
        %p734 = pneg %p374
        %p735 = pneg %p398
        %p736 = pneg %p395
        %p737 = pneg %p419
        %p738 = pneg %p416
        %p739 = pneg %p440
        %p740 = pneg %p437
        %p741 = pneg %p461
        %p742 = pneg %p458
        %p743 = pneg %p482
        %p744 = pneg %p479
        %p745 = pneg %p503
        %p746 = pneg %p500
        %p747 = pneg %p524
        %p748 = pneg %p521
        %p749 = pneg %p545
        %p750 = pneg %p542
        %p751 = pneg %p566
        %p752 = pneg %p563
        %p753 = pneg %p592
        %p754 = pneg %p589
        %s755 = sand.u32 %s579, 1
        %s756 = scalar_lea.sflag [#allocation4], %s755
        %s757 = sand.u32 %s579, 1
        %s758 = scalar_lea.vmem [#allocation3], %s757
        %p759 = scmp.lt.s32.totalorder %s41, 1
        %s760 = scalar_select %p759, %s41, 1
        %s761 = smul.addr %s760, 10
        %s762 = smul.addr %s761, 8
        %s763 = scalar_lea.vmem %s0, %s762
        %v764 = vld [vmem:[%s763] sm:$0xff]
        %v765 = vld [vmem:[%s763 + $0x8] sm:$0xff]
        %v766 = vld [vmem:[%s763 + $0x10] sm:$0xff]
        %v767 = vld [vmem:[%s763 + $0x18] sm:$0xff]
        %v768 = vld [vmem:[%s763 + $0x20] sm:$0xff]
        %v769 = vld [vmem:[%s763 + $0x28] sm:$0xff]
        %v770 = vld [vmem:[%s763 + $0x30] sm:$0xff]
        %v771 = vld [vmem:[%s763 + $0x38] sm:$0xff]
        %v772 = vld [vmem:[%s763 + $0x40] sm:$0xff]
        %v773 = vld [vmem:[%s763 + $0x48] sm:$0xff]
        %v774 = vld [vmem:[%s1] sm:$0xff]
        %v775 = vld [vmem:[%s1 + $0x8] sm:$0xff]
        %v776 = vld [vmem:[%s1 + $0x10] sm:$0xff]
        %v777 = vld [vmem:[%s1 + $0x18] sm:$0xff]
        %v778 = vld [vmem:[%s1 + $0x20] sm:$0xff]
        %v779 = vld [vmem:[%s1 + $0x28] sm:$0xff]
        %v780 = vld [vmem:[%s1 + $0x30] sm:$0xff]
        %v781 = vld [vmem:[%s1 + $0x38] sm:$0xff]
        %v782 = vld [vmem:[%s1 + $0x40] sm:$0xff]
        %v783 = vld [vmem:[%s1 + $0x48] sm:$0xff]
        %v784 = vld [vmem:[%s1 + $0x50] sm:$0xff]
        %v785 = vld [vmem:[%s1 + $0x58] sm:$0xff]
        %v786 = vld [vmem:[%s1 + $0x60] sm:$0xff]
        %v787 = vld [vmem:[%s1 + $0x68] sm:$0xff]
        %v788 = vld [vmem:[%s1 + $0x70] sm:$0xff]
        %v789 = vld [vmem:[%s1 + $0x78] sm:$0xff]
        %v790 = vld [vmem:[%s1 + $0x80] sm:$0xff]
        %v791 = vld [vmem:[%s1 + $0x88] sm:$0xff]
        %v792 = vld [vmem:[%s1 + $0x90] sm:$0xff]
        %v793 = vld [vmem:[%s1 + $0x98] sm:$0xff]
        %v794 = vld [vmem:[%s2] sm:$0xff]
        %v795 = vld [vmem:[%s2 + $0x8] sm:$0xff]
        %v796 = vld [vmem:[%s2 + $0x10] sm:$0xff]
        %v797 = vld [vmem:[%s2 + $0x18] sm:$0xff]
        %808 = vrot.lane.b32.xlu0 %v764, 3
        %v809 = vpop.permute.xlu0 %808
        %810 = vrot.lane.b32.xlu0 %v765, 3
        %v811 = vpop.permute.xlu0 %810
        %812 = vrot.lane.b32.xlu0 %v766, 3
        %v813 = vpop.permute.xlu0 %812
        %814 = vrot.lane.b32.xlu0 %v767, 3
        %v815 = vpop.permute.xlu0 %814
        %816 = vrot.lane.b32.xlu0 %v768, 3
        %v817 = vpop.permute.xlu0 %816
        %818 = vrot.lane.b32.xlu0 %v769, 3
        %v819 = vpop.permute.xlu0 %818
        %820 = vrot.lane.b32.xlu0 %v770, 3
        %v821 = vpop.permute.xlu0 %820
        %822 = vrot.lane.b32.xlu0 %v771, 3
        %v823 = vpop.permute.xlu0 %822
        %824 = vrot.lane.b32.xlu0 %v772, 3
        %v825 = vpop.permute.xlu0 %824
        %826 = vrot.lane.b32.xlu0 %v773, 3
        %v827 = vpop.permute.xlu0 %826
        %vm838 = vcmask 23552
        %v839 = vsel %vm838, 0.0, %v809
        %v840 = vsel %vm838, 0.0, %v811
        %v841 = vsel %vm838, 0.0, %v813
        %v842 = vsel %vm838, 0.0, %v815
        %v843 = vsel %vm838, 0.0, %v817
        %v844 = vsel %vm838, 0.0, %v819
        %v845 = vsel %vm838, 0.0, %v821
        %v846 = vsel %vm838, 0.0, %v823
        %v847 = vsel %vm838, 0.0, %v825
        %v848 = vsel %vm838, 0.0, %v827
        %vm849 = vcmask 154624
        %v850 = vsel %vm849, %v839, 0.0
        %v851 = vsel %vm849, %v840, 0.0
        %v852 = vsel %vm849, %v841, 0.0
        %v853 = vsel %vm849, %v842, 0.0
        %v854 = vsel %vm849, %v843, 0.0
        %v855 = vsel %vm849, %v844, 0.0
        %v856 = vsel %vm849, %v845, 0.0
        %v857 = vsel %vm849, %v846, 0.0
        %v858 = vsel %vm849, %v847, 0.0
        %v859 = vsel %vm849, %v848, 0.0
        %870 = vrot.lane.b32.xlu0 %v850, 127
        %v871 = vpop.permute.xlu0 %870
        %872 = vrot.lane.b32.xlu0 %v851, 127
        %v873 = vpop.permute.xlu0 %872
        %874 = vrot.lane.b32.xlu0 %v852, 127
        %v875 = vpop.permute.xlu0 %874
        %876 = vrot.lane.b32.xlu0 %v853, 127
        %v877 = vpop.permute.xlu0 %876
        %878 = vrot.lane.b32.xlu0 %v854, 127
        %v879 = vpop.permute.xlu0 %878
        %880 = vrot.lane.b32.xlu0 %v855, 127
        %v881 = vpop.permute.xlu0 %880
        %882 = vrot.lane.b32.xlu0 %v856, 127
        %v883 = vpop.permute.xlu0 %882
        %884 = vrot.lane.b32.xlu0 %v857, 127
        %v885 = vpop.permute.xlu0 %884
        %886 = vrot.lane.b32.xlu0 %v858, 127
        %v887 = vpop.permute.xlu0 %886
        %888 = vrot.lane.b32.xlu0 %v859, 127
        %v889 = vpop.permute.xlu0 %888
        %900 = vrot.lane.b32.xlu0 %v850, 126
        %v901 = vpop.permute.xlu0 %900
        %902 = vrot.lane.b32.xlu0 %v851, 126
        %v903 = vpop.permute.xlu0 %902
        %904 = vrot.lane.b32.xlu0 %v852, 126
        %v905 = vpop.permute.xlu0 %904
        %906 = vrot.lane.b32.xlu0 %v853, 126
        %v907 = vpop.permute.xlu0 %906
        %908 = vrot.lane.b32.xlu0 %v854, 126
        %v909 = vpop.permute.xlu0 %908
        %910 = vrot.lane.b32.xlu0 %v855, 126
        %v911 = vpop.permute.xlu0 %910
        %912 = vrot.lane.b32.xlu0 %v856, 126
        %v913 = vpop.permute.xlu0 %912
        %914 = vrot.lane.b32.xlu0 %v857, 126
        %v915 = vpop.permute.xlu0 %914
        %916 = vrot.lane.b32.xlu0 %v858, 126
        %v917 = vpop.permute.xlu0 %916
        %918 = vrot.lane.b32.xlu0 %v859, 126
        %v919 = vpop.permute.xlu0 %918
        %930 = vrot.lane.b32.xlu0 %v850, 125
        %v931 = vpop.permute.xlu0 %930
        %932 = vrot.lane.b32.xlu0 %v851, 125
        %v933 = vpop.permute.xlu0 %932
        %934 = vrot.lane.b32.xlu0 %v852, 125
        %v935 = vpop.permute.xlu0 %934
        %936 = vrot.lane.b32.xlu0 %v853, 125
        %v937 = vpop.permute.xlu0 %936
        %938 = vrot.lane.b32.xlu0 %v854, 125
        %v939 = vpop.permute.xlu0 %938
        %940 = vrot.lane.b32.xlu0 %v855, 125
        %v941 = vpop.permute.xlu0 %940
        %942 = vrot.lane.b32.xlu0 %v856, 125
        %v943 = vpop.permute.xlu0 %942
        %944 = vrot.lane.b32.xlu0 %v857, 125
        %v945 = vpop.permute.xlu0 %944
        %946 = vrot.lane.b32.xlu0 %v858, 125
        %v947 = vpop.permute.xlu0 %946
        %948 = vrot.lane.b32.xlu0 %v859, 125
        %v949 = vpop.permute.xlu0 %948
        %960 = vrot.lane.b32.xlu0 %v850, 124
        %v961 = vpop.permute.xlu0 %960
        %962 = vrot.lane.b32.xlu0 %v851, 124
        %v963 = vpop.permute.xlu0 %962
        %964 = vrot.lane.b32.xlu0 %v852, 124
        %v965 = vpop.permute.xlu0 %964
        %966 = vrot.lane.b32.xlu0 %v853, 124
        %v967 = vpop.permute.xlu0 %966
        %968 = vrot.lane.b32.xlu0 %v854, 124
        %v969 = vpop.permute.xlu0 %968
        %970 = vrot.lane.b32.xlu0 %v855, 124
        %v971 = vpop.permute.xlu0 %970
        %972 = vrot.lane.b32.xlu0 %v856, 124
        %v973 = vpop.permute.xlu0 %972
        %974 = vrot.lane.b32.xlu0 %v857, 124
        %v975 = vpop.permute.xlu0 %974
        %976 = vrot.lane.b32.xlu0 %v858, 124
        %v977 = vpop.permute.xlu0 %976
        %978 = vrot.lane.b32.xlu0 %v859, 124
        %v979 = vpop.permute.xlu0 %978
        %990 = vrot.lane.b32.xlu0 %v850, 123
        %v991 = vpop.permute.xlu0 %990
        %992 = vrot.lane.b32.xlu0 %v851, 123
        %v993 = vpop.permute.xlu0 %992
        %994 = vrot.lane.b32.xlu0 %v852, 123
        %v995 = vpop.permute.xlu0 %994
        %996 = vrot.lane.b32.xlu0 %v853, 123
        %v997 = vpop.permute.xlu0 %996
        %998 = vrot.lane.b32.xlu0 %v854, 123
        %v999 = vpop.permute.xlu0 %998
        %1000 = vrot.lane.b32.xlu0 %v855, 123
        %v1001 = vpop.permute.xlu0 %1000
        %1002 = vrot.lane.b32.xlu0 %v856, 123
        %v1003 = vpop.permute.xlu0 %1002
        %1004 = vrot.lane.b32.xlu0 %v857, 123
        %v1005 = vpop.permute.xlu0 %1004
        %1006 = vrot.lane.b32.xlu0 %v858, 123
        %v1007 = vpop.permute.xlu0 %1006
        %1008 = vrot.lane.b32.xlu0 %v859, 123
        %v1009 = vpop.permute.xlu0 %1008
        %1020 = vrot.lane.b32.xlu0 %v850, 122
        %v1021 = vpop.permute.xlu0 %1020
        %1022 = vrot.lane.b32.xlu0 %v851, 122
        %v1023 = vpop.permute.xlu0 %1022
        %1024 = vrot.lane.b32.xlu0 %v852, 122
        %v1025 = vpop.permute.xlu0 %1024
        %1026 = vrot.lane.b32.xlu0 %v853, 122
        %v1027 = vpop.permute.xlu0 %1026
        %1028 = vrot.lane.b32.xlu0 %v854, 122
        %v1029 = vpop.permute.xlu0 %1028
        %1030 = vrot.lane.b32.xlu0 %v855, 122
        %v1031 = vpop.permute.xlu0 %1030
        %1032 = vrot.lane.b32.xlu0 %v856, 122
        %v1033 = vpop.permute.xlu0 %1032
        %1034 = vrot.lane.b32.xlu0 %v857, 122
        %v1035 = vpop.permute.xlu0 %1034
        %1036 = vrot.lane.b32.xlu0 %v858, 122
        %v1037 = vpop.permute.xlu0 %1036
        %1038 = vrot.lane.b32.xlu0 %v859, 122
        %v1039 = vpop.permute.xlu0 %1038
        %1051 = vset.pattern.permute.xlu0 0
        %1052 = vperm.xlu0 %1051, %v794
        %v1053 = vpop.permute.xlu0 %1052
        %1056 = vset.pattern.permute.xlu0 0
        %1057 = vperm.xlu0 %1056, %v795
        %v1058 = vpop.permute.xlu0 %1057
        %1061 = vset.pattern.permute.xlu0 0
        %1062 = vperm.xlu0 %1061, %v796
        %v1063 = vpop.permute.xlu0 %1062
        %1066 = vset.pattern.permute.xlu0 0
        %1067 = vperm.xlu0 %1066, %v797
        %v1068 = vpop.permute.xlu0 %1067
        %vm1070 = vcmask 392192
        %v1072 = vsel %vm1070, %v778, 0
        %v1075 = vsel %vm1070, %v783, 0
        %v1078 = vsel %vm1070, %v788, 0
        %v1081 = vsel %vm1070, %v793, 0
        %1083 = vmatprep.subr.mxu0 0.0
        %1084 = vmatpush1.msra.mxu0 %v881
        %1085 = vmatprep.subr.mxu0 0.0
        %1086 = vmatpush1.msra.mxu0 %v879
        %1087 = vmatprep.subr.mxu0 0.0
        %1088 = vmatpush1.msra.mxu0 %v877
        %1089 = vmatprep.subr.mxu0 0.0
        %1090 = vmatpush1.msra.mxu0 %v875
        %1091 = vmatprep.subr.mxu0 0.0
        %1092 = vmatpush1.msra.mxu0 %v873
        %1093 = vmatprep.subr.mxu0 0.0
        %1094 = vmatpush1.msra.mxu0 %v871
        %1095 = vmatprep.subr.mxu0 0.0
        %1096 = vmatpush1.msra.mxu0 %v859
        %1097 = vmatprep.subr.mxu0 0.0
        %1098 = vmatpush1.msra.mxu0 %v858
        %1099 = vmatprep.subr.mxu0 0.0
        %1100 = vmatpush1.msra.mxu0 %v857
        %1101 = vmatprep.subr.mxu0 0.0
        %1102 = vmatpush1.msra.mxu0 %v856
        %1103 = vmatprep.subr.mxu0 0.0
        %1104 = vmatpush1.msra.mxu0 %v855
        %1105 = vmatprep.subr.mxu0 0.0
        %1106 = vmatpush1.msra.mxu0 %v854
        %1107 = vmatprep.subr.mxu0 0.0
        %1108 = vmatpush1.msra.mxu0 %v853
        %1109 = vmatprep.subr.mxu0 0.0
        %1110 = vmatpush1.msra.mxu0 %v852
        %1111 = vmatprep.subr.mxu0 0.0
        %1112 = vmatpush1.msra.mxu0 %v851
        %1113 = vmatprep.subr.mxu0 0.0
        %1114 = vmatpush1.msra.mxu0 %v850
        %1115 = vmatprep.subr.mxu0 0.0
        %1116 = vmatpush2.msra.mxu0 %v933
        %1117 = vmatprep.subr.mxu0 0.0
        %1118 = vmatpush2.msra.mxu0 %v931
        %1119 = vmatprep.subr.mxu0 0.0
        %1120 = vmatpush2.msra.mxu0 %v919
        %1121 = vmatprep.subr.mxu0 0.0
        %1122 = vmatpush2.msra.mxu0 %v917
        %1123 = vmatprep.subr.mxu0 0.0
        %1124 = vmatpush2.msra.mxu0 %v915
        %1125 = vmatprep.subr.mxu0 0.0
        %1126 = vmatpush2.msra.mxu0 %v913
        %1127 = vmatprep.subr.mxu0 0.0
        %1128 = vmatpush2.msra.mxu0 %v911
        %1129 = vmatprep.subr.mxu0 0.0
        %1130 = vmatpush2.msra.mxu0 %v909
        %1131 = vmatprep.subr.mxu0 0.0
        %1132 = vmatpush2.msra.mxu0 %v907
        %1133 = vmatprep.subr.mxu0 0.0
        %1134 = vmatpush2.msra.mxu0 %v905
        %1135 = vmatprep.subr.mxu0 0.0
        %1136 = vmatpush2.msra.mxu0 %v903
        %1137 = vmatprep.subr.mxu0 0.0
        %1138 = vmatpush2.msra.mxu0 %v901
        %1139 = vmatprep.subr.mxu0 0.0
        %1140 = vmatpush2.msra.mxu0 %v889
        %1141 = vmatprep.subr.mxu0 0.0
        %1142 = vmatpush2.msra.mxu0 %v887
        %1143 = vmatprep.subr.mxu0 0.0
        %1144 = vmatpush2.msra.mxu0 %v885
        %1145 = vmatprep.subr.mxu0 0.0
        %1146 = vmatpush2.msra.mxu0 %v883
        %1147 = vmatprep.mubr.f32.mxu0 %v775
        %1148 = vmatmul.mubr.f32.gmra.mxu0 %v774
        %v1149 = vpop.f32.mrf.mxu0
        %v1150 = vadd.f32 %v1053, %v1149
        %v1151 = vpop.f32.mrf.mxu0
        %1152 = vmatprep.mubr.f32.mxu0 %v780
        %1153 = vmatmul.mubr.f32.gmra.mxu0 %v779
        %v1154 = vpop.f32.mrf.mxu0
        %v1155 = vadd.f32 %v1058, %v1154
        %v1156 = vpop.f32.mrf.mxu0
        %1157 = vmatprep.mubr.f32.mxu0 %v785
        %1158 = vmatmul.mubr.f32.gmra.mxu0 %v784
        %v1159 = vpop.f32.mrf.mxu0
        %v1160 = vadd.f32 %v1063, %v1159
        %v1161 = vpop.f32.mrf.mxu0
        %1162 = vmatprep.mubr.f32.mxu0 %v790
        %1163 = vmatmul.mubr.f32.gmra.mxu0 %v789
        %v1164 = vpop.f32.mrf.mxu0
        %v1165 = vadd.f32 %v1068, %v1164
        %v1166 = vpop.f32.mrf.mxu0
        %1167 = vdwg.mxu0
        %1168 = vmatprep.subr.mxu0 0.0
        %1169 = vmatpush1.msra.mxu0 %v975
        %1170 = vmatprep.subr.mxu0 0.0
        %1171 = vmatpush1.msra.mxu0 %v973
        %1172 = vmatprep.subr.mxu0 0.0
        %1173 = vmatpush1.msra.mxu0 %v971
        %1174 = vmatprep.subr.mxu0 0.0
        %1175 = vmatpush1.msra.mxu0 %v969
        %1176 = vmatprep.subr.mxu0 0.0
        %1177 = vmatpush1.msra.mxu0 %v967
        %1178 = vmatprep.subr.mxu0 0.0
        %1179 = vmatpush1.msra.mxu0 %v965
        %1180 = vmatprep.subr.mxu0 0.0
        %1181 = vmatpush1.msra.mxu0 %v963
        %1182 = vmatprep.subr.mxu0 0.0
        %1183 = vmatpush1.msra.mxu0 %v961
        %1184 = vmatprep.subr.mxu0 0.0
        %1185 = vmatpush1.msra.mxu0 %v949
        %1186 = vmatprep.subr.mxu0 0.0
        %1187 = vmatpush1.msra.mxu0 %v947
        %1188 = vmatprep.subr.mxu0 0.0
        %1189 = vmatpush1.msra.mxu0 %v945
        %1190 = vmatprep.subr.mxu0 0.0
        %1191 = vmatpush1.msra.mxu0 %v943
        %1192 = vmatprep.subr.mxu0 0.0
        %1193 = vmatpush1.msra.mxu0 %v941
        %1194 = vmatprep.subr.mxu0 0.0
        %1195 = vmatpush1.msra.mxu0 %v939
        %1196 = vmatprep.subr.mxu0 0.0
        %1197 = vmatpush1.msra.mxu0 %v937
        %1198 = vmatprep.subr.mxu0 0.0
        %1199 = vmatpush1.msra.mxu0 %v935
        %1200 = vmatprep.subr.mxu0 0.0
        %1201 = vmatpush2.msra.mxu0 %v1027
        %1202 = vmatprep.subr.mxu0 0.0
        %1203 = vmatpush2.msra.mxu0 %v1025
        %1204 = vmatprep.subr.mxu0 0.0
        %1205 = vmatpush2.msra.mxu0 %v1023
        %1206 = vmatprep.subr.mxu0 0.0
        %1207 = vmatpush2.msra.mxu0 %v1021
        %1208 = vmatprep.subr.mxu0 0.0
        %1209 = vmatpush2.msra.mxu0 %v1009
        %1210 = vmatprep.subr.mxu0 0.0
        %1211 = vmatpush2.msra.mxu0 %v1007
        %1212 = vmatprep.subr.mxu0 0.0
        %1213 = vmatpush2.msra.mxu0 %v1005
        %1214 = vmatprep.subr.mxu0 0.0
        %1215 = vmatpush2.msra.mxu0 %v1003
        %1216 = vmatprep.subr.mxu0 0.0
        %1217 = vmatpush2.msra.mxu0 %v1001
        %1218 = vmatprep.subr.mxu0 0.0
        %1219 = vmatpush2.msra.mxu0 %v999
        %1220 = vmatprep.subr.mxu0 0.0
        %1221 = vmatpush2.msra.mxu0 %v997
        %1222 = vmatprep.subr.mxu0 0.0
        %1223 = vmatpush2.msra.mxu0 %v995
        %1224 = vmatprep.subr.mxu0 0.0
        %1225 = vmatpush2.msra.mxu0 %v993
        %1226 = vmatprep.subr.mxu0 0.0
        %1227 = vmatpush2.msra.mxu0 %v991
        %1228 = vmatprep.subr.mxu0 0.0
        %1229 = vmatpush2.msra.mxu0 %v979
        %1230 = vmatprep.subr.mxu0 0.0
        %1231 = vmatpush2.msra.mxu0 %v977
        %1232 = vmatprep.mubr.f32.mxu0 %v777
        %1233 = vmatmul.mubr.f32.gmra.mxu0 %v776
        %v1234 = vpop.f32.mrf.mxu0
        %v1235 = vadd.f32 %v1150, %v1234
        %v1236 = vpop.f32.mrf.mxu0
        %1237 = vmatprep.mubr.f32.mxu0 %v782
        %1238 = vmatmul.mubr.f32.gmra.mxu0 %v781
        %v1239 = vpop.f32.mrf.mxu0
        %v1240 = vadd.f32 %v1155, %v1239
        %v1241 = vpop.f32.mrf.mxu0
        %1242 = vmatprep.mubr.f32.mxu0 %v787
        %1243 = vmatmul.mubr.f32.gmra.mxu0 %v786
        %v1244 = vpop.f32.mrf.mxu0
        %v1245 = vadd.f32 %v1160, %v1244
        %v1246 = vpop.f32.mrf.mxu0
        %1247 = vmatprep.mubr.f32.mxu0 %v792
        %1248 = vmatmul.mubr.f32.gmra.mxu0 %v791
        %v1249 = vpop.f32.mrf.mxu0
        %v1250 = vadd.f32 %v1165, %v1249
        %v1251 = vpop.f32.mrf.mxu0
        %1252 = vdwg.mxu0
        %1253 = vmatprep.subr.mxu0 0.0
        %1254 = vmatpush1.msra.mxu0 0.0
        %1255 = vmatprep.subr.mxu0 0.0
        %1256 = vmatpush1.msra.mxu0 0.0
        %1257 = vmatprep.subr.mxu0 0.0
        %1258 = vmatpush1.msra.mxu0 0.0
        %1259 = vmatprep.subr.mxu0 0.0
        %1260 = vmatpush1.msra.mxu0 0.0
        %1261 = vmatprep.subr.mxu0 0.0
        %1262 = vmatpush1.msra.mxu0 0.0
        %1263 = vmatprep.subr.mxu0 0.0
        %1264 = vmatpush1.msra.mxu0 0.0
        %1265 = vmatprep.subr.mxu0 0.0
        %1266 = vmatpush1.msra.mxu0 0.0
        %1267 = vmatprep.subr.mxu0 0.0
        %1268 = vmatpush1.msra.mxu0 0.0
        %1269 = vmatprep.subr.mxu0 0.0
        %1270 = vmatpush1.msra.mxu0 0.0
        %1271 = vmatprep.subr.mxu0 0.0
        %1272 = vmatpush1.msra.mxu0 0.0
        %1273 = vmatprep.subr.mxu0 0.0
        %1274 = vmatpush1.msra.mxu0 %v1039
        %1275 = vmatprep.subr.mxu0 0.0
        %1276 = vmatpush1.msra.mxu0 %v1037
        %1277 = vmatprep.subr.mxu0 0.0
        %1278 = vmatpush1.msra.mxu0 %v1035
        %1279 = vmatprep.subr.mxu0 0.0
        %1280 = vmatpush1.msra.mxu0 %v1033
        %1281 = vmatprep.subr.mxu0 0.0
        %1282 = vmatpush1.msra.mxu0 %v1031
        %1283 = vmatprep.subr.mxu0 0.0
        %1284 = vmatpush1.msra.mxu0 %v1029
        %1285 = vmatprep.subr.mxu0 0.0
        %1286 = vmatpush2.msra.mxu0 0.0
        %1287 = vmatprep.subr.mxu0 0.0
        %1288 = vmatpush2.msra.mxu0 0.0
        %1289 = vmatprep.subr.mxu0 0.0
        %1290 = vmatpush2.msra.mxu0 0.0
        %1291 = vmatprep.subr.mxu0 0.0
        %1292 = vmatpush2.msra.mxu0 0.0
        %1293 = vmatprep.subr.mxu0 0.0
        %1294 = vmatpush2.msra.mxu0 0.0
        %1295 = vmatprep.subr.mxu0 0.0
        %1296 = vmatpush2.msra.mxu0 0.0
        %1297 = vmatprep.subr.mxu0 0.0
        %1298 = vmatpush2.msra.mxu0 0.0
        %1299 = vmatprep.subr.mxu0 0.0
        %1300 = vmatpush2.msra.mxu0 0.0
        %1301 = vmatprep.subr.mxu0 0.0
        %1302 = vmatpush2.msra.mxu0 0.0
        %1303 = vmatprep.subr.mxu0 0.0
        %1304 = vmatpush2.msra.mxu0 0.0
        %1305 = vmatprep.subr.mxu0 0.0
        %1306 = vmatpush2.msra.mxu0 0.0
        %1307 = vmatprep.subr.mxu0 0.0
        %1308 = vmatpush2.msra.mxu0 0.0
        %1309 = vmatprep.subr.mxu0 0.0
        %1310 = vmatpush2.msra.mxu0 0.0
        %1311 = vmatprep.subr.mxu0 0.0
        %1312 = vmatpush2.msra.mxu0 0.0
        %1313 = vmatprep.subr.mxu0 0.0
        %1314 = vmatpush2.msra.mxu0 0.0
        %1315 = vmatprep.subr.mxu0 0.0
        %1316 = vmatpush2.msra.mxu0 0.0
        %1317 = vmatprep.mubr.f32.mxu0 0.0
        %1318 = vmatmul.mubr.f32.gmra.mxu0 %v1072
        %v1319 = vpop.f32.mrf.mxu0
        %v1320 = vadd.f32 %v1235, %v1319
        %v1321 = vpop.f32.mrf.mxu0
        %1322 = vmatprep.mubr.f32.mxu0 0.0
        %1323 = vmatmul.mubr.f32.gmra.mxu0 %v1075
        %v1324 = vpop.f32.mrf.mxu0
        %v1325 = vadd.f32 %v1240, %v1324
        %v1326 = vpop.f32.mrf.mxu0
        %1327 = vmatprep.mubr.f32.mxu0 0.0
        %1328 = vmatmul.mubr.f32.gmra.mxu0 %v1078
        %v1329 = vpop.f32.mrf.mxu0
        %v1330 = vadd.f32 %v1245, %v1329
        %v1331 = vpop.f32.mrf.mxu0
        %1332 = vmatprep.mubr.f32.mxu0 0.0
        %1333 = vmatmul.mubr.f32.gmra.mxu0 %v1081
        %v1334 = vpop.f32.mrf.mxu0
        %v1335 = vadd.f32 %v1250, %v1334
        %v1336 = vpop.f32.mrf.mxu0
        %1337 = vdwg.mxu0
        %v1338 = vld [vmem:[%s3] sm:$0xff]
        %v1339 = vld [vmem:[%s3 + $0x8] sm:$0xff]
        %v1340 = vld [vmem:[%s3 + $0x10] sm:$0xff]
        %v1341 = vld [vmem:[%s3 + $0x18] sm:$0xff]
        %v1342 = vld [vmem:[%s3 + $0x20] sm:$0xff]
        %v1343 = vld [vmem:[%s3 + $0x28] sm:$0xff]
        %v1344 = vld [vmem:[%s3 + $0x30] sm:$0xff]
        %v1345 = vld [vmem:[%s3 + $0x38] sm:$0xff]
        %v1346 = vld [vmem:[%s4] sm:$0xff]
        %v1347 = vld [vmem:[%s4 + $0x8] sm:$0xff]
        %vm1348 = vcmp.ge.f32.partialorder %v1320, 0.0
        %vm1349 = vcmp.ge.f32.partialorder %v1325, 0.0
        %vm1350 = vcmp.ge.f32.partialorder %v1330, 0.0
        %vm1351 = vcmp.ge.f32.partialorder %v1335, 0.0
        %v1352 = vmul.f32 %v1320, 0.1
        %v1353 = vmul.f32 %v1325, 0.1
        %v1354 = vmul.f32 %v1330, 0.1
        %v1355 = vmul.f32 %v1335, 0.1
        %v1356 = vsel %vm1348, %v1320, %v1352
        %v1357 = vsel %vm1349, %v1325, %v1353
        %v1358 = vsel %vm1350, %v1330, %v1354
        %v1359 = vsel %vm1351, %v1335, %v1355
        %1364 = vrot.lane.b32.xlu0 %v1356, 1
        %v1365 = vpop.permute.xlu0 %1364
        %1366 = vrot.lane.b32.xlu0 %v1357, 1
        %v1367 = vpop.permute.xlu0 %1366
        %1368 = vrot.lane.b32.xlu0 %v1358, 1
        %v1369 = vpop.permute.xlu0 %1368
        %1370 = vrot.lane.b32.xlu0 %v1359, 1
        %v1371 = vpop.permute.xlu0 %1370
        %vm1376 = vcmask 7168
        %v1377 = vsel %vm1376, 0.0, %v1365
        %v1378 = vsel %vm1376, 0.0, %v1367
        %v1379 = vsel %vm1376, 0.0, %v1369
        %v1380 = vsel %vm1376, 0.0, %v1371
        %vm1381 = vcmask 138240
        %v1382 = vsel %vm1381, %v1377, 0.0
        %v1383 = vsel %vm1381, %v1378, 0.0
        %v1384 = vsel %vm1381, %v1379, 0.0
        %v1385 = vsel %vm1381, %v1380, 0.0
        %v1386 = vlaneseq
        %v1387 = vshrl.u32 %v1386, 7
        %v1388 = vadd.s32 %v1387, 8
        %v1389 = vlaneseq
        %v1390 = vand.u32 %v1389, 127
        %1395 = vrot.lane.b32.xlu0 %v1382, 1
        %v1396 = vpop.permute.xlu0 %1395
        %1397 = vrot.lane.b32.xlu0 %v1383, 1
        %v1398 = vpop.permute.xlu0 %1397
        %1399 = vrot.lane.b32.xlu0 %v1384, 1
        %v1400 = vpop.permute.xlu0 %1399
        %1401 = vrot.lane.b32.xlu0 %v1385, 1
        %v1402 = vpop.permute.xlu0 %1401
        %1405 = vrot.lane.b32.xlu0 %v1344, 32
        %v1406 = vpop.permute.xlu0 %1405
        %1407 = vrot.lane.b32.xlu0 %v1345, 32
        %v1408 = vpop.permute.xlu0 %1407
        %vm1411 = vcmask 261120
        %v1412 = vsel %vm1411, %v1340, %v1406
        %v1413 = vsel %vm1411, %v1341, %v1408
        %1414 = vrot.lane.b32.xlu0 %v1382, 127
        %v1415 = vpop.permute.xlu0 %1414
        %1416 = vrot.lane.b32.xlu0 %v1383, 127
        %v1417 = vpop.permute.xlu0 %1416
        %1418 = vrot.lane.b32.xlu0 %v1384, 127
        %v1419 = vpop.permute.xlu0 %1418
        %1420 = vrot.lane.b32.xlu0 %v1385, 127
        %v1421 = vpop.permute.xlu0 %1420
        %1422 = vrot.lane.b32.xlu0 %v1396, 127
        %v1423 = vpop.permute.xlu0 %1422
        %1424 = vrot.lane.b32.xlu0 %v1398, 127
        %v1425 = vpop.permute.xlu0 %1424
        %1426 = vrot.lane.b32.xlu0 %v1400, 127
        %v1427 = vpop.permute.xlu0 %1426
        %1428 = vrot.lane.b32.xlu0 %v1402, 127
        %v1429 = vpop.permute.xlu0 %1428
        %vm1438 = vcmask 523264
        %v1440 = vsel %vm1438, %v1412, 0
        %v1443 = vsel %vm1438, %v1413, 0
        %1445 = vmatprep.subr.mxu0 0.0
        %1446 = vmatpush1.msra.mxu0 0.0
        %1447 = vmatprep.subr.mxu0 0.0
        %1448 = vmatpush1.msra.mxu0 0.0
        %1449 = vmatprep.subr.mxu0 0.0
        %1450 = vmatpush1.msra.mxu0 0.0
        %1451 = vmatprep.subr.mxu0 0.0
        %1452 = vmatpush1.msra.mxu0 0.0
        %1453 = vmatprep.subr.mxu0 0.0
        %1454 = vmatpush1.msra.mxu0 0.0
        %1455 = vmatprep.subr.mxu0 0.0
        %1456 = vmatpush1.msra.mxu0 0.0
        %1457 = vmatprep.subr.mxu0 0.0
        %1458 = vmatpush1.msra.mxu0 0.0
        %1459 = vmatprep.subr.mxu0 0.0
        %1460 = vmatpush1.msra.mxu0 0.0
        %1461 = vmatprep.subr.mxu0 0.0
        %1462 = vmatpush1.msra.mxu0 %v1429
        %1463 = vmatprep.subr.mxu0 0.0
        %1464 = vmatpush1.msra.mxu0 %v1427
        %1465 = vmatprep.subr.mxu0 0.0
        %1466 = vmatpush1.msra.mxu0 %v1425
        %1467 = vmatprep.subr.mxu0 0.0
        %1468 = vmatpush1.msra.mxu0 %v1423
        %1469 = vmatprep.subr.mxu0 0.0
        %1470 = vmatpush1.msra.mxu0 %v1421
        %1471 = vmatprep.subr.mxu0 0.0
        %1472 = vmatpush1.msra.mxu0 %v1419
        %1473 = vmatprep.subr.mxu0 0.0
        %1474 = vmatpush1.msra.mxu0 %v1417
        %1475 = vmatprep.subr.mxu0 0.0
        %1476 = vmatpush1.msra.mxu0 %v1415
        %1477 = vmatprep.subr.mxu0 0.0
        %1478 = vmatpush2.msra.mxu0 0.0
        %1479 = vmatprep.subr.mxu0 0.0
        %1480 = vmatpush2.msra.mxu0 0.0
        %1481 = vmatprep.subr.mxu0 0.0
        %1482 = vmatpush2.msra.mxu0 0.0
        %1483 = vmatprep.subr.mxu0 0.0
        %1484 = vmatpush2.msra.mxu0 0.0
        %1485 = vmatprep.subr.mxu0 0.0
        %1486 = vmatpush2.msra.mxu0 0.0
        %1487 = vmatprep.subr.mxu0 0.0
        %1488 = vmatpush2.msra.mxu0 0.0
        %1489 = vmatprep.subr.mxu0 0.0
        %1490 = vmatpush2.msra.mxu0 0.0
        %1491 = vmatprep.subr.mxu0 0.0
        %1492 = vmatpush2.msra.mxu0 0.0
        %1493 = vmatprep.subr.mxu0 0.0
        %1494 = vmatpush2.msra.mxu0 0.0
        %1495 = vmatprep.subr.mxu0 0.0
        %1496 = vmatpush2.msra.mxu0 0.0
        %1497 = vmatprep.subr.mxu0 0.0
        %1498 = vmatpush2.msra.mxu0 0.0
        %1499 = vmatprep.subr.mxu0 0.0
        %1500 = vmatpush2.msra.mxu0 0.0
        %1501 = vmatprep.subr.mxu0 0.0
        %1502 = vmatpush2.msra.mxu0 0.0
        %1503 = vmatprep.subr.mxu0 0.0
        %1504 = vmatpush2.msra.mxu0 0.0
        %1505 = vmatprep.subr.mxu0 0.0
        %1506 = vmatpush2.msra.mxu0 0.0
        %1507 = vmatprep.subr.mxu0 0.0
        %1508 = vmatpush2.msra.mxu0 0.0
        %1509 = vmatprep.mubr.f32.mxu0 0.0
        %1510 = vmatmul.mubr.f32.gmra.mxu0 %v1440
        %v1511 = vpop.f32.mrf.mxu0
        %v1512 = vadd.f32 0.0, %v1511
        %v1513 = vpop.f32.mrf.mxu0
        %1514 = vmatprep.mubr.f32.mxu0 0.0
        %1515 = vmatmul.mubr.f32.gmra.mxu0 %v1443
        %v1516 = vpop.f32.mrf.mxu0
        %v1517 = vadd.f32 0.0, %v1516
        %v1518 = vpop.f32.mrf.mxu0
        %1519 = vdwg.mxu0
        %v1520 = vmul.u32 %v1387, 2
        %v1521 = vmul.u32 %v1388, 2
        %vm1522 = vcmp.eq.s32.totalorder %v1390, %v1520
        %vm1523 = vcmp.eq.s32.totalorder %v1390, %v1521
        %v1524 = vsel %vm1522, 1, 0
        %v1525 = vsel %vm1523, 1, 0
        %v1526 = vcvt.s32.f32 %v1524
        %v1527 = vcvt.s32.f32 %v1525
        %1530 = vrot.lane.b32.xlu0 %v1342, 32
        %v1531 = vpop.permute.xlu0 %1530
        %1532 = vrot.lane.b32.xlu0 %v1343, 32
        %v1533 = vpop.permute.xlu0 %1532
        %v1536 = vsel %vm1411, %v1338, %v1531
        %v1537 = vsel %vm1411, %v1339, %v1533
        %1538 = vrot.lane.b32.xlu0 %v1382, 126
        %v1539 = vpop.permute.xlu0 %1538
        %1540 = vrot.lane.b32.xlu0 %v1383, 126
        %v1541 = vpop.permute.xlu0 %1540
        %1542 = vrot.lane.b32.xlu0 %v1384, 126
        %v1543 = vpop.permute.xlu0 %1542
        %1544 = vrot.lane.b32.xlu0 %v1385, 126
        %v1545 = vpop.permute.xlu0 %1544
        %1546 = vrot.lane.b32.xlu0 %v1396, 126
        %v1547 = vpop.permute.xlu0 %1546
        %1548 = vrot.lane.b32.xlu0 %v1398, 126
        %v1549 = vpop.permute.xlu0 %1548
        %1550 = vrot.lane.b32.xlu0 %v1400, 126
        %v1551 = vpop.permute.xlu0 %1550
        %1552 = vrot.lane.b32.xlu0 %v1402, 126
        %v1553 = vpop.permute.xlu0 %1552
        %v1563 = vsel %vm1438, %v1536, 0
        %v1566 = vsel %vm1438, %v1537, 0
        %1568 = vmatprep.subr.mxu0 0.0
        %1569 = vmatpush1.msra.mxu0 0.0
        %1570 = vmatprep.subr.mxu0 0.0
        %1571 = vmatpush1.msra.mxu0 0.0
        %1572 = vmatprep.subr.mxu0 0.0
        %1573 = vmatpush1.msra.mxu0 0.0
        %1574 = vmatprep.subr.mxu0 0.0
        %1575 = vmatpush1.msra.mxu0 0.0
        %1576 = vmatprep.subr.mxu0 0.0
        %1577 = vmatpush1.msra.mxu0 0.0
        %1578 = vmatprep.subr.mxu0 0.0
        %1579 = vmatpush1.msra.mxu0 0.0
        %1580 = vmatprep.subr.mxu0 0.0
        %1581 = vmatpush1.msra.mxu0 0.0
        %1582 = vmatprep.subr.mxu0 0.0
        %1583 = vmatpush1.msra.mxu0 0.0
        %1584 = vmatprep.subr.mxu0 0.0
        %1585 = vmatpush1.msra.mxu0 %v1553
        %1586 = vmatprep.subr.mxu0 0.0
        %1587 = vmatpush1.msra.mxu0 %v1551
        %1588 = vmatprep.subr.mxu0 0.0
        %1589 = vmatpush1.msra.mxu0 %v1549
        %1590 = vmatprep.subr.mxu0 0.0
        %1591 = vmatpush1.msra.mxu0 %v1547
        %1592 = vmatprep.subr.mxu0 0.0
        %1593 = vmatpush1.msra.mxu0 %v1545
        %1594 = vmatprep.subr.mxu0 0.0
        %1595 = vmatpush1.msra.mxu0 %v1543
        %1596 = vmatprep.subr.mxu0 0.0
        %1597 = vmatpush1.msra.mxu0 %v1541
        %1598 = vmatprep.subr.mxu0 0.0
        %1599 = vmatpush1.msra.mxu0 %v1539
        %1600 = vmatprep.subr.mxu0 0.0
        %1601 = vmatpush2.msra.mxu0 0.0
        %1602 = vmatprep.subr.mxu0 0.0
        %1603 = vmatpush2.msra.mxu0 0.0
        %1604 = vmatprep.subr.mxu0 0.0
        %1605 = vmatpush2.msra.mxu0 0.0
        %1606 = vmatprep.subr.mxu0 0.0
        %1607 = vmatpush2.msra.mxu0 0.0
        %1608 = vmatprep.subr.mxu0 0.0
        %1609 = vmatpush2.msra.mxu0 0.0
        %1610 = vmatprep.subr.mxu0 0.0
        %1611 = vmatpush2.msra.mxu0 0.0
        %1612 = vmatprep.subr.mxu0 0.0
        %1613 = vmatpush2.msra.mxu0 0.0
        %1614 = vmatprep.subr.mxu0 0.0
        %1615 = vmatpush2.msra.mxu0 0.0
        %1616 = vmatprep.subr.mxu0 0.0
        %1617 = vmatpush2.msra.mxu0 0.0
        %1618 = vmatprep.subr.mxu0 0.0
        %1619 = vmatpush2.msra.mxu0 0.0
        %1620 = vmatprep.subr.mxu0 0.0
        %1621 = vmatpush2.msra.mxu0 0.0
        %1622 = vmatprep.subr.mxu0 0.0
        %1623 = vmatpush2.msra.mxu0 0.0
        %1624 = vmatprep.subr.mxu0 0.0
        %1625 = vmatpush2.msra.mxu0 0.0
        %1626 = vmatprep.subr.mxu0 0.0
        %1627 = vmatpush2.msra.mxu0 0.0
        %1628 = vmatprep.subr.mxu0 0.0
        %1629 = vmatpush2.msra.mxu0 0.0
        %1630 = vmatprep.subr.mxu0 0.0
        %1631 = vmatpush2.msra.mxu0 0.0
        %1632 = vmatprep.mubr.f32.mxu0 0.0
        %1633 = vmatmul.mubr.f32.gmra.mxu0 %v1563
        %v1634 = vpop.f32.mrf.mxu0
        %v1635 = vadd.f32 0.0, %v1634
        %v1636 = vpop.f32.mrf.mxu0
        %1637 = vmatprep.mubr.f32.mxu0 0.0
        %1638 = vmatmul.mubr.f32.gmra.mxu0 %v1566
        %v1639 = vpop.f32.mrf.mxu0
        %v1640 = vadd.f32 0.0, %v1639
        %v1641 = vpop.f32.mrf.mxu0
        %1642 = vdwg.mxu0
        %v1643 = vadd.s32 %v1520, 1
        %v1644 = vadd.s32 %v1521, 1
        %vm1645 = vcmp.eq.s32.totalorder %v1390, %v1643
        %vm1646 = vcmp.eq.s32.totalorder %v1390, %v1644
        %v1647 = vsel %vm1645, 1, 0
        %v1648 = vsel %vm1646, 1, 0
        %v1649 = vcvt.s32.f32 %v1647
        %v1650 = vcvt.s32.f32 %v1648
        %vm1651 = vcmask 130048
        %v1653 = vsel %vm1651, %v1635, 0
        %v1656 = vsel %vm1651, %v1640, 0
        %1658 = vmatprep.subr.mxu0 0.0
        %1659 = vmatpush1.msra.mxu0 0.0
        %1660 = vmatprep.subr.mxu0 0.0
        %1661 = vmatpush1.msra.mxu0 0.0
        %1662 = vmatprep.subr.mxu0 0.0
        %1663 = vmatpush1.msra.mxu0 0.0
        %1664 = vmatprep.subr.mxu0 0.0
        %1665 = vmatpush1.msra.mxu0 0.0
        %1666 = vmatprep.subr.mxu0 0.0
        %1667 = vmatpush1.msra.mxu0 0.0
        %1668 = vmatprep.subr.mxu0 0.0
        %1669 = vmatpush1.msra.mxu0 0.0
        %1670 = vmatprep.subr.mxu0 0.0
        %1671 = vmatpush1.msra.mxu0 0.0
        %1672 = vmatprep.subr.mxu0 0.0
        %1673 = vmatpush1.msra.mxu0 0.0
        %1674 = vmatprep.subr.mxu0 0.0
        %1675 = vmatpush1.msra.mxu0 0.0
        %1676 = vmatprep.subr.mxu0 0.0
        %1677 = vmatpush1.msra.mxu0 0.0
        %1678 = vmatprep.subr.mxu0 0.0
        %1679 = vmatpush1.msra.mxu0 0.0
        %1680 = vmatprep.subr.mxu0 0.0
        %1681 = vmatpush1.msra.mxu0 0.0
        %1682 = vmatprep.subr.mxu0 0.0
        %1683 = vmatpush1.msra.mxu0 0.0
        %1684 = vmatprep.subr.mxu0 0.0
        %1685 = vmatpush1.msra.mxu0 0.0
        %1686 = vmatprep.subr.mxu0 0.0
        %1687 = vmatpush1.msra.mxu0 %v1650
        %1688 = vmatprep.subr.mxu0 0.0
        %1689 = vmatpush1.msra.mxu0 %v1649
        %1690 = vmatprep.subr.mxu0 0.0
        %1691 = vmatpush2.msra.mxu0 0.0
        %1692 = vmatprep.subr.mxu0 0.0
        %1693 = vmatpush2.msra.mxu0 0.0
        %1694 = vmatprep.subr.mxu0 0.0
        %1695 = vmatpush2.msra.mxu0 0.0
        %1696 = vmatprep.subr.mxu0 0.0
        %1697 = vmatpush2.msra.mxu0 0.0
        %1698 = vmatprep.subr.mxu0 0.0
        %1699 = vmatpush2.msra.mxu0 0.0
        %1700 = vmatprep.subr.mxu0 0.0
        %1701 = vmatpush2.msra.mxu0 0.0
        %1702 = vmatprep.subr.mxu0 0.0
        %1703 = vmatpush2.msra.mxu0 0.0
        %1704 = vmatprep.subr.mxu0 0.0
        %1705 = vmatpush2.msra.mxu0 0.0
        %1706 = vmatprep.subr.mxu0 0.0
        %1707 = vmatpush2.msra.mxu0 0.0
        %1708 = vmatprep.subr.mxu0 0.0
        %1709 = vmatpush2.msra.mxu0 0.0
        %1710 = vmatprep.subr.mxu0 0.0
        %1711 = vmatpush2.msra.mxu0 0.0
        %1712 = vmatprep.subr.mxu0 0.0
        %1713 = vmatpush2.msra.mxu0 0.0
        %1714 = vmatprep.subr.mxu0 0.0
        %1715 = vmatpush2.msra.mxu0 0.0
        %1716 = vmatprep.subr.mxu0 0.0
        %1717 = vmatpush2.msra.mxu0 0.0
        %1718 = vmatprep.subr.mxu0 0.0
        %1719 = vmatpush2.msra.mxu0 0.0
        %1720 = vmatprep.subr.mxu0 0.0
        %1721 = vmatpush2.msra.mxu0 0.0
        %1722 = vmatprep.mubr.f32.mxu0 0.0
        %1723 = vmatmul.mubr.f32.gmra.mxu0 %v1653
        %v1724 = vpop.f32.mrf.mxu0
        %v1725 = vadd.f32 0.0, %v1724
        %v1726 = vpop.f32.mrf.mxu0
        %1727 = vmatprep.mubr.f32.mxu0 0.0
        %1728 = vmatmul.mubr.f32.gmra.mxu0 %v1656
        %v1729 = vpop.f32.mrf.mxu0
        %v1730 = vadd.f32 0.0, %v1729
        %v1731 = vpop.f32.mrf.mxu0
        %1732 = vdwg.mxu0
        %v1734 = vsel %vm1651, %v1512, 0
        %v1737 = vsel %vm1651, %v1517, 0
        %1739 = vmatprep.subr.mxu0 0.0
        %1740 = vmatpush1.msra.mxu0 0.0
        %1741 = vmatprep.subr.mxu0 0.0
        %1742 = vmatpush1.msra.mxu0 0.0
        %1743 = vmatprep.subr.mxu0 0.0
        %1744 = vmatpush1.msra.mxu0 0.0
        %1745 = vmatprep.subr.mxu0 0.0
        %1746 = vmatpush1.msra.mxu0 0.0
        %1747 = vmatprep.subr.mxu0 0.0
        %1748 = vmatpush1.msra.mxu0 0.0
        %1749 = vmatprep.subr.mxu0 0.0
        %1750 = vmatpush1.msra.mxu0 0.0
        %1751 = vmatprep.subr.mxu0 0.0
        %1752 = vmatpush1.msra.mxu0 0.0
        %1753 = vmatprep.subr.mxu0 0.0
        %1754 = vmatpush1.msra.mxu0 0.0
        %1755 = vmatprep.subr.mxu0 0.0
        %1756 = vmatpush1.msra.mxu0 0.0
        %1757 = vmatprep.subr.mxu0 0.0
        %1758 = vmatpush1.msra.mxu0 0.0
        %1759 = vmatprep.subr.mxu0 0.0
        %1760 = vmatpush1.msra.mxu0 0.0
        %1761 = vmatprep.subr.mxu0 0.0
        %1762 = vmatpush1.msra.mxu0 0.0
        %1763 = vmatprep.subr.mxu0 0.0
        %1764 = vmatpush1.msra.mxu0 0.0
        %1765 = vmatprep.subr.mxu0 0.0
        %1766 = vmatpush1.msra.mxu0 0.0
        %1767 = vmatprep.subr.mxu0 0.0
        %1768 = vmatpush1.msra.mxu0 %v1527
        %1769 = vmatprep.subr.mxu0 0.0
        %1770 = vmatpush1.msra.mxu0 %v1526
        %1771 = vmatprep.subr.mxu0 0.0
        %1772 = vmatpush2.msra.mxu0 0.0
        %1773 = vmatprep.subr.mxu0 0.0
        %1774 = vmatpush2.msra.mxu0 0.0
        %1775 = vmatprep.subr.mxu0 0.0
        %1776 = vmatpush2.msra.mxu0 0.0
        %1777 = vmatprep.subr.mxu0 0.0
        %1778 = vmatpush2.msra.mxu0 0.0
        %1779 = vmatprep.subr.mxu0 0.0
        %1780 = vmatpush2.msra.mxu0 0.0
        %1781 = vmatprep.subr.mxu0 0.0
        %1782 = vmatpush2.msra.mxu0 0.0
        %1783 = vmatprep.subr.mxu0 0.0
        %1784 = vmatpush2.msra.mxu0 0.0
        %1785 = vmatprep.subr.mxu0 0.0
        %1786 = vmatpush2.msra.mxu0 0.0
        %1787 = vmatprep.subr.mxu0 0.0
        %1788 = vmatpush2.msra.mxu0 0.0
        %1789 = vmatprep.subr.mxu0 0.0
        %1790 = vmatpush2.msra.mxu0 0.0
        %1791 = vmatprep.subr.mxu0 0.0
        %1792 = vmatpush2.msra.mxu0 0.0
        %1793 = vmatprep.subr.mxu0 0.0
        %1794 = vmatpush2.msra.mxu0 0.0
        %1795 = vmatprep.subr.mxu0 0.0
        %1796 = vmatpush2.msra.mxu0 0.0
        %1797 = vmatprep.subr.mxu0 0.0
        %1798 = vmatpush2.msra.mxu0 0.0
        %1799 = vmatprep.subr.mxu0 0.0
        %1800 = vmatpush2.msra.mxu0 0.0
        %1801 = vmatprep.subr.mxu0 0.0
        %1802 = vmatpush2.msra.mxu0 0.0
        %1803 = vmatprep.mubr.f32.mxu0 0.0
        %1804 = vmatmul.mubr.f32.gmra.mxu0 %v1734
        %v1805 = vpop.f32.mrf.mxu0
        %v1806 = vadd.f32 %v1725, %v1805
        %v1807 = vpop.f32.mrf.mxu0
        %1808 = vmatprep.mubr.f32.mxu0 0.0
        %1809 = vmatmul.mubr.f32.gmra.mxu0 %v1737
        %v1810 = vpop.f32.mrf.mxu0
        %v1811 = vadd.f32 %v1730, %v1810
        %v1812 = vpop.f32.mrf.mxu0
        %1813 = vdwg.mxu0
        %1815 = vset.pattern.permute.xlu0 0
        %1816 = vperm.xlu0 %1815, %v1346
        %v1817 = vpop.permute.xlu0 %1816
        %1820 = vset.pattern.permute.xlu0 0
        %1821 = vperm.xlu0 %1820, %v1347
        %v1822 = vpop.permute.xlu0 %1821
        %v1824 = vadd.f32 %v1806, %v1817
        %v1825 = vadd.f32 %v1811, %v1822
        %v1826 = vld [vmem:[%s5] sm:$0xff]
        %v1827 = vld [vmem:[%s5 + $0x8] sm:$0xff]
        %v1828 = vld [vmem:[%s6] sm:$0xff]
        %v1829 = vld [vmem:[%s6 + $0x8] sm:$0xff]
        %vm1830 = vcmp.ge.f32.partialorder %v1824, 0.0
        %vm1831 = vcmp.ge.f32.partialorder %v1825, 0.0
        %v1832 = vmul.f32 %v1824, 0.1
        %v1833 = vmul.f32 %v1825, 0.1
        %v1834 = vsel %vm1830, %v1824, %v1832
        %v1835 = vsel %vm1831, %v1825, %v1833
        %1838 = vrot.lane.b32.xlu0 %v1834, 1
        %v1839 = vpop.permute.xlu0 %1838
        %1840 = vrot.lane.b32.xlu0 %v1835, 1
        %v1841 = vpop.permute.xlu0 %1840
        %v1844 = vsel %vm1376, 0.0, %v1839
        %v1845 = vsel %vm1376, 0.0, %v1841
        %vm1846 = vcmask 269312
        %v1847 = vsel %vm1846, %v1844, 0.0
        %v1848 = vsel %vm1846, %v1845, 0.0
        %1851 = vrot.lane.b32.xlu0 %v1847, 127
        %v1852 = vpop.permute.xlu0 %1851
        %1853 = vrot.lane.b32.xlu0 %v1848, 127
        %v1854 = vpop.permute.xlu0 %1853
        %1857 = vrot.lane.b32.xlu0 %v1847, 126
        %v1858 = vpop.permute.xlu0 %1857
        %1859 = vrot.lane.b32.xlu0 %v1848, 126
        %v1860 = vpop.permute.xlu0 %1859
        %1864 = vset.pattern.permute.xlu0 0
        %1865 = vperm.xlu0 %1864, %v1828
        %v1866 = vpop.permute.xlu0 %1865
        %1869 = vset.pattern.permute.xlu0 0
        %1870 = vperm.xlu0 %1869, %v1829
        %v1871 = vpop.permute.xlu0 %1870
        %v1874 = vsel %vm1070, %v1826, 0
        %v1877 = vsel %vm1070, %v1827, 0
        %1879 = vmatprep.subr.mxu0 0.0
        %1880 = vmatpush1.msra.mxu0 0.0
        %1881 = vmatprep.subr.mxu0 0.0
        %1882 = vmatpush1.msra.mxu0 0.0
        %1883 = vmatprep.subr.mxu0 0.0
        %1884 = vmatpush1.msra.mxu0 0.0
        %1885 = vmatprep.subr.mxu0 0.0
        %1886 = vmatpush1.msra.mxu0 0.0
        %1887 = vmatprep.subr.mxu0 0.0
        %1888 = vmatpush1.msra.mxu0 0.0
        %1889 = vmatprep.subr.mxu0 0.0
        %1890 = vmatpush1.msra.mxu0 0.0
        %1891 = vmatprep.subr.mxu0 0.0
        %1892 = vmatpush1.msra.mxu0 0.0
        %1893 = vmatprep.subr.mxu0 0.0
        %1894 = vmatpush1.msra.mxu0 0.0
        %1895 = vmatprep.subr.mxu0 0.0
        %1896 = vmatpush1.msra.mxu0 0.0
        %1897 = vmatprep.subr.mxu0 0.0
        %1898 = vmatpush1.msra.mxu0 0.0
        %1899 = vmatprep.subr.mxu0 0.0
        %1900 = vmatpush1.msra.mxu0 %v1860
        %1901 = vmatprep.subr.mxu0 0.0
        %1902 = vmatpush1.msra.mxu0 %v1858
        %1903 = vmatprep.subr.mxu0 0.0
        %1904 = vmatpush1.msra.mxu0 %v1854
        %1905 = vmatprep.subr.mxu0 0.0
        %1906 = vmatpush1.msra.mxu0 %v1852
        %1907 = vmatprep.subr.mxu0 0.0
        %1908 = vmatpush1.msra.mxu0 %v1848
        %1909 = vmatprep.subr.mxu0 0.0
        %1910 = vmatpush1.msra.mxu0 %v1847
        %1911 = vmatprep.subr.mxu0 0.0
        %1912 = vmatpush2.msra.mxu0 0.0
        %1913 = vmatprep.subr.mxu0 0.0
        %1914 = vmatpush2.msra.mxu0 0.0
        %1915 = vmatprep.subr.mxu0 0.0
        %1916 = vmatpush2.msra.mxu0 0.0
        %1917 = vmatprep.subr.mxu0 0.0
        %1918 = vmatpush2.msra.mxu0 0.0
        %1919 = vmatprep.subr.mxu0 0.0
        %1920 = vmatpush2.msra.mxu0 0.0
        %1921 = vmatprep.subr.mxu0 0.0
        %1922 = vmatpush2.msra.mxu0 0.0
        %1923 = vmatprep.subr.mxu0 0.0
        %1924 = vmatpush2.msra.mxu0 0.0
        %1925 = vmatprep.subr.mxu0 0.0
        %1926 = vmatpush2.msra.mxu0 0.0
        %1927 = vmatprep.subr.mxu0 0.0
        %1928 = vmatpush2.msra.mxu0 0.0
        %1929 = vmatprep.subr.mxu0 0.0
        %1930 = vmatpush2.msra.mxu0 0.0
        %1931 = vmatprep.subr.mxu0 0.0
        %1932 = vmatpush2.msra.mxu0 0.0
        %1933 = vmatprep.subr.mxu0 0.0
        %1934 = vmatpush2.msra.mxu0 0.0
        %1935 = vmatprep.subr.mxu0 0.0
        %1936 = vmatpush2.msra.mxu0 0.0
        %1937 = vmatprep.subr.mxu0 0.0
        %1938 = vmatpush2.msra.mxu0 0.0
        %1939 = vmatprep.subr.mxu0 0.0
        %1940 = vmatpush2.msra.mxu0 0.0
        %1941 = vmatprep.subr.mxu0 0.0
        %1942 = vmatpush2.msra.mxu0 0.0
        %1943 = vmatprep.mubr.f32.mxu0 0.0
        %1944 = vmatmul.mubr.f32.gmra.mxu0 %v1874
        %v1945 = vpop.f32.mrf.mxu0
        %v1946 = vadd.f32 %v1866, %v1945
        %v1947 = vpop.f32.mrf.mxu0
        %1948 = vmatprep.mubr.f32.mxu0 0.0
        %1949 = vmatmul.mubr.f32.gmra.mxu0 %v1877
        %v1950 = vpop.f32.mrf.mxu0
        %v1951 = vadd.f32 %v1871, %v1950
        %v1952 = vpop.f32.mrf.mxu0
        %1953 = vdwg.mxu0
        %v1954 = vadd.f32 %v1824, %v1946
        %v1955 = vadd.f32 %v1825, %v1951
        %v1956 = vld [vmem:[%s7] sm:$0xff]
        %v1957 = vld [vmem:[%s7 + $0x8] sm:$0xff]
        %v1958 = vld [vmem:[%s8] sm:$0xff]
        %v1959 = vld [vmem:[%s8 + $0x8] sm:$0xff]
        %vm1960 = vcmp.ge.f32.partialorder %v1954, 0.0
        %vm1961 = vcmp.ge.f32.partialorder %v1955, 0.0
        %v1962 = vmul.f32 %v1954, 0.1
        %v1963 = vmul.f32 %v1955, 0.1
        %v1964 = vsel %vm1960, %v1954, %v1962
        %v1965 = vsel %vm1961, %v1955, %v1963
        %1968 = vrot.lane.b32.xlu0 %v1964, 3
        %v1969 = vpop.permute.xlu0 %1968
        %1970 = vrot.lane.b32.xlu0 %v1965, 3
        %v1971 = vpop.permute.xlu0 %1970
        %v1974 = vsel %vm838, 0.0, %v1969
        %v1975 = vsel %vm838, 0.0, %v1971
        %vm1976 = vcmask 285696
        %v1977 = vsel %vm1976, %v1974, 0.0
        %v1978 = vsel %vm1976, %v1975, 0.0
        %1981 = vrot.lane.b32.xlu0 %v1977, 125
        %v1982 = vpop.permute.xlu0 %1981
        %1983 = vrot.lane.b32.xlu0 %v1978, 125
        %v1984 = vpop.permute.xlu0 %1983
        %1987 = vrot.lane.b32.xlu0 %v1977, 122
        %v1988 = vpop.permute.xlu0 %1987
        %1989 = vrot.lane.b32.xlu0 %v1978, 122
        %v1990 = vpop.permute.xlu0 %1989
        %1994 = vset.pattern.permute.xlu0 0
        %1995 = vperm.xlu0 %1994, %v1958
        %v1996 = vpop.permute.xlu0 %1995
        %1999 = vset.pattern.permute.xlu0 0
        %2000 = vperm.xlu0 %1999, %v1959
        %v2001 = vpop.permute.xlu0 %2000
        %v2004 = vsel %vm1070, %v1956, 0
        %v2007 = vsel %vm1070, %v1957, 0
        %2009 = vmatprep.subr.mxu0 0.0
        %2010 = vmatpush1.msra.mxu0 0.0
        %2011 = vmatprep.subr.mxu0 0.0
        %2012 = vmatpush1.msra.mxu0 0.0
        %2013 = vmatprep.subr.mxu0 0.0
        %2014 = vmatpush1.msra.mxu0 0.0
        %2015 = vmatprep.subr.mxu0 0.0
        %2016 = vmatpush1.msra.mxu0 0.0
        %2017 = vmatprep.subr.mxu0 0.0
        %2018 = vmatpush1.msra.mxu0 0.0
        %2019 = vmatprep.subr.mxu0 0.0
        %2020 = vmatpush1.msra.mxu0 0.0
        %2021 = vmatprep.subr.mxu0 0.0
        %2022 = vmatpush1.msra.mxu0 0.0
        %2023 = vmatprep.subr.mxu0 0.0
        %2024 = vmatpush1.msra.mxu0 0.0
        %2025 = vmatprep.subr.mxu0 0.0
        %2026 = vmatpush1.msra.mxu0 0.0
        %2027 = vmatprep.subr.mxu0 0.0
        %2028 = vmatpush1.msra.mxu0 0.0
        %2029 = vmatprep.subr.mxu0 0.0
        %2030 = vmatpush1.msra.mxu0 %v1990
        %2031 = vmatprep.subr.mxu0 0.0
        %2032 = vmatpush1.msra.mxu0 %v1988
        %2033 = vmatprep.subr.mxu0 0.0
        %2034 = vmatpush1.msra.mxu0 %v1984
        %2035 = vmatprep.subr.mxu0 0.0
        %2036 = vmatpush1.msra.mxu0 %v1982
        %2037 = vmatprep.subr.mxu0 0.0
        %2038 = vmatpush1.msra.mxu0 %v1978
        %2039 = vmatprep.subr.mxu0 0.0
        %2040 = vmatpush1.msra.mxu0 %v1977
        %2041 = vmatprep.subr.mxu0 0.0
        %2042 = vmatpush2.msra.mxu0 0.0
        %2043 = vmatprep.subr.mxu0 0.0
        %2044 = vmatpush2.msra.mxu0 0.0
        %2045 = vmatprep.subr.mxu0 0.0
        %2046 = vmatpush2.msra.mxu0 0.0
        %2047 = vmatprep.subr.mxu0 0.0
        %2048 = vmatpush2.msra.mxu0 0.0
        %2049 = vmatprep.subr.mxu0 0.0
        %2050 = vmatpush2.msra.mxu0 0.0
        %2051 = vmatprep.subr.mxu0 0.0
        %2052 = vmatpush2.msra.mxu0 0.0
        %2053 = vmatprep.subr.mxu0 0.0
        %2054 = vmatpush2.msra.mxu0 0.0
        %2055 = vmatprep.subr.mxu0 0.0
        %2056 = vmatpush2.msra.mxu0 0.0
        %2057 = vmatprep.subr.mxu0 0.0
        %2058 = vmatpush2.msra.mxu0 0.0
        %2059 = vmatprep.subr.mxu0 0.0
        %2060 = vmatpush2.msra.mxu0 0.0
        %2061 = vmatprep.subr.mxu0 0.0
        %2062 = vmatpush2.msra.mxu0 0.0
        %2063 = vmatprep.subr.mxu0 0.0
        %2064 = vmatpush2.msra.mxu0 0.0
        %2065 = vmatprep.subr.mxu0 0.0
        %2066 = vmatpush2.msra.mxu0 0.0
        %2067 = vmatprep.subr.mxu0 0.0
        %2068 = vmatpush2.msra.mxu0 0.0
        %2069 = vmatprep.subr.mxu0 0.0
        %2070 = vmatpush2.msra.mxu0 0.0
        %2071 = vmatprep.subr.mxu0 0.0
        %2072 = vmatpush2.msra.mxu0 0.0
        %2073 = vmatprep.mubr.f32.mxu0 0.0
        %2074 = vmatmul.mubr.f32.gmra.mxu0 %v2004
        %v2075 = vpop.f32.mrf.mxu0
        %v2076 = vadd.f32 %v1996, %v2075
        %v2077 = vpop.f32.mrf.mxu0
        %2078 = vmatprep.mubr.f32.mxu0 0.0
        %2079 = vmatmul.mubr.f32.gmra.mxu0 %v2007
        %v2080 = vpop.f32.mrf.mxu0
        %v2081 = vadd.f32 %v2001, %v2080
        %v2082 = vpop.f32.mrf.mxu0
        %2083 = vdwg.mxu0
        %v2084 = vadd.f32 %v1954, %v2076
        %v2085 = vadd.f32 %v1955, %v2081
        %v2086 = vld [vmem:[%s9] sm:$0xff]
        %v2087 = vld [vmem:[%s9 + $0x8] sm:$0xff]
        %v2088 = vld [vmem:[%s10] sm:$0xff]
        %v2089 = vld [vmem:[%s10 + $0x8] sm:$0xff]
        %2090 = vrot.lane.b32.xlu0 %v1834, 2
        %v2091 = vpop.permute.xlu0 %2090
        %2092 = vrot.lane.b32.xlu0 %v1835, 2
        %v2093 = vpop.permute.xlu0 %2092
        %vm2096 = vcmask 15360
        %v2097 = vsel %vm2096, 0.0, %v2091
        %v2098 = vsel %vm2096, 0.0, %v2093
        %vm2099 = vcmask 277504
        %v2100 = vsel %vm2099, %v2097, 0.0
        %v2101 = vsel %vm2099, %v2098, 0.0
        %2104 = vrot.lane.b32.xlu0 %v2100, 127
        %v2105 = vpop.permute.xlu0 %2104
        %2106 = vrot.lane.b32.xlu0 %v2101, 127
        %v2107 = vpop.permute.xlu0 %2106
        %2110 = vrot.lane.b32.xlu0 %v2100, 126
        %v2111 = vpop.permute.xlu0 %2110
        %2112 = vrot.lane.b32.xlu0 %v2101, 126
        %v2113 = vpop.permute.xlu0 %2112
        %2116 = vrot.lane.b32.xlu0 %v2100, 125
        %v2117 = vpop.permute.xlu0 %2116
        %2118 = vrot.lane.b32.xlu0 %v2101, 125
        %v2119 = vpop.permute.xlu0 %2118
        %2122 = vrot.lane.b32.xlu0 %v2100, 124
        %v2123 = vpop.permute.xlu0 %2122
        %2124 = vrot.lane.b32.xlu0 %v2101, 124
        %v2125 = vpop.permute.xlu0 %2124
        %2129 = vset.pattern.permute.xlu0 0
        %2130 = vperm.xlu0 %2129, %v2088
        %v2131 = vpop.permute.xlu0 %2130
        %2134 = vset.pattern.permute.xlu0 0
        %2135 = vperm.xlu0 %2134, %v2089
        %v2136 = vpop.permute.xlu0 %2135
        %vm2138 = vcmask 654336
        %v2140 = vsel %vm2138, %v2086, 0
        %v2143 = vsel %vm2138, %v2087, 0
        %2145 = vmatprep.subr.mxu0 0.0
        %2146 = vmatpush1.msra.mxu0 0.0
        %2147 = vmatprep.subr.mxu0 0.0
        %2148 = vmatpush1.msra.mxu0 0.0
        %2149 = vmatprep.subr.mxu0 0.0
        %2150 = vmatpush1.msra.mxu0 0.0
        %2151 = vmatprep.subr.mxu0 0.0
        %2152 = vmatpush1.msra.mxu0 0.0
        %2153 = vmatprep.subr.mxu0 0.0
        %2154 = vmatpush1.msra.mxu0 0.0
        %2155 = vmatprep.subr.mxu0 0.0
        %2156 = vmatpush1.msra.mxu0 0.0
        %2157 = vmatprep.subr.mxu0 0.0
        %2158 = vmatpush1.msra.mxu0 %v2125
        %2159 = vmatprep.subr.mxu0 0.0
        %2160 = vmatpush1.msra.mxu0 %v2123
        %2161 = vmatprep.subr.mxu0 0.0
        %2162 = vmatpush1.msra.mxu0 %v2119
        %2163 = vmatprep.subr.mxu0 0.0
        %2164 = vmatpush1.msra.mxu0 %v2117
        %2165 = vmatprep.subr.mxu0 0.0
        %2166 = vmatpush1.msra.mxu0 %v2113
        %2167 = vmatprep.subr.mxu0 0.0
        %2168 = vmatpush1.msra.mxu0 %v2111
        %2169 = vmatprep.subr.mxu0 0.0
        %2170 = vmatpush1.msra.mxu0 %v2107
        %2171 = vmatprep.subr.mxu0 0.0
        %2172 = vmatpush1.msra.mxu0 %v2105
        %2173 = vmatprep.subr.mxu0 0.0
        %2174 = vmatpush1.msra.mxu0 %v2101
        %2175 = vmatprep.subr.mxu0 0.0
        %2176 = vmatpush1.msra.mxu0 %v2100
        %2177 = vmatprep.subr.mxu0 0.0
        %2178 = vmatpush2.msra.mxu0 0.0
        %2179 = vmatprep.subr.mxu0 0.0
        %2180 = vmatpush2.msra.mxu0 0.0
        %2181 = vmatprep.subr.mxu0 0.0
        %2182 = vmatpush2.msra.mxu0 0.0
        %2183 = vmatprep.subr.mxu0 0.0
        %2184 = vmatpush2.msra.mxu0 0.0
        %2185 = vmatprep.subr.mxu0 0.0
        %2186 = vmatpush2.msra.mxu0 0.0
        %2187 = vmatprep.subr.mxu0 0.0
        %2188 = vmatpush2.msra.mxu0 0.0
        %2189 = vmatprep.subr.mxu0 0.0
        %2190 = vmatpush2.msra.mxu0 0.0
        %2191 = vmatprep.subr.mxu0 0.0
        %2192 = vmatpush2.msra.mxu0 0.0
        %2193 = vmatprep.subr.mxu0 0.0
        %2194 = vmatpush2.msra.mxu0 0.0
        %2195 = vmatprep.subr.mxu0 0.0
        %2196 = vmatpush2.msra.mxu0 0.0
        %2197 = vmatprep.subr.mxu0 0.0
        %2198 = vmatpush2.msra.mxu0 0.0
        %2199 = vmatprep.subr.mxu0 0.0
        %2200 = vmatpush2.msra.mxu0 0.0
        %2201 = vmatprep.subr.mxu0 0.0
        %2202 = vmatpush2.msra.mxu0 0.0
        %2203 = vmatprep.subr.mxu0 0.0
        %2204 = vmatpush2.msra.mxu0 0.0
        %2205 = vmatprep.subr.mxu0 0.0
        %2206 = vmatpush2.msra.mxu0 0.0
        %2207 = vmatprep.subr.mxu0 0.0
        %2208 = vmatpush2.msra.mxu0 0.0
        %2209 = vmatprep.mubr.f32.mxu0 0.0
        %2210 = vmatmul.mubr.f32.gmra.mxu0 %v2140
        %v2211 = vpop.f32.mrf.mxu0
        %v2212 = vadd.f32 %v2131, %v2211
        %v2213 = vpop.f32.mrf.mxu0
        %2214 = vmatprep.mubr.f32.mxu0 0.0
        %2215 = vmatmul.mubr.f32.gmra.mxu0 %v2143
        %v2216 = vpop.f32.mrf.mxu0
        %v2217 = vadd.f32 %v2136, %v2216
        %v2218 = vpop.f32.mrf.mxu0
        %2219 = vdwg.mxu0
        %v2220 = vadd.f32 %v1824, %v2212
        %v2221 = vadd.f32 %v1825, %v2217
        %v2222 = vld [vmem:[%s11] sm:$0xff]
        %v2223 = vld [vmem:[%s11 + $0x8] sm:$0xff]
        %v2224 = vld [vmem:[%s12] sm:$0xff]
        %v2225 = vld [vmem:[%s12 + $0x8] sm:$0xff]
        %vm2226 = vcmp.ge.f32.partialorder %v2220, 0.0
        %vm2227 = vcmp.ge.f32.partialorder %v2221, 0.0
        %v2228 = vmul.f32 %v2220, 0.1
        %v2229 = vmul.f32 %v2221, 0.1
        %v2230 = vsel %vm2226, %v2220, %v2228
        %v2231 = vsel %vm2227, %v2221, %v2229
        %2234 = vrot.lane.b32.xlu0 %v2230, 6
        %v2235 = vpop.permute.xlu0 %2234
        %2236 = vrot.lane.b32.xlu0 %v2231, 6
        %v2237 = vpop.permute.xlu0 %2236
        %vm2240 = vcmask 48128
        %v2241 = vsel %vm2240, 0.0, %v2235
        %v2242 = vsel %vm2240, 0.0, %v2237
        %vm2243 = vcmask 310272
        %v2244 = vsel %vm2243, %v2241, 0.0
        %v2245 = vsel %vm2243, %v2242, 0.0
        %2248 = vrot.lane.b32.xlu0 %v2244, 125
        %v2249 = vpop.permute.xlu0 %2248
        %2250 = vrot.lane.b32.xlu0 %v2245, 125
        %v2251 = vpop.permute.xlu0 %2250
        %2254 = vrot.lane.b32.xlu0 %v2244, 122
        %v2255 = vpop.permute.xlu0 %2254
        %2256 = vrot.lane.b32.xlu0 %v2245, 122
        %v2257 = vpop.permute.xlu0 %2256
        %2260 = vrot.lane.b32.xlu0 %v2244, 119
        %v2261 = vpop.permute.xlu0 %2260
        %2262 = vrot.lane.b32.xlu0 %v2245, 119
        %v2263 = vpop.permute.xlu0 %2262
        %2266 = vrot.lane.b32.xlu0 %v2244, 116
        %v2267 = vpop.permute.xlu0 %2266
        %2268 = vrot.lane.b32.xlu0 %v2245, 116
        %v2269 = vpop.permute.xlu0 %2268
        %2273 = vset.pattern.permute.xlu0 0
        %2274 = vperm.xlu0 %2273, %v2224
        %v2275 = vpop.permute.xlu0 %2274
        %2278 = vset.pattern.permute.xlu0 0
        %2279 = vperm.xlu0 %2278, %v2225
        %v2280 = vpop.permute.xlu0 %2279
        %v2283 = vsel %vm2138, %v2222, 0
        %v2286 = vsel %vm2138, %v2223, 0
        %2288 = vmatprep.subr.mxu0 0.0
        %2289 = vmatpush1.msra.mxu0 0.0
        %2290 = vmatprep.subr.mxu0 0.0
        %2291 = vmatpush1.msra.mxu0 0.0
        %2292 = vmatprep.subr.mxu0 0.0
        %2293 = vmatpush1.msra.mxu0 0.0
        %2294 = vmatprep.subr.mxu0 0.0
        %2295 = vmatpush1.msra.mxu0 0.0
        %2296 = vmatprep.subr.mxu0 0.0
        %2297 = vmatpush1.msra.mxu0 0.0
        %2298 = vmatprep.subr.mxu0 0.0
        %2299 = vmatpush1.msra.mxu0 0.0
        %2300 = vmatprep.subr.mxu0 0.0
        %2301 = vmatpush1.msra.mxu0 %v2269
        %2302 = vmatprep.subr.mxu0 0.0
        %2303 = vmatpush1.msra.mxu0 %v2267
        %2304 = vmatprep.subr.mxu0 0.0
        %2305 = vmatpush1.msra.mxu0 %v2263
        %2306 = vmatprep.subr.mxu0 0.0
        %2307 = vmatpush1.msra.mxu0 %v2261
        %2308 = vmatprep.subr.mxu0 0.0
        %2309 = vmatpush1.msra.mxu0 %v2257
        %2310 = vmatprep.subr.mxu0 0.0
        %2311 = vmatpush1.msra.mxu0 %v2255
        %2312 = vmatprep.subr.mxu0 0.0
        %2313 = vmatpush1.msra.mxu0 %v2251
        %2314 = vmatprep.subr.mxu0 0.0
        %2315 = vmatpush1.msra.mxu0 %v2249
        %2316 = vmatprep.subr.mxu0 0.0
        %2317 = vmatpush1.msra.mxu0 %v2245
        %2318 = vmatprep.subr.mxu0 0.0
        %2319 = vmatpush1.msra.mxu0 %v2244
        %2320 = vmatprep.subr.mxu0 0.0
        %2321 = vmatpush2.msra.mxu0 0.0
        %2322 = vmatprep.subr.mxu0 0.0
        %2323 = vmatpush2.msra.mxu0 0.0
        %2324 = vmatprep.subr.mxu0 0.0
        %2325 = vmatpush2.msra.mxu0 0.0
        %2326 = vmatprep.subr.mxu0 0.0
        %2327 = vmatpush2.msra.mxu0 0.0
        %2328 = vmatprep.subr.mxu0 0.0
        %2329 = vmatpush2.msra.mxu0 0.0
        %2330 = vmatprep.subr.mxu0 0.0
        %2331 = vmatpush2.msra.mxu0 0.0
        %2332 = vmatprep.subr.mxu0 0.0
        %2333 = vmatpush2.msra.mxu0 0.0
        %2334 = vmatprep.subr.mxu0 0.0
        %2335 = vmatpush2.msra.mxu0 0.0
        %2336 = vmatprep.subr.mxu0 0.0
        %2337 = vmatpush2.msra.mxu0 0.0
        %2338 = vmatprep.subr.mxu0 0.0
        %2339 = vmatpush2.msra.mxu0 0.0
        %2340 = vmatprep.subr.mxu0 0.0
        %2341 = vmatpush2.msra.mxu0 0.0
        %2342 = vmatprep.subr.mxu0 0.0
        %2343 = vmatpush2.msra.mxu0 0.0
        %2344 = vmatprep.subr.mxu0 0.0
        %2345 = vmatpush2.msra.mxu0 0.0
        %2346 = vmatprep.subr.mxu0 0.0
        %2347 = vmatpush2.msra.mxu0 0.0
        %2348 = vmatprep.subr.mxu0 0.0
        %2349 = vmatpush2.msra.mxu0 0.0
        %2350 = vmatprep.subr.mxu0 0.0
        %2351 = vmatpush2.msra.mxu0 0.0
        %2352 = vmatprep.mubr.f32.mxu0 0.0
        %2353 = vmatmul.mubr.f32.gmra.mxu0 %v2283
        %v2354 = vpop.f32.mrf.mxu0
        %v2355 = vadd.f32 %v2275, %v2354
        %v2356 = vpop.f32.mrf.mxu0
        %2357 = vmatprep.mubr.f32.mxu0 0.0
        %2358 = vmatmul.mubr.f32.gmra.mxu0 %v2286
        %v2359 = vpop.f32.mrf.mxu0
        %v2360 = vadd.f32 %v2280, %v2359
        %v2361 = vpop.f32.mrf.mxu0
        %2362 = vdwg.mxu0
        %v2363 = vadd.f32 %v2220, %v2355
        %v2364 = vadd.f32 %v2221, %v2360
        %v2365 = vadd.f32 %v2084, %v2363
        %v2366 = vadd.f32 %v2085, %v2364
        %v2367 = vmul.f32 %v2365, 0.5
        %v2368 = vmul.f32 %v2366, 0.5
        %v2369 = vld [vmem:[%s13] sm:$0xff]
        %v2370 = vld [vmem:[%s13 + $0x8] sm:$0xff]
        %v2371 = vld [vmem:[%s13 + $0x10] sm:$0xff]
        %v2372 = vld [vmem:[%s13 + $0x18] sm:$0xff]
        %v2373 = vld [vmem:[%s14] sm:$0xff]
        %vm2374 = vcmp.ge.f32.partialorder %v2367, 0.0
        %vm2375 = vcmp.ge.f32.partialorder %v2368, 0.0
        %v2376 = vmul.f32 %v2367, 0.1
        %v2377 = vmul.f32 %v2368, 0.1
        %v2378 = vsel %vm2374, %v2367, %v2376
        %v2379 = vsel %vm2375, %v2368, %v2377
        %2382 = vrot.lane.b32.xlu0 %v2378, 1
        %v2383 = vpop.permute.xlu0 %2382
        %2384 = vrot.lane.b32.xlu0 %v2379, 1
        %v2385 = vpop.permute.xlu0 %2384
        %v2388 = vsel %vm1376, 0.0, %v2383
        %v2389 = vsel %vm1376, 0.0, %v2385
        %v2390 = vsel %vm1846, %v2388, 0.0
        %v2391 = vsel %vm1846, %v2389, 0.0
        %v2392 = vadd.s32 %v1387, 16
        %v2393 = vadd.s32 %v1387, 24
        %2396 = vrot.lane.b32.xlu0 %v2390, 1
        %v2397 = vpop.permute.xlu0 %2396
        %2398 = vrot.lane.b32.xlu0 %v2391, 1
        %v2399 = vpop.permute.xlu0 %2398
        %2401 = vrot.lane.b32.xlu0 %v2372, 16
        %v2402 = vpop.permute.xlu0 %2401
        %v2404 = vsel %vm1651, %v2370, %v2402
        %2405 = vrot.lane.b32.xlu0 %v2390, 127
        %v2406 = vpop.permute.xlu0 %2405
        %2407 = vrot.lane.b32.xlu0 %v2391, 127
        %v2408 = vpop.permute.xlu0 %2407
        %2409 = vrot.lane.b32.xlu0 %v2397, 127
        %v2410 = vpop.permute.xlu0 %2409
        %2411 = vrot.lane.b32.xlu0 %v2399, 127
        %v2412 = vpop.permute.xlu0 %2411
        %v2418 = vsel %vm1411, %v2404, 0
        %2420 = vmatprep.subr.mxu0 0.0
        %2421 = vmatpush1.msra.mxu0 0.0
        %2422 = vmatprep.subr.mxu0 0.0
        %2423 = vmatpush1.msra.mxu0 0.0
        %2424 = vmatprep.subr.mxu0 0.0
        %2425 = vmatpush1.msra.mxu0 0.0
        %2426 = vmatprep.subr.mxu0 0.0
        %2427 = vmatpush1.msra.mxu0 0.0
        %2428 = vmatprep.subr.mxu0 0.0
        %2429 = vmatpush1.msra.mxu0 0.0
        %2430 = vmatprep.subr.mxu0 0.0
        %2431 = vmatpush1.msra.mxu0 0.0
        %2432 = vmatprep.subr.mxu0 0.0
        %2433 = vmatpush1.msra.mxu0 0.0
        %2434 = vmatprep.subr.mxu0 0.0
        %2435 = vmatpush1.msra.mxu0 0.0
        %2436 = vmatprep.subr.mxu0 0.0
        %2437 = vmatpush1.msra.mxu0 0.0
        %2438 = vmatprep.subr.mxu0 0.0
        %2439 = vmatpush1.msra.mxu0 0.0
        %2440 = vmatprep.subr.mxu0 0.0
        %2441 = vmatpush1.msra.mxu0 0.0
        %2442 = vmatprep.subr.mxu0 0.0
        %2443 = vmatpush1.msra.mxu0 0.0
        %2444 = vmatprep.subr.mxu0 0.0
        %2445 = vmatpush1.msra.mxu0 %v2412
        %2446 = vmatprep.subr.mxu0 0.0
        %2447 = vmatpush1.msra.mxu0 %v2410
        %2448 = vmatprep.subr.mxu0 0.0
        %2449 = vmatpush1.msra.mxu0 %v2408
        %2450 = vmatprep.subr.mxu0 0.0
        %2451 = vmatpush1.msra.mxu0 %v2406
        %2452 = vmatprep.subr.mxu0 0.0
        %2453 = vmatpush2.msra.mxu0 0.0
        %2454 = vmatprep.subr.mxu0 0.0
        %2455 = vmatpush2.msra.mxu0 0.0
        %2456 = vmatprep.subr.mxu0 0.0
        %2457 = vmatpush2.msra.mxu0 0.0
        %2458 = vmatprep.subr.mxu0 0.0
        %2459 = vmatpush2.msra.mxu0 0.0
        %2460 = vmatprep.subr.mxu0 0.0
        %2461 = vmatpush2.msra.mxu0 0.0
        %2462 = vmatprep.subr.mxu0 0.0
        %2463 = vmatpush2.msra.mxu0 0.0
        %2464 = vmatprep.subr.mxu0 0.0
        %2465 = vmatpush2.msra.mxu0 0.0
        %2466 = vmatprep.subr.mxu0 0.0
        %2467 = vmatpush2.msra.mxu0 0.0
        %2468 = vmatprep.subr.mxu0 0.0
        %2469 = vmatpush2.msra.mxu0 0.0
        %2470 = vmatprep.subr.mxu0 0.0
        %2471 = vmatpush2.msra.mxu0 0.0
        %2472 = vmatprep.subr.mxu0 0.0
        %2473 = vmatpush2.msra.mxu0 0.0
        %2474 = vmatprep.subr.mxu0 0.0
        %2475 = vmatpush2.msra.mxu0 0.0
        %2476 = vmatprep.subr.mxu0 0.0
        %2477 = vmatpush2.msra.mxu0 0.0
        %2478 = vmatprep.subr.mxu0 0.0
        %2479 = vmatpush2.msra.mxu0 0.0
        %2480 = vmatprep.subr.mxu0 0.0
        %2481 = vmatpush2.msra.mxu0 0.0
        %2482 = vmatprep.subr.mxu0 0.0
        %2483 = vmatpush2.msra.mxu0 0.0
        %2484 = vmatprep.mubr.f32.mxu0 0.0
        %2485 = vmatmul.mubr.f32.gmra.mxu0 %v2418
        %v2486 = vpop.f32.mrf.mxu0
        %v2487 = vadd.f32 0.0, %v2486
        %v2488 = vpop.f32.mrf.mxu0
        %2489 = vdwg.mxu0
        %v2490 = vmul.u32 %v2392, 2
        %v2491 = vmul.u32 %v2393, 2
        %vm2492 = vcmp.eq.s32.totalorder %v1390, %v2490
        %vm2493 = vcmp.eq.s32.totalorder %v1390, %v2491
        %v2494 = vsel %vm2492, 1, 0
        %v2495 = vsel %vm2493, 1, 0
        %v2496 = vcvt.s32.f32 %v2494
        %v2497 = vcvt.s32.f32 %v2495
        %2499 = vrot.lane.b32.xlu0 %v2371, 16
        %v2500 = vpop.permute.xlu0 %2499
        %v2502 = vsel %vm1651, %v2369, %v2500
        %2503 = vrot.lane.b32.xlu0 %v2390, 126
        %v2504 = vpop.permute.xlu0 %2503
        %2505 = vrot.lane.b32.xlu0 %v2391, 126
        %v2506 = vpop.permute.xlu0 %2505
        %2507 = vrot.lane.b32.xlu0 %v2397, 126
        %v2508 = vpop.permute.xlu0 %2507
        %2509 = vrot.lane.b32.xlu0 %v2399, 126
        %v2510 = vpop.permute.xlu0 %2509
        %v2516 = vsel %vm1411, %v2502, 0
        %2518 = vmatprep.subr.mxu0 0.0
        %2519 = vmatpush1.msra.mxu0 0.0
        %2520 = vmatprep.subr.mxu0 0.0
        %2521 = vmatpush1.msra.mxu0 0.0
        %2522 = vmatprep.subr.mxu0 0.0
        %2523 = vmatpush1.msra.mxu0 0.0
        %2524 = vmatprep.subr.mxu0 0.0
        %2525 = vmatpush1.msra.mxu0 0.0
        %2526 = vmatprep.subr.mxu0 0.0
        %2527 = vmatpush1.msra.mxu0 0.0
        %2528 = vmatprep.subr.mxu0 0.0
        %2529 = vmatpush1.msra.mxu0 0.0
        %2530 = vmatprep.subr.mxu0 0.0
        %2531 = vmatpush1.msra.mxu0 0.0
        %2532 = vmatprep.subr.mxu0 0.0
        %2533 = vmatpush1.msra.mxu0 0.0
        %2534 = vmatprep.subr.mxu0 0.0
        %2535 = vmatpush1.msra.mxu0 0.0
        %2536 = vmatprep.subr.mxu0 0.0
        %2537 = vmatpush1.msra.mxu0 0.0
        %2538 = vmatprep.subr.mxu0 0.0
        %2539 = vmatpush1.msra.mxu0 0.0
        %2540 = vmatprep.subr.mxu0 0.0
        %2541 = vmatpush1.msra.mxu0 0.0
        %2542 = vmatprep.subr.mxu0 0.0
        %2543 = vmatpush1.msra.mxu0 %v2510
        %2544 = vmatprep.subr.mxu0 0.0
        %2545 = vmatpush1.msra.mxu0 %v2508
        %2546 = vmatprep.subr.mxu0 0.0
        %2547 = vmatpush1.msra.mxu0 %v2506
        %2548 = vmatprep.subr.mxu0 0.0
        %2549 = vmatpush1.msra.mxu0 %v2504
        %2550 = vmatprep.subr.mxu0 0.0
        %2551 = vmatpush2.msra.mxu0 0.0
        %2552 = vmatprep.subr.mxu0 0.0
        %2553 = vmatpush2.msra.mxu0 0.0
        %2554 = vmatprep.subr.mxu0 0.0
        %2555 = vmatpush2.msra.mxu0 0.0
        %2556 = vmatprep.subr.mxu0 0.0
        %2557 = vmatpush2.msra.mxu0 0.0
        %2558 = vmatprep.subr.mxu0 0.0
        %2559 = vmatpush2.msra.mxu0 0.0
        %2560 = vmatprep.subr.mxu0 0.0
        %2561 = vmatpush2.msra.mxu0 0.0
        %2562 = vmatprep.subr.mxu0 0.0
        %2563 = vmatpush2.msra.mxu0 0.0
        %2564 = vmatprep.subr.mxu0 0.0
        %2565 = vmatpush2.msra.mxu0 0.0
        %2566 = vmatprep.subr.mxu0 0.0
        %2567 = vmatpush2.msra.mxu0 0.0
        %2568 = vmatprep.subr.mxu0 0.0
        %2569 = vmatpush2.msra.mxu0 0.0
        %2570 = vmatprep.subr.mxu0 0.0
        %2571 = vmatpush2.msra.mxu0 0.0
        %2572 = vmatprep.subr.mxu0 0.0
        %2573 = vmatpush2.msra.mxu0 0.0
        %2574 = vmatprep.subr.mxu0 0.0
        %2575 = vmatpush2.msra.mxu0 0.0
        %2576 = vmatprep.subr.mxu0 0.0
        %2577 = vmatpush2.msra.mxu0 0.0
        %2578 = vmatprep.subr.mxu0 0.0
        %2579 = vmatpush2.msra.mxu0 0.0
        %2580 = vmatprep.subr.mxu0 0.0
        %2581 = vmatpush2.msra.mxu0 0.0
        %2582 = vmatprep.mubr.f32.mxu0 0.0
        %2583 = vmatmul.mubr.f32.gmra.mxu0 %v2516
        %v2584 = vpop.f32.mrf.mxu0
        %v2585 = vadd.f32 0.0, %v2584
        %v2586 = vpop.f32.mrf.mxu0
        %2587 = vdwg.mxu0
        %v2588 = vadd.s32 %v2490, 1
        %v2589 = vadd.s32 %v2491, 1
        %vm2590 = vcmp.eq.s32.totalorder %v1390, %v2588
        %vm2591 = vcmp.eq.s32.totalorder %v1390, %v2589
        %v2592 = vsel %vm2590, 1, 0
        %v2593 = vsel %vm2591, 1, 0
        %v2594 = vcvt.s32.f32 %v2592
        %v2595 = vcvt.s32.f32 %v2593
        %v2597 = vsel %vm1411, %v2585, 0
        %2599 = vmatprep.subr.mxu0 0.0
        %2600 = vmatpush1.msra.mxu0 0.0
        %2601 = vmatprep.subr.mxu0 0.0
        %2602 = vmatpush1.msra.mxu0 0.0
        %2603 = vmatprep.subr.mxu0 0.0
        %2604 = vmatpush1.msra.mxu0 0.0
        %2605 = vmatprep.subr.mxu0 0.0
        %2606 = vmatpush1.msra.mxu0 0.0
        %2607 = vmatprep.subr.mxu0 0.0
        %2608 = vmatpush1.msra.mxu0 0.0
        %2609 = vmatprep.subr.mxu0 0.0
        %2610 = vmatpush1.msra.mxu0 0.0
        %2611 = vmatprep.subr.mxu0 0.0
        %2612 = vmatpush1.msra.mxu0 0.0
        %2613 = vmatprep.subr.mxu0 0.0
        %2614 = vmatpush1.msra.mxu0 0.0
        %2615 = vmatprep.subr.mxu0 0.0
        %2616 = vmatpush1.msra.mxu0 0.0
        %2617 = vmatprep.subr.mxu0 0.0
        %2618 = vmatpush1.msra.mxu0 0.0
        %2619 = vmatprep.subr.mxu0 0.0
        %2620 = vmatpush1.msra.mxu0 0.0
        %2621 = vmatprep.subr.mxu0 0.0
        %2622 = vmatpush1.msra.mxu0 0.0
        %2623 = vmatprep.subr.mxu0 0.0
        %2624 = vmatpush1.msra.mxu0 %v2595
        %2625 = vmatprep.subr.mxu0 0.0
        %2626 = vmatpush1.msra.mxu0 %v2594
        %2627 = vmatprep.subr.mxu0 0.0
        %2628 = vmatpush1.msra.mxu0 %v1650
        %2629 = vmatprep.subr.mxu0 0.0
        %2630 = vmatpush1.msra.mxu0 %v1649
        %2631 = vmatprep.subr.mxu0 0.0
        %2632 = vmatpush2.msra.mxu0 0.0
        %2633 = vmatprep.subr.mxu0 0.0
        %2634 = vmatpush2.msra.mxu0 0.0
        %2635 = vmatprep.subr.mxu0 0.0
        %2636 = vmatpush2.msra.mxu0 0.0
        %2637 = vmatprep.subr.mxu0 0.0
        %2638 = vmatpush2.msra.mxu0 0.0
        %2639 = vmatprep.subr.mxu0 0.0
        %2640 = vmatpush2.msra.mxu0 0.0
        %2641 = vmatprep.subr.mxu0 0.0
        %2642 = vmatpush2.msra.mxu0 0.0
        %2643 = vmatprep.subr.mxu0 0.0
        %2644 = vmatpush2.msra.mxu0 0.0
        %2645 = vmatprep.subr.mxu0 0.0
        %2646 = vmatpush2.msra.mxu0 0.0
        %2647 = vmatprep.subr.mxu0 0.0
        %2648 = vmatpush2.msra.mxu0 0.0
        %2649 = vmatprep.subr.mxu0 0.0
        %2650 = vmatpush2.msra.mxu0 0.0
        %2651 = vmatprep.subr.mxu0 0.0
        %2652 = vmatpush2.msra.mxu0 0.0
        %2653 = vmatprep.subr.mxu0 0.0
        %2654 = vmatpush2.msra.mxu0 0.0
        %2655 = vmatprep.subr.mxu0 0.0
        %2656 = vmatpush2.msra.mxu0 0.0
        %2657 = vmatprep.subr.mxu0 0.0
        %2658 = vmatpush2.msra.mxu0 0.0
        %2659 = vmatprep.subr.mxu0 0.0
        %2660 = vmatpush2.msra.mxu0 0.0
        %2661 = vmatprep.subr.mxu0 0.0
        %2662 = vmatpush2.msra.mxu0 0.0
        %2663 = vmatprep.mubr.f32.mxu0 0.0
        %2664 = vmatmul.mubr.f32.gmra.mxu0 %v2597
        %v2665 = vpop.f32.mrf.mxu0
        %v2666 = vadd.f32 0.0, %v2665
        %v2667 = vpop.f32.mrf.mxu0
        %2668 = vdwg.mxu0
        %v2670 = vsel %vm1411, %v2487, 0
        %2672 = vmatprep.subr.mxu0 0.0
        %2673 = vmatpush1.msra.mxu0 0.0
        %2674 = vmatprep.subr.mxu0 0.0
        %2675 = vmatpush1.msra.mxu0 0.0
        %2676 = vmatprep.subr.mxu0 0.0
        %2677 = vmatpush1.msra.mxu0 0.0
        %2678 = vmatprep.subr.mxu0 0.0
        %2679 = vmatpush1.msra.mxu0 0.0
        %2680 = vmatprep.subr.mxu0 0.0
        %2681 = vmatpush1.msra.mxu0 0.0
        %2682 = vmatprep.subr.mxu0 0.0
        %2683 = vmatpush1.msra.mxu0 0.0
        %2684 = vmatprep.subr.mxu0 0.0
        %2685 = vmatpush1.msra.mxu0 0.0
        %2686 = vmatprep.subr.mxu0 0.0
        %2687 = vmatpush1.msra.mxu0 0.0
        %2688 = vmatprep.subr.mxu0 0.0
        %2689 = vmatpush1.msra.mxu0 0.0
        %2690 = vmatprep.subr.mxu0 0.0
        %2691 = vmatpush1.msra.mxu0 0.0
        %2692 = vmatprep.subr.mxu0 0.0
        %2693 = vmatpush1.msra.mxu0 0.0
        %2694 = vmatprep.subr.mxu0 0.0
        %2695 = vmatpush1.msra.mxu0 0.0
        %2696 = vmatprep.subr.mxu0 0.0
        %2697 = vmatpush1.msra.mxu0 %v2497
        %2698 = vmatprep.subr.mxu0 0.0
        %2699 = vmatpush1.msra.mxu0 %v2496
        %2700 = vmatprep.subr.mxu0 0.0
        %2701 = vmatpush1.msra.mxu0 %v1527
        %2702 = vmatprep.subr.mxu0 0.0
        %2703 = vmatpush1.msra.mxu0 %v1526
        %2704 = vmatprep.subr.mxu0 0.0
        %2705 = vmatpush2.msra.mxu0 0.0
        %2706 = vmatprep.subr.mxu0 0.0
        %2707 = vmatpush2.msra.mxu0 0.0
        %2708 = vmatprep.subr.mxu0 0.0
        %2709 = vmatpush2.msra.mxu0 0.0
        %2710 = vmatprep.subr.mxu0 0.0
        %2711 = vmatpush2.msra.mxu0 0.0
        %2712 = vmatprep.subr.mxu0 0.0
        %2713 = vmatpush2.msra.mxu0 0.0
        %2714 = vmatprep.subr.mxu0 0.0
        %2715 = vmatpush2.msra.mxu0 0.0
        %2716 = vmatprep.subr.mxu0 0.0
        %2717 = vmatpush2.msra.mxu0 0.0
        %2718 = vmatprep.subr.mxu0 0.0
        %2719 = vmatpush2.msra.mxu0 0.0
        %2720 = vmatprep.subr.mxu0 0.0
        %2721 = vmatpush2.msra.mxu0 0.0
        %2722 = vmatprep.subr.mxu0 0.0
        %2723 = vmatpush2.msra.mxu0 0.0
        %2724 = vmatprep.subr.mxu0 0.0
        %2725 = vmatpush2.msra.mxu0 0.0
        %2726 = vmatprep.subr.mxu0 0.0
        %2727 = vmatpush2.msra.mxu0 0.0
        %2728 = vmatprep.subr.mxu0 0.0
        %2729 = vmatpush2.msra.mxu0 0.0
        %2730 = vmatprep.subr.mxu0 0.0
        %2731 = vmatpush2.msra.mxu0 0.0
        %2732 = vmatprep.subr.mxu0 0.0
        %2733 = vmatpush2.msra.mxu0 0.0
        %2734 = vmatprep.subr.mxu0 0.0
        %2735 = vmatpush2.msra.mxu0 0.0
        %2736 = vmatprep.mubr.f32.mxu0 0.0
        %2737 = vmatmul.mubr.f32.gmra.mxu0 %v2670
        %v2738 = vpop.f32.mrf.mxu0
        %v2739 = vadd.f32 %v2666, %v2738
        %v2740 = vpop.f32.mrf.mxu0
        %2741 = vdwg.mxu0
        %2743 = vset.pattern.permute.xlu0 0
        %2744 = vperm.xlu0 %2743, %v2373
        %v2745 = vpop.permute.xlu0 %2744
        %v2747 = vadd.f32 %v2739, %v2745
        %v2748 = vld [vmem:[%s15] sm:$0xff]
        %v2749 = vld [vmem:[%s16] sm:$0xff]
        %vm2750 = vcmp.ge.f32.partialorder %v2747, 0.0
        %v2751 = vmul.f32 %v2747, 0.1
        %v2752 = vsel %vm2750, %v2747, %v2751
        %2754 = vrot.lane.b32.xlu0 %v2752, 1
        %v2755 = vpop.permute.xlu0 %2754
        %v2757 = vsel %vm1376, 0.0, %v2755
        %vm2758 = vcmask 531456
        %v2759 = vsel %vm2758, %v2757, 0.0
        %2761 = vrot.lane.b32.xlu0 %v2759, 127
        %v2762 = vpop.permute.xlu0 %2761
        %2764 = vrot.lane.b32.xlu0 %v2759, 126
        %v2765 = vpop.permute.xlu0 %2764
        %2768 = vset.pattern.permute.xlu0 0
        %2769 = vperm.xlu0 %2768, %v2749
        %v2770 = vpop.permute.xlu0 %2769
        %vm2772 = vcmask 195584
        %v2774 = vsel %vm2772, %v2748, 0
        %2776 = vmatprep.subr.mxu0 0.0
        %2777 = vmatpush1.msra.mxu0 0.0
        %2778 = vmatprep.subr.mxu0 0.0
        %2779 = vmatpush1.msra.mxu0 0.0
        %2780 = vmatprep.subr.mxu0 0.0
        %2781 = vmatpush1.msra.mxu0 0.0
        %2782 = vmatprep.subr.mxu0 0.0
        %2783 = vmatpush1.msra.mxu0 0.0
        %2784 = vmatprep.subr.mxu0 0.0
        %2785 = vmatpush1.msra.mxu0 0.0
        %2786 = vmatprep.subr.mxu0 0.0
        %2787 = vmatpush1.msra.mxu0 0.0
        %2788 = vmatprep.subr.mxu0 0.0
        %2789 = vmatpush1.msra.mxu0 0.0
        %2790 = vmatprep.subr.mxu0 0.0
        %2791 = vmatpush1.msra.mxu0 0.0
        %2792 = vmatprep.subr.mxu0 0.0
        %2793 = vmatpush1.msra.mxu0 0.0
        %2794 = vmatprep.subr.mxu0 0.0
        %2795 = vmatpush1.msra.mxu0 0.0
        %2796 = vmatprep.subr.mxu0 0.0
        %2797 = vmatpush1.msra.mxu0 0.0
        %2798 = vmatprep.subr.mxu0 0.0
        %2799 = vmatpush1.msra.mxu0 0.0
        %2800 = vmatprep.subr.mxu0 0.0
        %2801 = vmatpush1.msra.mxu0 0.0
        %2802 = vmatprep.subr.mxu0 0.0
        %2803 = vmatpush1.msra.mxu0 %v2765
        %2804 = vmatprep.subr.mxu0 0.0
        %2805 = vmatpush1.msra.mxu0 %v2762
        %2806 = vmatprep.subr.mxu0 0.0
        %2807 = vmatpush1.msra.mxu0 %v2759
        %2808 = vmatprep.subr.mxu0 0.0
        %2809 = vmatpush2.msra.mxu0 0.0
        %2810 = vmatprep.subr.mxu0 0.0
        %2811 = vmatpush2.msra.mxu0 0.0
        %2812 = vmatprep.subr.mxu0 0.0
        %2813 = vmatpush2.msra.mxu0 0.0
        %2814 = vmatprep.subr.mxu0 0.0
        %2815 = vmatpush2.msra.mxu0 0.0
        %2816 = vmatprep.subr.mxu0 0.0
        %2817 = vmatpush2.msra.mxu0 0.0
        %2818 = vmatprep.subr.mxu0 0.0
        %2819 = vmatpush2.msra.mxu0 0.0
        %2820 = vmatprep.subr.mxu0 0.0
        %2821 = vmatpush2.msra.mxu0 0.0
        %2822 = vmatprep.subr.mxu0 0.0
        %2823 = vmatpush2.msra.mxu0 0.0
        %2824 = vmatprep.subr.mxu0 0.0
        %2825 = vmatpush2.msra.mxu0 0.0
        %2826 = vmatprep.subr.mxu0 0.0
        %2827 = vmatpush2.msra.mxu0 0.0
        %2828 = vmatprep.subr.mxu0 0.0
        %2829 = vmatpush2.msra.mxu0 0.0
        %2830 = vmatprep.subr.mxu0 0.0
        %2831 = vmatpush2.msra.mxu0 0.0
        %2832 = vmatprep.subr.mxu0 0.0
        %2833 = vmatpush2.msra.mxu0 0.0
        %2834 = vmatprep.subr.mxu0 0.0
        %2835 = vmatpush2.msra.mxu0 0.0
        %2836 = vmatprep.subr.mxu0 0.0
        %2837 = vmatpush2.msra.mxu0 0.0
        %2838 = vmatprep.subr.mxu0 0.0
        %2839 = vmatpush2.msra.mxu0 0.0
        %2840 = vmatprep.mubr.f32.mxu0 0.0
        %2841 = vmatmul.mubr.f32.gmra.mxu0 %v2774
        %v2842 = vpop.f32.mrf.mxu0
        %v2843 = vadd.f32 %v2770, %v2842
        %v2844 = vpop.f32.mrf.mxu0
        %2845 = vdwg.mxu0
        %v2846 = vadd.f32 %v2747, %v2843
        %v2847 = vld [vmem:[%s17] sm:$0xff]
        %v2848 = vld [vmem:[%s18] sm:$0xff]
        %vm2849 = vcmp.ge.f32.partialorder %v2846, 0.0
        %v2850 = vmul.f32 %v2846, 0.1
        %v2851 = vsel %vm2849, %v2846, %v2850
        %2853 = vrot.lane.b32.xlu0 %v2851, 3
        %v2854 = vpop.permute.xlu0 %2853
        %v2856 = vsel %vm838, 0.0, %v2854
        %vm2857 = vcmask 547840
        %v2858 = vsel %vm2857, %v2856, 0.0
        %2860 = vrot.lane.b32.xlu0 %v2858, 125
        %v2861 = vpop.permute.xlu0 %2860
        %2863 = vrot.lane.b32.xlu0 %v2858, 122
        %v2864 = vpop.permute.xlu0 %2863
        %2867 = vset.pattern.permute.xlu0 0
        %2868 = vperm.xlu0 %2867, %v2848
        %v2869 = vpop.permute.xlu0 %2868
        %v2872 = vsel %vm2772, %v2847, 0
        %2874 = vmatprep.subr.mxu0 0.0
        %2875 = vmatpush1.msra.mxu0 0.0
        %2876 = vmatprep.subr.mxu0 0.0
        %2877 = vmatpush1.msra.mxu0 0.0
        %2878 = vmatprep.subr.mxu0 0.0
        %2879 = vmatpush1.msra.mxu0 0.0
        %2880 = vmatprep.subr.mxu0 0.0
        %2881 = vmatpush1.msra.mxu0 0.0
        %2882 = vmatprep.subr.mxu0 0.0
        %2883 = vmatpush1.msra.mxu0 0.0
        %2884 = vmatprep.subr.mxu0 0.0
        %2885 = vmatpush1.msra.mxu0 0.0
        %2886 = vmatprep.subr.mxu0 0.0
        %2887 = vmatpush1.msra.mxu0 0.0
        %2888 = vmatprep.subr.mxu0 0.0
        %2889 = vmatpush1.msra.mxu0 0.0
        %2890 = vmatprep.subr.mxu0 0.0
        %2891 = vmatpush1.msra.mxu0 0.0
        %2892 = vmatprep.subr.mxu0 0.0
        %2893 = vmatpush1.msra.mxu0 0.0
        %2894 = vmatprep.subr.mxu0 0.0
        %2895 = vmatpush1.msra.mxu0 0.0
        %2896 = vmatprep.subr.mxu0 0.0
        %2897 = vmatpush1.msra.mxu0 0.0
        %2898 = vmatprep.subr.mxu0 0.0
        %2899 = vmatpush1.msra.mxu0 0.0
        %2900 = vmatprep.subr.mxu0 0.0
        %2901 = vmatpush1.msra.mxu0 %v2864
        %2902 = vmatprep.subr.mxu0 0.0
        %2903 = vmatpush1.msra.mxu0 %v2861
        %2904 = vmatprep.subr.mxu0 0.0
        %2905 = vmatpush1.msra.mxu0 %v2858
        %2906 = vmatprep.subr.mxu0 0.0
        %2907 = vmatpush2.msra.mxu0 0.0
        %2908 = vmatprep.subr.mxu0 0.0
        %2909 = vmatpush2.msra.mxu0 0.0
        %2910 = vmatprep.subr.mxu0 0.0
        %2911 = vmatpush2.msra.mxu0 0.0
        %2912 = vmatprep.subr.mxu0 0.0
        %2913 = vmatpush2.msra.mxu0 0.0
        %2914 = vmatprep.subr.mxu0 0.0
        %2915 = vmatpush2.msra.mxu0 0.0
        %2916 = vmatprep.subr.mxu0 0.0
        %2917 = vmatpush2.msra.mxu0 0.0
        %2918 = vmatprep.subr.mxu0 0.0
        %2919 = vmatpush2.msra.mxu0 0.0
        %2920 = vmatprep.subr.mxu0 0.0
        %2921 = vmatpush2.msra.mxu0 0.0
        %2922 = vmatprep.subr.mxu0 0.0
        %2923 = vmatpush2.msra.mxu0 0.0
        %2924 = vmatprep.subr.mxu0 0.0
        %2925 = vmatpush2.msra.mxu0 0.0
        %2926 = vmatprep.subr.mxu0 0.0
        %2927 = vmatpush2.msra.mxu0 0.0
        %2928 = vmatprep.subr.mxu0 0.0
        %2929 = vmatpush2.msra.mxu0 0.0
        %2930 = vmatprep.subr.mxu0 0.0
        %2931 = vmatpush2.msra.mxu0 0.0
        %2932 = vmatprep.subr.mxu0 0.0
        %2933 = vmatpush2.msra.mxu0 0.0
        %2934 = vmatprep.subr.mxu0 0.0
        %2935 = vmatpush2.msra.mxu0 0.0
        %2936 = vmatprep.subr.mxu0 0.0
        %2937 = vmatpush2.msra.mxu0 0.0
        %2938 = vmatprep.mubr.f32.mxu0 0.0
        %2939 = vmatmul.mubr.f32.gmra.mxu0 %v2872
        %v2940 = vpop.f32.mrf.mxu0
        %v2941 = vadd.f32 %v2869, %v2940
        %v2942 = vpop.f32.mrf.mxu0
        %2943 = vdwg.mxu0
        %v2944 = vadd.f32 %v2846, %v2941
        %v2945 = vld [vmem:[%s19] sm:$0xff]
        %v2946 = vld [vmem:[%s20] sm:$0xff]
        %2947 = vrot.lane.b32.xlu0 %v2752, 2
        %v2948 = vpop.permute.xlu0 %2947
        %v2950 = vsel %vm2096, 0.0, %v2948
        %vm2951 = vcmask 539648
        %v2952 = vsel %vm2951, %v2950, 0.0
        %2954 = vrot.lane.b32.xlu0 %v2952, 127
        %v2955 = vpop.permute.xlu0 %2954
        %2957 = vrot.lane.b32.xlu0 %v2952, 126
        %v2958 = vpop.permute.xlu0 %2957
        %2960 = vrot.lane.b32.xlu0 %v2952, 125
        %v2961 = vpop.permute.xlu0 %2960
        %2963 = vrot.lane.b32.xlu0 %v2952, 124
        %v2964 = vpop.permute.xlu0 %2963
        %2967 = vset.pattern.permute.xlu0 0
        %2968 = vperm.xlu0 %2967, %v2946
        %v2969 = vpop.permute.xlu0 %2968
        %vm2971 = vcmask 326656
        %v2973 = vsel %vm2971, %v2945, 0
        %2975 = vmatprep.subr.mxu0 0.0
        %2976 = vmatpush1.msra.mxu0 0.0
        %2977 = vmatprep.subr.mxu0 0.0
        %2978 = vmatpush1.msra.mxu0 0.0
        %2979 = vmatprep.subr.mxu0 0.0
        %2980 = vmatpush1.msra.mxu0 0.0
        %2981 = vmatprep.subr.mxu0 0.0
        %2982 = vmatpush1.msra.mxu0 0.0
        %2983 = vmatprep.subr.mxu0 0.0
        %2984 = vmatpush1.msra.mxu0 0.0
        %2985 = vmatprep.subr.mxu0 0.0
        %2986 = vmatpush1.msra.mxu0 0.0
        %2987 = vmatprep.subr.mxu0 0.0
        %2988 = vmatpush1.msra.mxu0 0.0
        %2989 = vmatprep.subr.mxu0 0.0
        %2990 = vmatpush1.msra.mxu0 0.0
        %2991 = vmatprep.subr.mxu0 0.0
        %2992 = vmatpush1.msra.mxu0 0.0
        %2993 = vmatprep.subr.mxu0 0.0
        %2994 = vmatpush1.msra.mxu0 0.0
        %2995 = vmatprep.subr.mxu0 0.0
        %2996 = vmatpush1.msra.mxu0 0.0
        %2997 = vmatprep.subr.mxu0 0.0
        %2998 = vmatpush1.msra.mxu0 %v2964
        %2999 = vmatprep.subr.mxu0 0.0
        %3000 = vmatpush1.msra.mxu0 %v2961
        %3001 = vmatprep.subr.mxu0 0.0
        %3002 = vmatpush1.msra.mxu0 %v2958
        %3003 = vmatprep.subr.mxu0 0.0
        %3004 = vmatpush1.msra.mxu0 %v2955
        %3005 = vmatprep.subr.mxu0 0.0
        %3006 = vmatpush1.msra.mxu0 %v2952
        %3007 = vmatprep.subr.mxu0 0.0
        %3008 = vmatpush2.msra.mxu0 0.0
        %3009 = vmatprep.subr.mxu0 0.0
        %3010 = vmatpush2.msra.mxu0 0.0
        %3011 = vmatprep.subr.mxu0 0.0
        %3012 = vmatpush2.msra.mxu0 0.0
        %3013 = vmatprep.subr.mxu0 0.0
        %3014 = vmatpush2.msra.mxu0 0.0
        %3015 = vmatprep.subr.mxu0 0.0
        %3016 = vmatpush2.msra.mxu0 0.0
        %3017 = vmatprep.subr.mxu0 0.0
        %3018 = vmatpush2.msra.mxu0 0.0
        %3019 = vmatprep.subr.mxu0 0.0
        %3020 = vmatpush2.msra.mxu0 0.0
        %3021 = vmatprep.subr.mxu0 0.0
        %3022 = vmatpush2.msra.mxu0 0.0
        %3023 = vmatprep.subr.mxu0 0.0
        %3024 = vmatpush2.msra.mxu0 0.0
        %3025 = vmatprep.subr.mxu0 0.0
        %3026 = vmatpush2.msra.mxu0 0.0
        %3027 = vmatprep.subr.mxu0 0.0
        %3028 = vmatpush2.msra.mxu0 0.0
        %3029 = vmatprep.subr.mxu0 0.0
        %3030 = vmatpush2.msra.mxu0 0.0
        %3031 = vmatprep.subr.mxu0 0.0
        %3032 = vmatpush2.msra.mxu0 0.0
        %3033 = vmatprep.subr.mxu0 0.0
        %3034 = vmatpush2.msra.mxu0 0.0
        %3035 = vmatprep.subr.mxu0 0.0
        %3036 = vmatpush2.msra.mxu0 0.0
        %3037 = vmatprep.subr.mxu0 0.0
        %3038 = vmatpush2.msra.mxu0 0.0
        %3039 = vmatprep.mubr.f32.mxu0 0.0
        %3040 = vmatmul.mubr.f32.gmra.mxu0 %v2973
        %v3041 = vpop.f32.mrf.mxu0
        %v3042 = vadd.f32 %v2969, %v3041
        %v3043 = vpop.f32.mrf.mxu0
        %3044 = vdwg.mxu0
        %v3045 = vadd.f32 %v2747, %v3042
        %v3046 = vld [vmem:[%s21] sm:$0xff]
        %v3047 = vld [vmem:[%s22] sm:$0xff]
        %vm3048 = vcmp.ge.f32.partialorder %v3045, 0.0
        %v3049 = vmul.f32 %v3045, 0.1
        %v3050 = vsel %vm3048, %v3045, %v3049
        %3052 = vrot.lane.b32.xlu0 %v3050, 6
        %v3053 = vpop.permute.xlu0 %3052
        %v3055 = vsel %vm2240, 0.0, %v3053
        %vm3056 = vcmask 572416
        %v3057 = vsel %vm3056, %v3055, 0.0
        %3059 = vrot.lane.b32.xlu0 %v3057, 125
        %v3060 = vpop.permute.xlu0 %3059
        %3062 = vrot.lane.b32.xlu0 %v3057, 122
        %v3063 = vpop.permute.xlu0 %3062
        %3065 = vrot.lane.b32.xlu0 %v3057, 119
        %v3066 = vpop.permute.xlu0 %3065
        %3068 = vrot.lane.b32.xlu0 %v3057, 116
        %v3069 = vpop.permute.xlu0 %3068
        %3072 = vset.pattern.permute.xlu0 0
        %3073 = vperm.xlu0 %3072, %v3047
        %v3074 = vpop.permute.xlu0 %3073
        %v3077 = vsel %vm2971, %v3046, 0
        %3079 = vmatprep.subr.mxu0 0.0
        %3080 = vmatpush1.msra.mxu0 0.0
        %3081 = vmatprep.subr.mxu0 0.0
        %3082 = vmatpush1.msra.mxu0 0.0
        %3083 = vmatprep.subr.mxu0 0.0
        %3084 = vmatpush1.msra.mxu0 0.0
        %3085 = vmatprep.subr.mxu0 0.0
        %3086 = vmatpush1.msra.mxu0 0.0
        %3087 = vmatprep.subr.mxu0 0.0
        %3088 = vmatpush1.msra.mxu0 0.0
        %3089 = vmatprep.subr.mxu0 0.0
        %3090 = vmatpush1.msra.mxu0 0.0
        %3091 = vmatprep.subr.mxu0 0.0
        %3092 = vmatpush1.msra.mxu0 0.0
        %3093 = vmatprep.subr.mxu0 0.0
        %3094 = vmatpush1.msra.mxu0 0.0
        %3095 = vmatprep.subr.mxu0 0.0
        %3096 = vmatpush1.msra.mxu0 0.0
        %3097 = vmatprep.subr.mxu0 0.0
        %3098 = vmatpush1.msra.mxu0 0.0
        %3099 = vmatprep.subr.mxu0 0.0
        %3100 = vmatpush1.msra.mxu0 0.0
        %3101 = vmatprep.subr.mxu0 0.0
        %3102 = vmatpush1.msra.mxu0 %v3069
        %3103 = vmatprep.subr.mxu0 0.0
        %3104 = vmatpush1.msra.mxu0 %v3066
        %3105 = vmatprep.subr.mxu0 0.0
        %3106 = vmatpush1.msra.mxu0 %v3063
        %3107 = vmatprep.subr.mxu0 0.0
        %3108 = vmatpush1.msra.mxu0 %v3060
        %3109 = vmatprep.subr.mxu0 0.0
        %3110 = vmatpush1.msra.mxu0 %v3057
        %3111 = vmatprep.subr.mxu0 0.0
        %3112 = vmatpush2.msra.mxu0 0.0
        %3113 = vmatprep.subr.mxu0 0.0
        %3114 = vmatpush2.msra.mxu0 0.0
        %3115 = vmatprep.subr.mxu0 0.0
        %3116 = vmatpush2.msra.mxu0 0.0
        %3117 = vmatprep.subr.mxu0 0.0
        %3118 = vmatpush2.msra.mxu0 0.0
        %3119 = vmatprep.subr.mxu0 0.0
        %3120 = vmatpush2.msra.mxu0 0.0
        %3121 = vmatprep.subr.mxu0 0.0
        %3122 = vmatpush2.msra.mxu0 0.0
        %3123 = vmatprep.subr.mxu0 0.0
        %3124 = vmatpush2.msra.mxu0 0.0
        %3125 = vmatprep.subr.mxu0 0.0
        %3126 = vmatpush2.msra.mxu0 0.0
        %3127 = vmatprep.subr.mxu0 0.0
        %3128 = vmatpush2.msra.mxu0 0.0
        %3129 = vmatprep.subr.mxu0 0.0
        %3130 = vmatpush2.msra.mxu0 0.0
        %3131 = vmatprep.subr.mxu0 0.0
        %3132 = vmatpush2.msra.mxu0 0.0
        %3133 = vmatprep.subr.mxu0 0.0
        %3134 = vmatpush2.msra.mxu0 0.0
        %3135 = vmatprep.subr.mxu0 0.0
        %3136 = vmatpush2.msra.mxu0 0.0
        %3137 = vmatprep.subr.mxu0 0.0
        %3138 = vmatpush2.msra.mxu0 0.0
        %3139 = vmatprep.subr.mxu0 0.0
        %3140 = vmatpush2.msra.mxu0 0.0
        %3141 = vmatprep.subr.mxu0 0.0
        %3142 = vmatpush2.msra.mxu0 0.0
        %3143 = vmatprep.mubr.f32.mxu0 0.0
        %3144 = vmatmul.mubr.f32.gmra.mxu0 %v3077
        %v3145 = vpop.f32.mrf.mxu0
        %v3146 = vadd.f32 %v3074, %v3145
        %v3147 = vpop.f32.mrf.mxu0
        %3148 = vdwg.mxu0
        %v3149 = vadd.f32 %v3045, %v3146
        %v3150 = vadd.f32 %v2944, %v3149
        %v3151 = vmul.f32 %v3150, 0.5
        %v3152 = vld [vmem:[%s23] sm:$0xff]
        %v3153 = vld [vmem:[%s23 + $0x8] sm:$0xff]
        %v3154 = vld [vmem:[%s23 + $0x10] sm:$0xff]
        %v3155 = vld [vmem:[%s23 + $0x18] sm:$0xff]
        %v3156 = vld [vmem:[%s23 + $0x20] sm:$0xff]
        %v3157 = vld [vmem:[%s23 + $0x28] sm:$0xff]
        %v3158 = vld [vmem:[%s23 + $0x30] sm:$0xff]
        %v3159 = vld [vmem:[#allocation2] sm:$0x1]
        %vm3160 = vcmp.ge.f32.partialorder %v3151, 0.0
        %v3161 = vmul.f32 %v3151, 0.01
        %v3162 = vsel %vm3160, %v3151, %v3161
        %3164 = vrot.lane.b32.xlu0 %v3162, 3
        %v3165 = vpop.permute.xlu0 %3164
        %v3167 = vsel %vm838, 0.0, %v3165
        %v3168 = vsel %vm2857, %v3167, 0.0
        %3170 = vrot.lane.b32.xlu0 %v3168, 127
        %v3171 = vpop.permute.xlu0 %3170
        %3173 = vrot.lane.b32.xlu0 %v3168, 126
        %v3174 = vpop.permute.xlu0 %3173
        %3176 = vrot.lane.b32.xlu0 %v3168, 125
        %v3177 = vpop.permute.xlu0 %3176
        %3179 = vrot.lane.b32.xlu0 %v3168, 124
        %v3180 = vpop.permute.xlu0 %3179
        %3182 = vrot.lane.b32.xlu0 %v3168, 123
        %v3183 = vpop.permute.xlu0 %3182
        %3185 = vrot.lane.b32.xlu0 %v3168, 122
        %v3186 = vpop.permute.xlu0 %3185
        %3189 = vset.pattern.permute.xlu0 0
        %3190 = vperm.xlu0 %3189, %v3152
        %v3191 = vpop.permute.xlu0 %3190
        %3194 = vset.pattern.permute.xlu0 0
        %3195 = vperm.xlu0 %3194, %v3153
        %v3196 = vpop.permute.xlu0 %3195
        %3199 = vset.pattern.permute.xlu0 0
        %3200 = vperm.xlu0 %3199, %v3154
        %v3201 = vpop.permute.xlu0 %3200
        %3204 = vset.pattern.permute.xlu0 0
        %3205 = vperm.xlu0 %3204, %v3155
        %v3206 = vpop.permute.xlu0 %3205
        %3209 = vset.pattern.permute.xlu0 0
        %3210 = vperm.xlu0 %3209, %v3156
        %v3211 = vpop.permute.xlu0 %3210
        %3214 = vset.pattern.permute.xlu0 0
        %3215 = vperm.xlu0 %3214, %v3157
        %v3216 = vpop.permute.xlu0 %3215
        %3219 = vset.pattern.permute.xlu0 0
        %3220 = vperm.xlu0 %3219, %v3158
        %v3221 = vpop.permute.xlu0 %3220
        %v3223 = vmul.f32 %v3191, %v3168
        %v3224 = vmul.f32 %v3196, %v3171
        %v3225 = vmul.f32 %v3201, %v3174
        %v3226 = vmul.f32 %v3206, %v3177
        %v3227 = vmul.f32 %v3211, %v3180
        %v3228 = vmul.f32 %v3216, %v3183
        %v3229 = vmul.f32 %v3221, %v3186
        %v3230 = vsel %vm1438, %v3223, 0.0
        %v3231 = vsel %vm1438, %v3224, 0.0
        %v3232 = vadd.f32 %v3230, %v3231
        %v3233 = vsel %vm1438, %v3225, 0.0
        %v3234 = vadd.f32 %v3232, %v3233
        %v3235 = vsel %vm1438, %v3226, 0.0
        %v3236 = vadd.f32 %v3234, %v3235
        %v3237 = vsel %vm1438, %v3227, 0.0
        %v3238 = vadd.f32 %v3236, %v3237
        %v3239 = vsel %vm1438, %v3228, 0.0
        %v3240 = vadd.f32 %v3238, %v3239
        %v3241 = vsel %vm1438, %v3229, 0.0
        %v3242 = vadd.f32 %v3240, %v3241
        %v3243 = vrot.slane %v3242, 4
        %v3244 = vadd.f32 %v3242, %v3243
        %v3245 = vrot.slane %v3244, 2
        %v3246 = vadd.f32 %v3244, %v3245
        %v3247 = vrot.slane %v3246, 1
        %v3248 = vadd.f32 %v3246, %v3247
        %3250 = vset.pattern.permute.xlu0 0
        %3251 = vperm.xlu0 %3250, %v3159
        %v3252 = vpop.permute.xlu0 %3251
        %v3254 = vlaneseq
        %v3255 = vshrl.u32 %v3254, 7
        %v3256 = vsub.s32 0, %v3255
        %v3257 = vrot.slane %v3252, %v3256
        %v3258 = vadd.f32 %v3248, %v3257
        %v3259 = vtanh.pop %v3258
        %vm3260 = vcmask 516096
        %3261 = vst.msk [vmem:[%s758] sm:$0x1] %vm3260, %v3259
        %s3262 = sand.u32 %s579, 1
        %s3263 = scalar_lea.sflag [#allocation4], %s3262
        %s3264 = sand.u32 %s579, 1
        %s3265 = scalar_lea.vmem [#allocation3], %s3264
        // Predicated region
        $region121: #{tpu_custom_call.1} parent=119 // pred_check
          %p3266 = pneg %p589
        $region122: #{tpu_custom_call.1} parent=119 // pred_check_branch
          %3268 = sbr.rel (%p3266) target = $region124
        $region123: #{tpu_custom_call.1} parent=119 // pred_region
          %s3270 = ssub.s32 16, 16
          %3271 = vsyncadd %s3263, %s3270
          %s3272 = smul.addr %s41, 16
          %s3273 = scalar_lea.hbm %s25, %s3272
          %s3275 = sshll.u32 %s3265, 4
          %s3276 = int_to_ptr.vmem [resolvable:$true] %s3275
          %3278 = dma.vmem_to_hbm [thread:$0]  %s3276, 16, %s3273, %s3263
        $region124: #{tpu_custom_call.1} parent=119 // pred_fallthru
          _
      $region120: #{tpu_custom_call.1} parent=5 // pred_fallthru
        _
      %p3279 = scmp.le.s32.totalorder 2, %s36
      // Predicated region
      $region125: #{tpu_custom_call.1} parent=5 // pred_check
        %p3280 = pneg %p3279
      $region126: #{tpu_custom_call.1} parent=5 // pred_check_branch
        %3282 = sbr.rel (%p3280) target = $region128
      $region127: #{tpu_custom_call.1} parent=5 // pred_region
        %s3283 = ssub.s32 %s36, 2
        // Predicated region
        $region129: #{tpu_custom_call.1} parent=127 // pred_check
          %p3284 = pneg %p595
        $region130: #{tpu_custom_call.1} parent=127 // pred_check_branch
          %3286 = sbr.rel (%p3284) target = $region132
        $region131: #{tpu_custom_call.1} parent=127 // pred_region
          %s3287 = sand.u32 %s580, 1
          %s3288 = scalar_lea.sflag [#allocation4], %s3287
          %s3289 = sand.u32 %s580, 1
          %s3290 = scalar_lea.vmem [#allocation3], %s3289
          %3291 = dma.done %s3288, 16
        $region132: #{tpu_custom_call.1} parent=127 // pred_fallthru
          _
      $region128: #{tpu_custom_call.1} parent=5 // pred_fallthru
        _
    $region6: #{tpu_custom_call.1} parent=1 // loop_footer
      %s40 = sadd.s32 1, %s36
    $region7: #{tpu_custom_call.1} parent=1 // loop_footer_branch
      %35 = sbr.rel target = $region3
    $region8: #{tpu_custom_call.1} parent=1 // loop_exit
      _
    %3292 = vsyncpa [#allocation4], 1
    %s3293 = scalar_lea.sflag [#allocation4], 1
    %3294 = vsyncpa %s3293, 1

</llo_original>
